<compile_context>
chip_gen: v7x
topology: tpu7x:2x2x1
jax: 0.10.0
libtpu: 0.0.40
codegen_flags: <defaults>
</compile_context>

<pallas_src>
import jax
import jax.numpy as jnp
from jax.experimental import pallas as pl
from jax.experimental.pallas import tpu as pltpu

# ---- small synthetic config mirroring vit_large_patch16_224 structure ----
IMG = 32            # image size        (real: 224)
PATCH = 16          # patch size        (real: 16)
IN_CH = 3
EMBED = 128         # embed dim         (real: 1024) -- lane aligned
DEPTH = 2           # blocks            (real: 24)
HEADS = 4           # heads             (real: 16)
HD = EMBED // HEADS
MLP_HID = EMBED * 4
LN_EPS = 1e-6
N_PATCH = (IMG // PATCH) ** 2
SEQ = N_PATCH + 1                     # real token count (CLS + patches)
SEQ_PAD = ((SEQ + 7) // 8) * 8        # sublane-padded sequence length

_BLOCK_PARAM_ORDER = (
    "ln1_g", "ln1_b",
    "w_qkv", "b_qkv",
    "w_proj", "b_proj",
    "ln2_g", "ln2_b",
    "w_fc1", "b_fc1", "w_fc2", "b_fc2",
)


# ----------------------------- Pallas kernels ------------------------------

def _embed_kernel(p_ref, w_ref, base_ref, o_ref):
    """Patch-embedding (conv with kernel=stride=PATCH as ONE batched matmul)
    fused with CLS / positional-embedding / bias slab init.  Whole batch in a
    single grid step: LHS is (B*N_PATCH, K) so the MXU sees a full 8-sublane
    tile and patch_w is DMA'd exactly once."""
    BN, _ = p_ref.shape                      # (B*N_PATCH, K)
    B = BN // N_PATCH
    pt = jnp.dot(p_ref[...].astype(jnp.bfloat16), w_ref[...],
                 preferred_element_type=jnp.float32)           # (B*N_PATCH, D)
    base = base_ref[...]                                        # (SEQ_PAD, D)
    for b in range(B):                       # static unroll, direct slab writes
        o_ref[b] = base
        o_ref[b, pl.ds(1, N_PATCH), :] = (
            base[1:1 + N_PATCH, :] + pt[b * N_PATCH:(b + 1) * N_PATCH, :])


def _layernorm(v, g, b):
    # f32 statistics (VPU/EUP have no reliable bf16 path on v5e)
    mu = jnp.mean(v, axis=-1, keepdims=True)
    var = jnp.mean(jnp.square(v - mu), axis=-1, keepdims=True)
    return (v - mu) * jax.lax.rsqrt(var + LN_EPS) * g + b


def _vit_blocks_kernel(x_ref,
                       ln1g_ref, ln1b_ref,
                       wqkv_ref, bqkv_ref,
                       wproj_ref, bproj_ref,
                       ln2g_ref, ln2b_ref,
                       wfc1_ref, bfc1_ref, wfc2_ref, bfc2_ref,
                       o_ref):
    """All DEPTH pre-norm ViT blocks fused.  grid = (layer,); the whole padded
    token tensor (B, SEQ_PAD, D) stays resident in the output VMEM block across
    the layer ("arbitrary") axis; per-layer weights are streamed in by the
    BlockSpec index_map so layer l+1 weight DMA overlaps layer l compute."""
    layer = pl.program_id(0)

    @pl.when(layer == 0)
    def _():
        o_ref[...] = x_ref[...]

    B, S, D = o_ref.shape
    BS = B * S

    # Layout-free flatten (S is a multiple of 8 sublanes) -> all dense matmuls
    # run with BS LHS rows instead of S.
    x = o_ref[...].reshape(BS, D)                       # f32, resident in VMEM

    # Mask for padded key positions (cols >= SEQ), broadcast over batch.
    col_ids = jax.lax.broadcasted_iota(jnp.int32, (1, S, S), 2)
    key_mask = col_ids < SEQ

    # --------------------------- attention ---------------------------------
    h = _layernorm(x, ln1g_ref[0], ln1b_ref[0])
    # Fused QKV matmul: K=D, N=3D. Scale HD**-0.5 is pre-folded into the q
    # columns of w_qkv / b_qkv at init.
    qkv = jnp.dot(h.astype(jnp.bfloat16), wqkv_ref[0],
                  preferred_element_type=jnp.float32) + bqkv_ref[0]  # (BS, 3D)
    qkv = qkv.reshape(B, S, 3 * D).astype(jnp.bfloat16)  # reshape (free), cast once
    q = qkv[:, :, 0:D]
    k = qkv[:, :, D:2 * D]
    v = qkv[:, :, 2 * D:3 * D]

    heads_out = []
    for hh in range(HEADS):                              # static unroll
        sl = slice(hh * HD, (hh + 1) * HD)
        qh = q[..., sl]
        kh = k[..., sl]
        vh = v[..., sl]
        # batched QK^T (contracted rhs dim, no explicit transpose)
        s = jnp.einsum('bqd,bkd->bqk', qh, kh,
                       preferred_element_type=jnp.float32)          # (B, S, S)
        s = jnp.where(key_mask, s, jnp.float32(-1e30))
        s = s - jnp.max(s, axis=-1, keepdims=True)
        e = jnp.exp(s)
        p = e * pl.reciprocal(jnp.sum(e, axis=-1, keepdims=True), approx=True)
        heads_out.append(jnp.einsum('bqk,bkd->bqd', p.astype(jnp.bfloat16), vh,
                                    preferred_element_type=jnp.float32))

    # Concatenate heads -> single K=D output projection (MXU-friendly).
    attn = jnp.concatenate(heads_out, axis=-1)                      # (B, S, D)
    attn = attn.reshape(BS, D).astype(jnp.bfloat16)
    attn = jnp.dot(attn, wproj_ref[0],
                   preferred_element_type=jnp.float32) + bproj_ref[0]
    x = x + attn

    # ------------------------------ MLP -------------------------------------
    h = _layernorm(x, ln2g_ref[0], ln2b_ref[0])
    h = jnp.dot(h.astype(jnp.bfloat16), wfc1_ref[0],
                preferred_element_type=jnp.float32) + bfc1_ref[0]
    # TODO(synk): timm uses exact (erf) GELU; tanh approximation used here
    # since an erf lowering inside Mosaic is not guaranteed.
    h = jax.nn.gelu(h, approximate=True)
    h = jnp.dot(h.astype(jnp.bfloat16), wfc2_ref[0],
                preferred_element_type=jnp.float32) + bfc2_ref[0]

    o_ref[...] = (x + h).reshape(B, S, D)


# ------------------------------ wrappers ------------------------------------

def patch_embed_tokens(x, params):
    """x: (B, C, H, W) NCHW -> padded token tensor (B, SEQ_PAD, D) f32 with
    CLS at row 0, patch tokens at rows 1..N_PATCH, zeros after, pos added."""
    B = x.shape[0]
    nh = IMG // PATCH
    # Extract non-overlapping patches, flattened in (C, ph, pw) order to match
    # conv-weight flattening W.reshape(D, C*P*P).
    p = x.reshape(B, IN_CH, nh, PATCH, nh, PATCH)
    p = p.transpose(0, 2, 4, 1, 3, 5)
    p = p.reshape(B * N_PATCH, IN_CH * PATCH * PATCH)   # flatten batch (host side)
    K = p.shape[-1]

    # Constant slab: pos (padded) + CLS at row 0 + patch bias at rows 1..N_PATCH.
    pos_pad = jnp.pad(params["pos"], ((0, SEQ_PAD - SEQ), (0, 0)))
    cls_slab = jnp.pad(params["cls"], ((0, SEQ_PAD - 1), (0, 0)))
    bias_slab = jnp.pad(jnp.broadcast_to(params["patch_b"], (N_PATCH, EMBED)),
                        ((1, SEQ_PAD - SEQ), (0, 0)))
    base = pos_pad + cls_slab + bias_slab               # (SEQ_PAD, EMBED) f32

    return pl.pallas_call(
        _embed_kernel,
        out_shape=jax.ShapeDtypeStruct((B, SEQ_PAD, EMBED), jnp.float32),
        grid=(1,),
        in_specs=[
            pl.BlockSpec((B * N_PATCH, K), lambda i: (0, 0)),
            pl.BlockSpec((K, EMBED), lambda i: (0, 0)),
            pl.BlockSpec((SEQ_PAD, EMBED), lambda i: (0, 0)),
        ],
        out_specs=pl.BlockSpec((B, SEQ_PAD, EMBED), lambda i: (0, 0, 0)),
        compiler_params=pltpu.CompilerParams(
            dimension_semantics=("arbitrary",)),
    )(p, params["patch_w"], base)


def vit_blocks(tok, blocks):
    """Apply all DEPTH transformer blocks in one fused pallas_call.
    tok: (B, SEQ_PAD, D) f32; blocks: dict of layer-stacked params."""
    B = tok.shape[0]
    in_specs = [pl.BlockSpec((B, SEQ_PAD, EMBED), lambda l: (0, 0, 0))]
    args = [tok]
    for name in _BLOCK_PARAM_ORDER:
        arr = blocks[name]                               # (DEPTH, R, C)
        in_specs.append(
            pl.BlockSpec((1,) + arr.shape[1:], lambda l: (l, 0, 0)))
        args.append(arr)

    return pl.pallas_call(
        _vit_blocks_kernel,
        out_shape=jax.ShapeDtypeStruct((B, SEQ_PAD, EMBED), jnp.float32),
        grid=(DEPTH,),
        in_specs=in_specs,
        # Output block index is constant along the depth axis -> tokens stay
        # resident in VMEM across layers; HBM writeback happens once.
        out_specs=pl.BlockSpec((B, SEQ_PAD, EMBED), lambda l: (0, 0, 0)),
        compiler_params=pltpu.CompilerParams(
            dimension_semantics=("arbitrary",)),
    )(*args)


def init_params(key):
    cnt = [0]

    def nrm(shape, s=0.02):
        cnt[0] += 1
        k = jax.random.fold_in(key, cnt[0])
        return s * jax.random.normal(k, shape, jnp.float32)

    bf16 = jnp.bfloat16

    # Fused QKV; pre-fold the attention scale HD**-0.5 into the q columns of
    # both the weight and the bias (so the kernel never multiplies by it).
    qkv_scale = jnp.concatenate(
        [jnp.full((EMBED,), HD ** -0.5, jnp.float32),
         jnp.ones((2 * EMBED,), jnp.float32)])
    w_qkv = nrm((DEPTH, EMBED, 3 * EMBED)) * qkv_scale
    b_qkv = nrm((DEPTH, 1, 3 * EMBED)) * qkv_scale

    params = {
        # matmul weights in bf16 (f32 MXU accumulation in-kernel)
        "patch_w": nrm((IN_CH * PATCH * PATCH, EMBED)).astype(bf16),
        "patch_b": nrm((1, EMBED)),
        "cls": nrm((1, EMBED)),
        "pos": nrm((SEQ, EMBED)),
        # per-layer params stacked along a leading DEPTH axis
        "blocks": {
            "ln1_g": jnp.ones((DEPTH, 1, EMBED), jnp.float32),
            "ln1_b": jnp.zeros((DEPTH, 1, EMBED), jnp.float32),
            "w_qkv": w_qkv.astype(bf16),
            "b_qkv": b_qkv,
            "w_proj": nrm((DEPTH, EMBED, EMBED)).astype(bf16),
            "b_proj": nrm((DEPTH, 1, EMBED)),
            "ln2_g": jnp.ones((DEPTH, 1, EMBED), jnp.float32),
            "ln2_b": jnp.zeros((DEPTH, 1, EMBED), jnp.float32),
            "w_fc1": nrm((DEPTH, EMBED, MLP_HID)).astype(bf16),
            "b_fc1": nrm((DEPTH, 1, MLP_HID)),
            "w_fc2": nrm((DEPTH, MLP_HID, EMBED)).astype(bf16),
            "b_fc2": nrm((DEPTH, 1, EMBED)),
        },
    }
    return params


@jax.jit
def vit_extractor_forward(x, params):
    """Equivalent of ViTExtractor.forward: the forward hook captures every
    Block output; extract_feature returns the CLS token of the LAST one
    (before the ViT's final norm / head, which therefore are omitted)."""
    tok = patch_embed_tokens(x, params)          # (B, SEQ_PAD, D)
    tok = vit_blocks(tok, params["blocks"])      # (B, SEQ_PAD, D)
    return tok[:, 0]                             # CLS token -> (B, EMBED)


if __name__ == "__main__":
    key = jax.random.PRNGKey(0)
    kx, kp = jax.random.split(key)
    x = jax.random.normal(kx, (2, IN_CH, IMG, IMG), jnp.float32)
    params = init_params(kp)
    feats = vit_extractor_forward(x, params)
    jax.block_until_ready(feats)
    assert feats.shape == (2, EMBED) and feats.dtype == jnp.float32
    assert bool(jnp.all(jnp.isfinite(feats)))
    print("KERNEL_OK")
</pallas_src>

<mosaic_0001>
module attributes {stable_mosaic.version = 11 : i64} {
  func.func @_embed_kernel(%arg0: i32, %arg1: memref<8x768xf32, #tpu.memory_space<vmem>>, %arg2: memref<768x128xbf16, #tpu.memory_space<vmem>>, %arg3: memref<8x128xf32, #tpu.memory_space<vmem>>, %arg4: memref<2x8x128xf32, #tpu.memory_space<vmem>>) attributes {dimension_semantics = [#tpu.dimension_semantics<arbitrary>], iteration_bounds = array<i64: 1>, scalar_prefetch = 0 : i64, scratch_operands = 0 : i64, tpu.core_type = #tpu.core_type<tc>, window_params = [{pipeline_mode = #tpu.pipeline_mode<synchronous>, transform_indices = @transform_0, window_bounds = array<i64: 8, 768>}, {pipeline_mode = #tpu.pipeline_mode<synchronous>, transform_indices = @transform_1, window_bounds = array<i64: 768, 128>}, {pipeline_mode = #tpu.pipeline_mode<synchronous>, transform_indices = @transform_2, window_bounds = array<i64: 8, 128>}, {pipeline_mode = #tpu.pipeline_mode<synchronous>, transform_indices = @transform_3, window_bounds = array<i64: 2, 8, 128>}]} {
    %c0 = arith.constant 0 : index
    %c0_0 = arith.constant 0 : index
    %0 = vector.load %arg1[%c0, %c0_0] : memref<8x768xf32, #tpu.memory_space<vmem>>, vector<8x768xf32>
    %1 = arith.truncf %0 : vector<8x768xf32> to vector<8x768xbf16>
    %c0_1 = arith.constant 0 : index
    %c0_2 = arith.constant 0 : index
    %2 = vector.load %arg2[%c0_1, %c0_2] : memref<768x128xbf16, #tpu.memory_space<vmem>>, vector<768x128xbf16>
    %cst = arith.constant dense<0.000000e+00> : vector<8x128xf32>
    %3 = tpu.matmul %1, %2, %cst {dimension_numbers = #tpu.dot_dimension_numbers<[1], [0], [0], [1], [0, 0, 1, 1], [], []>} : vector<8x768xbf16>, vector<768x128xbf16>, vector<8x128xf32> -> vector<8x128xf32>
    %c0_3 = arith.constant 0 : index
    %c0_4 = arith.constant 0 : index
    %4 = vector.load %arg3[%c0_3, %c0_4] : memref<8x128xf32, #tpu.memory_space<vmem>>, vector<8x128xf32>
    %c0_5 = arith.constant 0 : index
    %c0_6 = arith.constant 0 : index
    %c0_7 = arith.constant 0 : index
    %5 = vector.load %arg4[%c0_5, %c0_6, %c0_7] : memref<2x8x128xf32, #tpu.memory_space<vmem>>, vector<1x8x128xf32>
    %6 = vector.shape_cast %5 : vector<1x8x128xf32> to vector<8x128xf32>
    %7 = vector.shape_cast %4 : vector<8x128xf32> to vector<1x8x128xf32>
    tpu.vector_store %arg4[%c0_5, %c0_6, %c0_7], %7 {strides = array<i32>} : memref<2x8x128xf32, #tpu.memory_space<vmem>>, vector<1x8x128xf32>,
    %8 = vector.extract_strided_slice %4 {offsets = [1, 0], sizes = [4, 128], strides = [1, 1]} : vector<8x128xf32> to vector<4x128xf32>
    %9 = vector.extract_strided_slice %3 {offsets = [0, 0], sizes = [4, 128], strides = [1, 1]} : vector<8x128xf32> to vector<4x128xf32>
    %10 = arith.addf %8, %9 : vector<4x128xf32>
    %c0_8 = arith.constant 0 : index
    %c1 = arith.constant 1 : index
    %c0_9 = arith.constant 0 : index
    %11 = vector.load %arg4[%c0_8, %c1, %c0_9] : memref<2x8x128xf32, #tpu.memory_space<vmem>>, vector<1x4x128xf32>
    %12 = vector.shape_cast %11 : vector<1x4x128xf32> to vector<4x128xf32>
    %13 = vector.shape_cast %10 : vector<4x128xf32> to vector<1x4x128xf32>
    tpu.vector_store %arg4[%c0_8, %c1, %c0_9], %13 {strides = array<i32>} : memref<2x8x128xf32, #tpu.memory_space<vmem>>, vector<1x4x128xf32>,
    %c1_10 = arith.constant 1 : index
    %c0_11 = arith.constant 0 : index
    %c0_12 = arith.constant 0 : index
    %14 = vector.load %arg4[%c1_10, %c0_11, %c0_12] : memref<2x8x128xf32, #tpu.memory_space<vmem>>, vector<1x8x128xf32>
    %15 = vector.shape_cast %14 : vector<1x8x128xf32> to vector<8x128xf32>
    %16 = vector.shape_cast %4 : vector<8x128xf32> to vector<1x8x128xf32>
    tpu.vector_store %arg4[%c1_10, %c0_11, %c0_12], %16 {strides = array<i32>} : memref<2x8x128xf32, #tpu.memory_space<vmem>>, vector<1x8x128xf32>,
    %17 = vector.extract_strided_slice %4 {offsets = [1, 0], sizes = [4, 128], strides = [1, 1]} : vector<8x128xf32> to vector<4x128xf32>
    %18 = vector.extract_strided_slice %3 {offsets = [4, 0], sizes = [4, 128], strides = [1, 1]} : vector<8x128xf32> to vector<4x128xf32>
    %19 = arith.addf %17, %18 : vector<4x128xf32>
    %c1_13 = arith.constant 1 : index
    %c1_14 = arith.constant 1 : index
    %c0_15 = arith.constant 0 : index
    %20 = vector.load %arg4[%c1_13, %c1_14, %c0_15] : memref<2x8x128xf32, #tpu.memory_space<vmem>>, vector<1x4x128xf32>
    %21 = vector.shape_cast %20 : vector<1x4x128xf32> to vector<4x128xf32>
    %22 = vector.shape_cast %19 : vector<4x128xf32> to vector<1x4x128xf32>
    tpu.vector_store %arg4[%c1_13, %c1_14, %c0_15], %22 {strides = array<i32>} : memref<2x8x128xf32, #tpu.memory_space<vmem>>, vector<1x4x128xf32>,
    return
  }
  func.func @transform_0(%arg0: i32) -> (i32, i32) {
    %c0_i32 = arith.constant 0 : i32
    %c0_i32_0 = arith.constant 0 : i32
    %c0_i32_1 = arith.constant 0 : i32
    return %c0_i32, %c0_i32_0 : i32, i32
  }
  func.func @transform_1(%arg0: i32) -> (i32, i32) {
    %c0_i32 = arith.constant 0 : i32
    %c0_i32_0 = arith.constant 0 : i32
    %c0_i32_1 = arith.constant 0 : i32
    return %c0_i32, %c0_i32_0 : i32, i32
  }
  func.func @transform_2(%arg0: i32) -> (i32, i32) {
    %c0_i32 = arith.constant 0 : i32
    %c0_i32_0 = arith.constant 0 : i32
    %c0_i32_1 = arith.constant 0 : i32
    return %c0_i32, %c0_i32_0 : i32, i32
  }
  func.func @transform_3(%arg0: i32) -> (i32, i32, i32) {
    %c0_i32 = arith.constant 0 : i32
    %c0_i32_0 = arith.constant 0 : i32
    %c0_i32_1 = arith.constant 0 : i32
    %c0_i32_2 = arith.constant 0 : i32
    return %c0_i32, %c0_i32_0, %c0_i32_1 : i32, i32, i32
  }
}

module attributes {stable_mosaic.version = 11 : i64} {
  func.func @_vit_blocks_kernel(%arg0: i32, %arg1: memref<2x8x128xf32, #tpu.memory_space<vmem>>, %arg2: memref<1x1x128xf32, #tpu.memory_space<vmem>>, %arg3: memref<1x1x128xf32, #tpu.memory_space<vmem>>, %arg4: memref<1x128x384xbf16, #tpu.memory_space<vmem>>, %arg5: memref<1x1x384xf32, #tpu.memory_space<vmem>>, %arg6: memref<1x128x128xbf16, #tpu.memory_space<vmem>>, %arg7: memref<1x1x128xf32, #tpu.memory_space<vmem>>, %arg8: memref<1x1x128xf32, #tpu.memory_space<vmem>>, %arg9: memref<1x1x128xf32, #tpu.memory_space<vmem>>, %arg10: memref<1x128x512xbf16, #tpu.memory_space<vmem>>, %arg11: memref<1x1x512xf32, #tpu.memory_space<vmem>>, %arg12: memref<1x512x128xbf16, #tpu.memory_space<vmem>>, %arg13: memref<1x1x128xf32, #tpu.memory_space<vmem>>, %arg14: memref<2x8x128xf32, #tpu.memory_space<vmem>>) attributes {dimension_semantics = [#tpu.dimension_semantics<arbitrary>], iteration_bounds = array<i64: 2>, scalar_prefetch = 0 : i64, scratch_operands = 0 : i64, tpu.core_type = #tpu.core_type<tc>, window_params = [{pipeline_mode = #tpu.pipeline_mode<synchronous>, transform_indices = @transform_0, window_bounds = array<i64: 2, 8, 128>}, {transform_indices = @transform_1, window_bounds = array<i64: 1, 1, 128>}, {transform_indices = @transform_2, window_bounds = array<i64: 1, 1, 128>}, {transform_indices = @transform_3, window_bounds = array<i64: 1, 128, 384>}, {transform_indices = @transform_4, window_bounds = array<i64: 1, 1, 384>}, {transform_indices = @transform_5, window_bounds = array<i64: 1, 128, 128>}, {transform_indices = @transform_6, window_bounds = array<i64: 1, 1, 128>}, {transform_indices = @transform_7, window_bounds = array<i64: 1, 1, 128>}, {transform_indices = @transform_8, window_bounds = array<i64: 1, 1, 128>}, {transform_indices = @transform_9, window_bounds = array<i64: 1, 128, 512>}, {transform_indices = @transform_10, window_bounds = array<i64: 1, 1, 512>}, {transform_indices = @transform_11, window_bounds = array<i64: 1, 512, 128>}, {transform_indices = @transform_12, window_bounds = array<i64: 1, 1, 128>}, {pipeline_mode = #tpu.pipeline_mode<synchronous>, transform_indices = @transform_13, window_bounds = array<i64: 2, 8, 128>}]} {
    %c0_i32 = arith.constant 0 : i32
    %0 = arith.cmpi eq, %arg0, %c0_i32 : i32
    %1 = arith.extui %0 : i1 to i32
    %c0_i32_0 = arith.constant 0 : i32
    %2 = arith.cmpi ne, %1, %c0_i32_0 : i32
    scf.if %2 {
      %c0_79 = arith.constant 0 : index
      %c0_80 = arith.constant 0 : index
      %c0_81 = arith.constant 0 : index
      %196 = vector.load %arg1[%c0_79, %c0_80, %c0_81] : memref<2x8x128xf32, #tpu.memory_space<vmem>>, vector<2x8x128xf32>
      %c0_82 = arith.constant 0 : index
      %c0_83 = arith.constant 0 : index
      %c0_84 = arith.constant 0 : index
      %197 = vector.load %arg14[%c0_82, %c0_83, %c0_84] : memref<2x8x128xf32, #tpu.memory_space<vmem>>, vector<2x8x128xf32>
      tpu.vector_store %arg14[%c0_82, %c0_83, %c0_84], %196 {strides = array<i32>} : memref<2x8x128xf32, #tpu.memory_space<vmem>>, vector<2x8x128xf32>,
    } else {
    }
    %c0 = arith.constant 0 : index
    %c0_1 = arith.constant 0 : index
    %c0_2 = arith.constant 0 : index
    %3 = vector.load %arg14[%c0, %c0_1, %c0_2] : memref<2x8x128xf32, #tpu.memory_space<vmem>>, vector<2x8x128xf32>
    %4 = vector.shape_cast %3 : vector<2x8x128xf32> to vector<16x128xf32>
    %5 = tpu.iota {dimensions = array<i32: 2>} : vector<1x8x8xi32>
    %c5_i32 = arith.constant 5 : i32
    %6 = vector.broadcast %c5_i32 : i32 to vector<1x8x8xi32>
    %7 = arith.cmpi slt, %5, %6 : vector<1x8x8xi32>
    %c0_3 = arith.constant 0 : index
    %c0_4 = arith.constant 0 : index
    %c0_5 = arith.constant 0 : index
    %8 = vector.load %arg2[%c0_3, %c0_4, %c0_5] : memref<1x1x128xf32, #tpu.memory_space<vmem>>, vector<1x1x128xf32>
    %9 = vector.shape_cast %8 : vector<1x1x128xf32> to vector<1x128xf32>
    %c0_6 = arith.constant 0 : index
    %c0_7 = arith.constant 0 : index
    %c0_8 = arith.constant 0 : index
    %10 = vector.load %arg3[%c0_6, %c0_7, %c0_8] : memref<1x1x128xf32, #tpu.memory_space<vmem>>, vector<1x1x128xf32>
    %11 = vector.shape_cast %10 : vector<1x1x128xf32> to vector<1x128xf32>
    %cst = arith.constant dense<0.000000e+00> : vector<16xf32>
    %12 = vector.multi_reduction <add>, %4, %cst [1] : vector<16x128xf32> to vector<16xf32>
    %13 = vector.shape_cast %12 : vector<16xf32> to vector<16x1xf32>
    %cst_9 = arith.constant 1.280000e+02 : f32
    %14 = vector.broadcast %cst_9 : f32 to vector<16x1xf32>
    %15 = arith.divf %13, %14 : vector<16x1xf32>
    %16 = vector.broadcast %15 : vector<16x1xf32> to vector<16x128xf32>
    %17 = arith.subf %4, %16 : vector<16x128xf32>
    %18 = arith.mulf %17, %17 : vector<16x128xf32>
    %cst_10 = arith.constant dense<0.000000e+00> : vector<16xf32>
    %19 = vector.multi_reduction <add>, %18, %cst_10 [1] : vector<16x128xf32> to vector<16xf32>
    %20 = vector.shape_cast %19 : vector<16xf32> to vector<16x1xf32>
    %cst_11 = arith.constant 1.280000e+02 : f32
    %21 = vector.broadcast %cst_11 : f32 to vector<16x1xf32>
    %22 = arith.divf %20, %21 : vector<16x1xf32>
    %23 = vector.broadcast %15 : vector<16x1xf32> to vector<16x128xf32>
    %24 = arith.subf %4, %23 : vector<16x128xf32>
    %cst_12 = arith.constant 9.99999997E-7 : f32
    %25 = vector.broadcast %cst_12 : f32 to vector<16x1xf32>
    %26 = arith.addf %22, %25 : vector<16x1xf32>
    %27 = math.rsqrt %26 : vector<16x1xf32>
    %28 = vector.broadcast %27 : vector<16x1xf32> to vector<16x128xf32>
    %29 = arith.mulf %24, %28 : vector<16x128xf32>
    %30 = vector.broadcast %9 : vector<1x128xf32> to vector<16x128xf32>
    %31 = arith.mulf %29, %30 : vector<16x128xf32>
    %32 = vector.broadcast %11 : vector<1x128xf32> to vector<16x128xf32>
    %33 = arith.addf %31, %32 : vector<16x128xf32>
    %34 = arith.truncf %33 : vector<16x128xf32> to vector<16x128xbf16>
    %c0_13 = arith.constant 0 : index
    %c0_14 = arith.constant 0 : index
    %c0_15 = arith.constant 0 : index
    %35 = vector.load %arg4[%c0_13, %c0_14, %c0_15] : memref<1x128x384xbf16, #tpu.memory_space<vmem>>, vector<1x128x384xbf16>
    %36 = vector.shape_cast %35 : vector<1x128x384xbf16> to vector<128x384xbf16>
    %cst_16 = arith.constant dense<0.000000e+00> : vector<16x384xf32>
    %37 = tpu.matmul %34, %36, %cst_16 {dimension_numbers = #tpu.dot_dimension_numbers<[1], [0], [0], [1], [0, 0, 1, 1], [], []>} : vector<16x128xbf16>, vector<128x384xbf16>, vector<16x384xf32> -> vector<16x384xf32>
    %c0_17 = arith.constant 0 : index
    %c0_18 = arith.constant 0 : index
    %c0_19 = arith.constant 0 : index
    %38 = vector.load %arg5[%c0_17, %c0_18, %c0_19] : memref<1x1x384xf32, #tpu.memory_space<vmem>>, vector<1x1x384xf32>
    %39 = vector.shape_cast %38 : vector<1x1x384xf32> to vector<1x384xf32>
    %40 = vector.broadcast %39 : vector<1x384xf32> to vector<16x384xf32>
    %41 = arith.addf %37, %40 : vector<16x384xf32>
    %42 = vector.shape_cast %41 : vector<16x384xf32> to vector<2x8x384xf32>
    %43 = arith.truncf %42 : vector<2x8x384xf32> to vector<2x8x384xbf16>
    %44 = vector.extract_strided_slice %43 {offsets = [0, 0, 0], sizes = [2, 8, 128], strides = [1, 1, 1]} : vector<2x8x384xbf16> to vector<2x8x128xbf16>
    %45 = vector.extract_strided_slice %43 {offsets = [0, 0, 128], sizes = [2, 8, 128], strides = [1, 1, 1]} : vector<2x8x384xbf16> to vector<2x8x128xbf16>
    %46 = vector.extract_strided_slice %43 {offsets = [0, 0, 256], sizes = [2, 8, 128], strides = [1, 1, 1]} : vector<2x8x384xbf16> to vector<2x8x128xbf16>
    %47 = vector.extract_strided_slice %44 {offsets = [0, 0, 0], sizes = [2, 8, 32], strides = [1, 1, 1]} : vector<2x8x128xbf16> to vector<2x8x32xbf16>
    %48 = vector.extract_strided_slice %45 {offsets = [0, 0, 0], sizes = [2, 8, 32], strides = [1, 1, 1]} : vector<2x8x128xbf16> to vector<2x8x32xbf16>
    %49 = vector.extract_strided_slice %46 {offsets = [0, 0, 0], sizes = [2, 8, 32], strides = [1, 1, 1]} : vector<2x8x128xbf16> to vector<2x8x32xbf16>
    "tpu.trace_start"() <{level = 10 : i32, message = "bqd,bkd->bqk"}> : () -> ()
    %cst_20 = arith.constant dense<0.000000e+00> : vector<2x8x8xf32>
    %50 = tpu.matmul %47, %48, %cst_20 {dimension_numbers = #tpu.dot_dimension_numbers<[2], [2], [1], [1], [0, 0, 0, 1, 1, 1], [0], [0]>} : vector<2x8x32xbf16>, vector<2x8x32xbf16>, vector<2x8x8xf32> -> vector<2x8x8xf32>
    %cst_21 = arith.constant -1.000000e+30 : f32
    "tpu.trace_stop"() : () -> ()
    %51 = vector.shape_cast %7 : vector<1x8x8xi1> to vector<1x8x8xi1>
    %52 = vector.broadcast %51 : vector<1x8x8xi1> to vector<2x8x8xi1>
    %53 = vector.broadcast %cst_21 : f32 to vector<2x8x8xf32>
    %54 = arith.select %52, %50, %53 : vector<2x8x8xi1>, vector<2x8x8xf32>
    %cst_22 = arith.constant dense<0xFF800000> : vector<2x8xf32>
    %55 = vector.multi_reduction <maximumf>, %54, %cst_22 [2] : vector<2x8x8xf32> to vector<2x8xf32>
    %56 = vector.shape_cast %55 : vector<2x8xf32> to vector<2x8x1xf32>
    %57 = vector.broadcast %56 : vector<2x8x1xf32> to vector<2x8x8xf32>
    %58 = arith.subf %54, %57 : vector<2x8x8xf32>
    %59 = math.exp %58 : vector<2x8x8xf32>
    %cst_23 = arith.constant dense<0.000000e+00> : vector<2x8xf32>
    %60 = vector.multi_reduction <add>, %59, %cst_23 [2] : vector<2x8x8xf32> to vector<2x8xf32>
    %61 = vector.shape_cast %60 : vector<2x8xf32> to vector<2x8x1xf32>
    %62 = tpu.reciprocal %61 {approx = true} : vector<2x8x1xf32> -> vector<2x8x1xf32>
    %63 = vector.broadcast %62 : vector<2x8x1xf32> to vector<2x8x8xf32>
    %64 = arith.mulf %59, %63 : vector<2x8x8xf32>
    %65 = arith.truncf %64 : vector<2x8x8xf32> to vector<2x8x8xbf16>
    "tpu.trace_start"() <{level = 10 : i32, message = "bqk,bkd->bqd"}> : () -> ()
    %cst_24 = arith.constant dense<0.000000e+00> : vector<2x8x32xf32>
    %66 = tpu.matmul %65, %49, %cst_24 {dimension_numbers = #tpu.dot_dimension_numbers<[2], [1], [1], [2], [0, 0, 0, 1, 1, 2], [0], [0]>} : vector<2x8x8xbf16>, vector<2x8x32xbf16>, vector<2x8x32xf32> -> vector<2x8x32xf32>
    "tpu.trace_stop"() : () -> ()
    %67 = vector.extract_strided_slice %44 {offsets = [0, 0, 32], sizes = [2, 8, 32], strides = [1, 1, 1]} : vector<2x8x128xbf16> to vector<2x8x32xbf16>
    %68 = vector.extract_strided_slice %45 {offsets = [0, 0, 32], sizes = [2, 8, 32], strides = [1, 1, 1]} : vector<2x8x128xbf16> to vector<2x8x32xbf16>
    %69 = vector.extract_strided_slice %46 {offsets = [0, 0, 32], sizes = [2, 8, 32], strides = [1, 1, 1]} : vector<2x8x128xbf16> to vector<2x8x32xbf16>
    "tpu.trace_start"() <{level = 10 : i32, message = "bqd,bkd->bqk"}> : () -> ()
    %cst_25 = arith.constant dense<0.000000e+00> : vector<2x8x8xf32>
    %70 = tpu.matmul %67, %68, %cst_25 {dimension_numbers = #tpu.dot_dimension_numbers<[2], [2], [1], [1], [0, 0, 0, 1, 1, 1], [0], [0]>} : vector<2x8x32xbf16>, vector<2x8x32xbf16>, vector<2x8x8xf32> -> vector<2x8x8xf32>
    %cst_26 = arith.constant -1.000000e+30 : f32
    "tpu.trace_stop"() : () -> ()
    %71 = vector.shape_cast %7 : vector<1x8x8xi1> to vector<1x8x8xi1>
    %72 = vector.broadcast %71 : vector<1x8x8xi1> to vector<2x8x8xi1>
    %73 = vector.broadcast %cst_26 : f32 to vector<2x8x8xf32>
    %74 = arith.select %72, %70, %73 : vector<2x8x8xi1>, vector<2x8x8xf32>
    %cst_27 = arith.constant dense<0xFF800000> : vector<2x8xf32>
    %75 = vector.multi_reduction <maximumf>, %74, %cst_27 [2] : vector<2x8x8xf32> to vector<2x8xf32>
    %76 = vector.shape_cast %75 : vector<2x8xf32> to vector<2x8x1xf32>
    %77 = vector.broadcast %76 : vector<2x8x1xf32> to vector<2x8x8xf32>
    %78 = arith.subf %74, %77 : vector<2x8x8xf32>
    %79 = math.exp %78 : vector<2x8x8xf32>
    %cst_28 = arith.constant dense<0.000000e+00> : vector<2x8xf32>
    %80 = vector.multi_reduction <add>, %79, %cst_28 [2] : vector<2x8x8xf32> to vector<2x8xf32>
    %81 = vector.shape_cast %80 : vector<2x8xf32> to vector<2x8x1xf32>
    %82 = tpu.reciprocal %81 {approx = true} : vector<2x8x1xf32> -> vector<2x8x1xf32>
    %83 = vector.broadcast %82 : vector<2x8x1xf32> to vector<2x8x8xf32>
    %84 = arith.mulf %79, %83 : vector<2x8x8xf32>
    %85 = arith.truncf %84 : vector<2x8x8xf32> to vector<2x8x8xbf16>
    "tpu.trace_start"() <{level = 10 : i32, message = "bqk,bkd->bqd"}> : () -> ()
    %cst_29 = arith.constant dense<0.000000e+00> : vector<2x8x32xf32>
    %86 = tpu.matmul %85, %69, %cst_29 {dimension_numbers = #tpu.dot_dimension_numbers<[2], [1], [1], [2], [0, 0, 0, 1, 1, 2], [0], [0]>} : vector<2x8x8xbf16>, vector<2x8x32xbf16>, vector<2x8x32xf32> -> vector<2x8x32xf32>
    "tpu.trace_stop"() : () -> ()
    %87 = vector.extract_strided_slice %44 {offsets = [0, 0, 64], sizes = [2, 8, 32], strides = [1, 1, 1]} : vector<2x8x128xbf16> to vector<2x8x32xbf16>
    %88 = vector.extract_strided_slice %45 {offsets = [0, 0, 64], sizes = [2, 8, 32], strides = [1, 1, 1]} : vector<2x8x128xbf16> to vector<2x8x32xbf16>
    %89 = vector.extract_strided_slice %46 {offsets = [0, 0, 64], sizes = [2, 8, 32], strides = [1, 1, 1]} : vector<2x8x128xbf16> to vector<2x8x32xbf16>
    "tpu.trace_start"() <{level = 10 : i32, message = "bqd,bkd->bqk"}> : () -> ()
    %cst_30 = arith.constant dense<0.000000e+00> : vector<2x8x8xf32>
    %90 = tpu.matmul %87, %88, %cst_30 {dimension_numbers = #tpu.dot_dimension_numbers<[2], [2], [1], [1], [0, 0, 0, 1, 1, 1], [0], [0]>} : vector<2x8x32xbf16>, vector<2x8x32xbf16>, vector<2x8x8xf32> -> vector<2x8x8xf32>
    %cst_31 = arith.constant -1.000000e+30 : f32
    "tpu.trace_stop"() : () -> ()
    %91 = vector.shape_cast %7 : vector<1x8x8xi1> to vector<1x8x8xi1>
    %92 = vector.broadcast %91 : vector<1x8x8xi1> to vector<2x8x8xi1>
    %93 = vector.broadcast %cst_31 : f32 to vector<2x8x8xf32>
    %94 = arith.select %92, %90, %93 : vector<2x8x8xi1>, vector<2x8x8xf32>
    %cst_32 = arith.constant dense<0xFF800000> : vector<2x8xf32>
    %95 = vector.multi_reduction <maximumf>, %94, %cst_32 [2] : vector<2x8x8xf32> to vector<2x8xf32>
    %96 = vector.shape_cast %95 : vector<2x8xf32> to vector<2x8x1xf32>
    %97 = vector.broadcast %96 : vector<2x8x1xf32> to vector<2x8x8xf32>
    %98 = arith.subf %94, %97 : vector<2x8x8xf32>
    %99 = math.exp %98 : vector<2x8x8xf32>
    %cst_33 = arith.constant dense<0.000000e+00> : vector<2x8xf32>
    %100 = vector.multi_reduction <add>, %99, %cst_33 [2] : vector<2x8x8xf32> to vector<2x8xf32>
    %101 = vector.shape_cast %100 : vector<2x8xf32> to vector<2x8x1xf32>
    %102 = tpu.reciprocal %101 {approx = true} : vector<2x8x1xf32> -> vector<2x8x1xf32>
    %103 = vector.broadcast %102 : vector<2x8x1xf32> to vector<2x8x8xf32>
    %104 = arith.mulf %99, %103 : vector<2x8x8xf32>
    %105 = arith.truncf %104 : vector<2x8x8xf32> to vector<2x8x8xbf16>
    "tpu.trace_start"() <{level = 10 : i32, message = "bqk,bkd->bqd"}> : () -> ()
    %cst_34 = arith.constant dense<0.000000e+00> : vector<2x8x32xf32>
    %106 = tpu.matmul %105, %89, %cst_34 {dimension_numbers = #tpu.dot_dimension_numbers<[2], [1], [1], [2], [0, 0, 0, 1, 1, 2], [0], [0]>} : vector<2x8x8xbf16>, vector<2x8x32xbf16>, vector<2x8x32xf32> -> vector<2x8x32xf32>
    "tpu.trace_stop"() : () -> ()
    %107 = vector.extract_strided_slice %44 {offsets = [0, 0, 96], sizes = [2, 8, 32], strides = [1, 1, 1]} : vector<2x8x128xbf16> to vector<2x8x32xbf16>
    %108 = vector.extract_strided_slice %45 {offsets = [0, 0, 96], sizes = [2, 8, 32], strides = [1, 1, 1]} : vector<2x8x128xbf16> to vector<2x8x32xbf16>
    %109 = vector.extract_strided_slice %46 {offsets = [0, 0, 96], sizes = [2, 8, 32], strides = [1, 1, 1]} : vector<2x8x128xbf16> to vector<2x8x32xbf16>
    "tpu.trace_start"() <{level = 10 : i32, message = "bqd,bkd->bqk"}> : () -> ()
    %cst_35 = arith.constant dense<0.000000e+00> : vector<2x8x8xf32>
    %110 = tpu.matmul %107, %108, %cst_35 {dimension_numbers = #tpu.dot_dimension_numbers<[2], [2], [1], [1], [0, 0, 0, 1, 1, 1], [0], [0]>} : vector<2x8x32xbf16>, vector<2x8x32xbf16>, vector<2x8x8xf32> -> vector<2x8x8xf32>
    %cst_36 = arith.constant -1.000000e+30 : f32
    "tpu.trace_stop"() : () -> ()
    %111 = vector.shape_cast %7 : vector<1x8x8xi1> to vector<1x8x8xi1>
    %112 = vector.broadcast %111 : vector<1x8x8xi1> to vector<2x8x8xi1>
    %113 = vector.broadcast %cst_36 : f32 to vector<2x8x8xf32>
    %114 = arith.select %112, %110, %113 : vector<2x8x8xi1>, vector<2x8x8xf32>
    %cst_37 = arith.constant dense<0xFF800000> : vector<2x8xf32>
    %115 = vector.multi_reduction <maximumf>, %114, %cst_37 [2] : vector<2x8x8xf32> to vector<2x8xf32>
    %116 = vector.shape_cast %115 : vector<2x8xf32> to vector<2x8x1xf32>
    %117 = vector.broadcast %116 : vector<2x8x1xf32> to vector<2x8x8xf32>
    %118 = arith.subf %114, %117 : vector<2x8x8xf32>
    %119 = math.exp %118 : vector<2x8x8xf32>
    %cst_38 = arith.constant dense<0.000000e+00> : vector<2x8xf32>
    %120 = vector.multi_reduction <add>, %119, %cst_38 [2] : vector<2x8x8xf32> to vector<2x8xf32>
    %121 = vector.shape_cast %120 : vector<2x8xf32> to vector<2x8x1xf32>
    %122 = tpu.reciprocal %121 {approx = true} : vector<2x8x1xf32> -> vector<2x8x1xf32>
    %123 = vector.broadcast %122 : vector<2x8x1xf32> to vector<2x8x8xf32>
    %124 = arith.mulf %119, %123 : vector<2x8x8xf32>
    %125 = arith.truncf %124 : vector<2x8x8xf32> to vector<2x8x8xbf16>
    "tpu.trace_start"() <{level = 10 : i32, message = "bqk,bkd->bqd"}> : () -> ()
    %cst_39 = arith.constant dense<0.000000e+00> : vector<2x8x32xf32>
    %126 = tpu.matmul %125, %109, %cst_39 {dimension_numbers = #tpu.dot_dimension_numbers<[2], [1], [1], [2], [0, 0, 0, 1, 1, 2], [0], [0]>} : vector<2x8x8xbf16>, vector<2x8x32xbf16>, vector<2x8x32xf32> -> vector<2x8x32xf32>
    "tpu.trace_stop"() : () -> ()
    %127 = tpu.concatenate %66, %86, %106, %126 in 2 : vector<2x8x32xf32>, vector<2x8x32xf32>, vector<2x8x32xf32>, vector<2x8x32xf32> -> vector<2x8x128xf32>
    %128 = vector.shape_cast %127 : vector<2x8x128xf32> to vector<16x128xf32>
    %129 = arith.truncf %128 : vector<16x128xf32> to vector<16x128xbf16>
    %c0_40 = arith.constant 0 : index
    %c0_41 = arith.constant 0 : index
    %c0_42 = arith.constant 0 : index
    %130 = vector.load %arg6[%c0_40, %c0_41, %c0_42] : memref<1x128x128xbf16, #tpu.memory_space<vmem>>, vector<1x128x128xbf16>
    %131 = vector.shape_cast %130 : vector<1x128x128xbf16> to vector<128x128xbf16>
    %cst_43 = arith.constant dense<0.000000e+00> : vector<16x128xf32>
    %132 = tpu.matmul %129, %131, %cst_43 {dimension_numbers = #tpu.dot_dimension_numbers<[1], [0], [0], [1], [0, 0, 1, 1], [], []>} : vector<16x128xbf16>, vector<128x128xbf16>, vector<16x128xf32> -> vector<16x128xf32>
    %c0_44 = arith.constant 0 : index
    %c0_45 = arith.constant 0 : index
    %c0_46 = arith.constant 0 : index
    %133 = vector.load %arg7[%c0_44, %c0_45, %c0_46] : memref<1x1x128xf32, #tpu.memory_space<vmem>>, vector<1x1x128xf32>
    %134 = vector.shape_cast %133 : vector<1x1x128xf32> to vector<1x128xf32>
    %135 = vector.broadcast %134 : vector<1x128xf32> to vector<16x128xf32>
    %136 = arith.addf %132, %135 : vector<16x128xf32>
    %137 = arith.addf %4, %136 : vector<16x128xf32>
    %c0_47 = arith.constant 0 : index
    %c0_48 = arith.constant 0 : index
    %c0_49 = arith.constant 0 : index
    %138 = vector.load %arg8[%c0_47, %c0_48, %c0_49] : memref<1x1x128xf32, #tpu.memory_space<vmem>>, vector<1x1x128xf32>
    %139 = vector.shape_cast %138 : vector<1x1x128xf32> to vector<1x128xf32>
    %c0_50 = arith.constant 0 : index
    %c0_51 = arith.constant 0 : index
    %c0_52 = arith.constant 0 : index
    %140 = vector.load %arg9[%c0_50, %c0_51, %c0_52] : memref<1x1x128xf32, #tpu.memory_space<vmem>>, vector<1x1x128xf32>
    %141 = vector.shape_cast %140 : vector<1x1x128xf32> to vector<1x128xf32>
    %cst_53 = arith.constant dense<0.000000e+00> : vector<16xf32>
    %142 = vector.multi_reduction <add>, %137, %cst_53 [1] : vector<16x128xf32> to vector<16xf32>
    %143 = vector.shape_cast %142 : vector<16xf32> to vector<16x1xf32>
    %cst_54 = arith.constant 1.280000e+02 : f32
    %144 = vector.broadcast %cst_54 : f32 to vector<16x1xf32>
    %145 = arith.divf %143, %144 : vector<16x1xf32>
    %146 = vector.broadcast %145 : vector<16x1xf32> to vector<16x128xf32>
    %147 = arith.subf %137, %146 : vector<16x128xf32>
    %148 = arith.mulf %147, %147 : vector<16x128xf32>
    %cst_55 = arith.constant dense<0.000000e+00> : vector<16xf32>
    %149 = vector.multi_reduction <add>, %148, %cst_55 [1] : vector<16x128xf32> to vector<16xf32>
    %150 = vector.shape_cast %149 : vector<16xf32> to vector<16x1xf32>
    %cst_56 = arith.constant 1.280000e+02 : f32
    %151 = vector.broadcast %cst_56 : f32 to vector<16x1xf32>
    %152 = arith.divf %150, %151 : vector<16x1xf32>
    %153 = vector.broadcast %145 : vector<16x1xf32> to vector<16x128xf32>
    %154 = arith.subf %137, %153 : vector<16x128xf32>
    %cst_57 = arith.constant 9.99999997E-7 : f32
    %155 = vector.broadcast %cst_57 : f32 to vector<16x1xf32>
    %156 = arith.addf %152, %155 : vector<16x1xf32>
    %157 = math.rsqrt %156 : vector<16x1xf32>
    %158 = vector.broadcast %157 : vector<16x1xf32> to vector<16x128xf32>
    %159 = arith.mulf %154, %158 : vector<16x128xf32>
    %160 = vector.broadcast %139 : vector<1x128xf32> to vector<16x128xf32>
    %161 = arith.mulf %159, %160 : vector<16x128xf32>
    %162 = vector.broadcast %141 : vector<1x128xf32> to vector<16x128xf32>
    %163 = arith.addf %161, %162 : vector<16x128xf32>
    %164 = arith.truncf %163 : vector<16x128xf32> to vector<16x128xbf16>
    %c0_58 = arith.constant 0 : index
    %c0_59 = arith.constant 0 : index
    %c0_60 = arith.constant 0 : index
    %165 = vector.load %arg10[%c0_58, %c0_59, %c0_60] : memref<1x128x512xbf16, #tpu.memory_space<vmem>>, vector<1x128x512xbf16>
    %166 = vector.shape_cast %165 : vector<1x128x512xbf16> to vector<128x512xbf16>
    %cst_61 = arith.constant dense<0.000000e+00> : vector<16x512xf32>
    %167 = tpu.matmul %164, %166, %cst_61 {dimension_numbers = #tpu.dot_dimension_numbers<[1], [0], [0], [1], [0, 0, 1, 1], [], []>} : vector<16x128xbf16>, vector<128x512xbf16>, vector<16x512xf32> -> vector<16x512xf32>
    %c0_62 = arith.constant 0 : index
    %c0_63 = arith.constant 0 : index
    %c0_64 = arith.constant 0 : index
    %168 = vector.load %arg11[%c0_62, %c0_63, %c0_64] : memref<1x1x512xf32, #tpu.memory_space<vmem>>, vector<1x1x512xf32>
    %169 = vector.shape_cast %168 : vector<1x1x512xf32> to vector<1x512xf32>
    %170 = vector.broadcast %169 : vector<1x512xf32> to vector<16x512xf32>
    %171 = arith.addf %167, %170 : vector<16x512xf32>
    %172 = arith.mulf %171, %171 : vector<16x512xf32>
    %173 = arith.mulf %171, %172 : vector<16x512xf32>
    %cst_65 = arith.constant 4.471500e-02 : f32
    %174 = vector.broadcast %cst_65 : f32 to vector<16x512xf32>
    %175 = arith.mulf %174, %173 : vector<16x512xf32>
    %176 = arith.addf %171, %175 : vector<16x512xf32>
    %cst_66 = arith.constant 0.797884583 : f32
    %177 = vector.broadcast %cst_66 : f32 to vector<16x512xf32>
    %178 = arith.mulf %177, %176 : vector<16x512xf32>
    %179 = math.tanh %178 : vector<16x512xf32>
    %cst_67 = arith.constant 1.000000e+00 : f32
    %180 = vector.broadcast %cst_67 : f32 to vector<16x512xf32>
    %181 = arith.addf %180, %179 : vector<16x512xf32>
    %cst_68 = arith.constant 5.000000e-01 : f32
    %182 = vector.broadcast %cst_68 : f32 to vector<16x512xf32>
    %183 = arith.mulf %182, %181 : vector<16x512xf32>
    %184 = arith.mulf %171, %183 : vector<16x512xf32>
    %185 = arith.truncf %184 : vector<16x512xf32> to vector<16x512xbf16>
    %c0_69 = arith.constant 0 : index
    %c0_70 = arith.constant 0 : index
    %c0_71 = arith.constant 0 : index
    %186 = vector.load %arg12[%c0_69, %c0_70, %c0_71] : memref<1x512x128xbf16, #tpu.memory_space<vmem>>, vector<1x512x128xbf16>
    %187 = vector.shape_cast %186 : vector<1x512x128xbf16> to vector<512x128xbf16>
    %cst_72 = arith.constant dense<0.000000e+00> : vector<16x128xf32>
    %188 = tpu.matmul %185, %187, %cst_72 {dimension_numbers = #tpu.dot_dimension_numbers<[1], [0], [0], [1], [0, 0, 1, 1], [], []>} : vector<16x512xbf16>, vector<512x128xbf16>, vector<16x128xf32> -> vector<16x128xf32>
    %c0_73 = arith.constant 0 : index
    %c0_74 = arith.constant 0 : index
    %c0_75 = arith.constant 0 : index
    %189 = vector.load %arg13[%c0_73, %c0_74, %c0_75] : memref<1x1x128xf32, #tpu.memory_space<vmem>>, vector<1x1x128xf32>
    %190 = vector.shape_cast %189 : vector<1x1x128xf32> to vector<1x128xf32>
    %191 = vector.broadcast %190 : vector<1x128xf32> to vector<16x128xf32>
    %192 = arith.addf %188, %191 : vector<16x128xf32>
    %193 = arith.addf %137, %192 : vector<16x128xf32>
    %194 = vector.shape_cast %193 : vector<16x128xf32> to vector<2x8x128xf32>
    %c0_76 = arith.constant 0 : index
    %c0_77 = arith.constant 0 : index
    %c0_78 = arith.constant 0 : index
    %195 = vector.load %arg14[%c0_76, %c0_77, %c0_78] : memref<2x8x128xf32, #tpu.memory_space<vmem>>, vector<2x8x128xf32>
    tpu.vector_store %arg14[%c0_76, %c0_77, %c0_78], %194 {strides = array<i32>} : memref<2x8x128xf32, #tpu.memory_space<vmem>>, vector<2x8x128xf32>,
    return
  }
  func.func @transform_0(%arg0: i32) -> (i32, i32, i32) {
    %c0_i32 = arith.constant 0 : i32
    %c0_i32_0 = arith.constant 0 : i32
    %c0_i32_1 = arith.constant 0 : i32
    %c0_i32_2 = arith.constant 0 : i32
    return %c0_i32, %c0_i32_0, %c0_i32_1 : i32, i32, i32
  }
  func.func @transform_1(%arg0: i32) -> (i32, i32, i32) {
    %c0_i32 = arith.constant 0 : i32
    %c0_i32_0 = arith.constant 0 : i32
    %c0_i32_1 = arith.constant 0 : i32
    return %arg0, %c0_i32, %c0_i32_0 : i32, i32, i32
  }
  func.func @transform_2(%arg0: i32) -> (i32, i32, i32) {
    %c0_i32 = arith.constant 0 : i32
    %c0_i32_0 = arith.constant 0 : i32
    %c0_i32_1 = arith.constant 0 : i32
    return %arg0, %c0_i32, %c0_i32_0 : i32, i32, i32
  }
  func.func @transform_3(%arg0: i32) -> (i32, i32, i32) {
    %c0_i32 = arith.constant 0 : i32
    %c0_i32_0 = arith.constant 0 : i32
    %c0_i32_1 = arith.constant 0 : i32
    return %arg0, %c0_i32, %c0_i32_0 : i32, i32, i32
  }
  func.func @transform_4(%arg0: i32) -> (i32, i32, i32) {
    %c0_i32 = arith.constant 0 : i32
    %c0_i32_0 = arith.constant 0 : i32
    %c0_i32_1 = arith.constant 0 : i32
    return %arg0, %c0_i32, %c0_i32_0 : i32, i32, i32
  }
  func.func @transform_5(%arg0: i32) -> (i32, i32, i32) {
    %c0_i32 = arith.constant 0 : i32
    %c0_i32_0 = arith.constant 0 : i32
    %c0_i32_1 = arith.constant 0 : i32
    return %arg0, %c0_i32, %c0_i32_0 : i32, i32, i32
  }
  func.func @transform_6(%arg0: i32) -> (i32, i32, i32) {
    %c0_i32 = arith.constant 0 : i32
    %c0_i32_0 = arith.constant 0 : i32
    %c0_i32_1 = arith.constant 0 : i32
    return %arg0, %c0_i32, %c0_i32_0 : i32, i32, i32
  }
  func.func @transform_7(%arg0: i32) -> (i32, i32, i32) {
    %c0_i32 = arith.constant 0 : i32
    %c0_i32_0 = arith.constant 0 : i32
    %c0_i32_1 = arith.constant 0 : i32
    return %arg0, %c0_i32, %c0_i32_0 : i32, i32, i32
  }
  func.func @transform_8(%arg0: i32) -> (i32, i32, i32) {
    %c0_i32 = arith.constant 0 : i32
    %c0_i32_0 = arith.constant 0 : i32
    %c0_i32_1 = arith.constant 0 : i32
    return %arg0, %c0_i32, %c0_i32_0 : i32, i32, i32
  }
  func.func @transform_9(%arg0: i32) -> (i32, i32, i32) {
    %c0_i32 = arith.constant 0 : i32
    %c0_i32_0 = arith.constant 0 : i32
    %c0_i32_1 = arith.constant 0 : i32
    return %arg0, %c0_i32, %c0_i32_0 : i32, i32, i32
  }
  func.func @transform_10(%arg0: i32) -> (i32, i32, i32) {
    %c0_i32 = arith.constant 0 : i32
    %c0_i32_0 = arith.constant 0 : i32
    %c0_i32_1 = arith.constant 0 : i32
    return %arg0, %c0_i32, %c0_i32_0 : i32, i32, i32
  }
  func.func @transform_11(%arg0: i32) -> (i32, i32, i32) {
    %c0_i32 = arith.constant 0 : i32
    %c0_i32_0 = arith.constant 0 : i32
    %c0_i32_1 = arith.constant 0 : i32
    return %arg0, %c0_i32, %c0_i32_0 : i32, i32, i32
  }
  func.func @transform_12(%arg0: i32) -> (i32, i32, i32) {
    %c0_i32 = arith.constant 0 : i32
    %c0_i32_0 = arith.constant 0 : i32
    %c0_i32_1 = arith.constant 0 : i32
    return %arg0, %c0_i32, %c0_i32_0 : i32, i32, i32
  }
  func.func @transform_13(%arg0: i32) -> (i32, i32, i32) {
    %c0_i32 = arith.constant 0 : i32
    %c0_i32_0 = arith.constant 0 : i32
    %c0_i32_1 = arith.constant 0 : i32
    %c0_i32_2 = arith.constant 0 : i32
    return %c0_i32, %c0_i32_0, %c0_i32_1 : i32, i32, i32
  }
}

</mosaic_0001>

<llo_original>
// kernel: vit_extractor_forward.2
$region0: #{vit_extractor_forward.2}
  #allocation0 [shape = 'u32[]', space=smem, size = 0x4, offset = 0x4, fixed_abs, tag = 'smem constant byte address 0x4 - core index']
  #allocation1 [shape = 'u32[144,128]{1,0:T(1,128)}', space=vmem, size = 0x12000, scoped, tag = 'internal scratch']
  %s0 = inlined_call_operand.vmem [shape: f32[8,768], index: 0, kind: input, shape index: {}]
  %s1 = inlined_call_operand.vmem [shape: bf16[768,128], index: 1, kind: input, shape index: {}]
  %s2 = inlined_call_operand.vmem [shape: f32[8,128], index: 2, kind: input, shape index: {}]
  %s3 = inlined_call_operand.vmem [shape: f32[2,8,128], index: 3, kind: output, shape index: {}]
  %s4 = sld [smem:[#allocation0]]
  $region22: #{vit_extractor_forward.2} parent=0
    _
  %s6 = ssub.s32 1, %s4
  %s7 = scalar_select 0, %s6, %s4
  // Predicated region
  $region2: #{vit_extractor_forward.2} parent=0 // pred_check
    _
  $region3: #{vit_extractor_forward.2} parent=0 // pred_check_branch
    %9 = sbr.rel (0) target = $region5
  $region4: #{vit_extractor_forward.2} parent=0 // pred_region
    _
  $region5: #{vit_extractor_forward.2} parent=0 // pred_fallthru
    _
  // Predicated region
  $region6: #{vit_extractor_forward.2} parent=0 // pred_check
    _
  $region7: #{vit_extractor_forward.2} parent=0 // pred_check_branch
    %11 = sbr.rel (0) target = $region9
  $region8: #{vit_extractor_forward.2} parent=0 // pred_region
    _
  $region9: #{vit_extractor_forward.2} parent=0 // pred_fallthru
    _
  // Predicated region
  $region10: #{vit_extractor_forward.2} parent=0 // pred_check
    _
  $region11: #{vit_extractor_forward.2} parent=0 // pred_check_branch
    %13 = sbr.rel (0) target = $region13
  $region12: #{vit_extractor_forward.2} parent=0 // pred_region
    _
  $region13: #{vit_extractor_forward.2} parent=0 // pred_fallthru
    _
  %v15 = vld [vmem:[%s0] sm:$0xff]
  %v16 = vld [vmem:[%s0 + $0x8] sm:$0xff]
  %v17 = vld [vmem:[%s0 + $0x10] sm:$0xff]
  %v18 = vld [vmem:[%s0 + $0x18] sm:$0xff]
  %v19 = vld [vmem:[%s0 + $0x20] sm:$0xff]
  %v20 = vld [vmem:[%s0 + $0x28] sm:$0xff]
  %v21 = vpack.c.bf16 %v15, %v15
  %v22 = vpack.c.bf16 %v16, %v16
  %v23 = vpack.c.bf16 %v17, %v17
  %v24 = vpack.c.bf16 %v18, %v18
  %v25 = vpack.c.bf16 %v19, %v19
  %v26 = vpack.c.bf16 %v20, %v20
  %v27 = vld [vmem:[%s1] sm:$0xf]
  %v28 = vld [vmem:[%s1 + $0x4] sm:$0xf]
  %v29 = vld [vmem:[%s1 + $0x8] sm:$0xf]
  %v30 = vld [vmem:[%s1 + $0xc] sm:$0xf]
  %v31 = vld [vmem:[%s1 + $0x10] sm:$0xf]
  %v32 = vld [vmem:[%s1 + $0x14] sm:$0xf]
  %v33 = vld [vmem:[%s1 + $0x18] sm:$0xf]
  %v34 = vld [vmem:[%s1 + $0x1c] sm:$0xf]
  %v35 = vld [vmem:[%s1 + $0x20] sm:$0xf]
  %v36 = vld [vmem:[%s1 + $0x24] sm:$0xf]
  %v37 = vld [vmem:[%s1 + $0x28] sm:$0xf]
  %v38 = vld [vmem:[%s1 + $0x2c] sm:$0xf]
  %v39 = vld [vmem:[%s1 + $0x30] sm:$0xf]
  %v40 = vld [vmem:[%s1 + $0x34] sm:$0xf]
  %v41 = vld [vmem:[%s1 + $0x38] sm:$0xf]
  %v42 = vld [vmem:[%s1 + $0x3c] sm:$0xf]
  %v43 = vld [vmem:[%s1 + $0x40] sm:$0xf]
  %v44 = vld [vmem:[%s1 + $0x44] sm:$0xf]
  %v45 = vld [vmem:[%s1 + $0x48] sm:$0xf]
  %v46 = vld [vmem:[%s1 + $0x4c] sm:$0xf]
  %v47 = vld [vmem:[%s1 + $0x50] sm:$0xf]
  %v48 = vld [vmem:[%s1 + $0x54] sm:$0xf]
  %v49 = vld [vmem:[%s1 + $0x58] sm:$0xf]
  %v50 = vld [vmem:[%s1 + $0x5c] sm:$0xf]
  %v51 = vld [vmem:[%s1 + $0x60] sm:$0xf]
  %v52 = vld [vmem:[%s1 + $0x64] sm:$0xf]
  %v53 = vld [vmem:[%s1 + $0x68] sm:$0xf]
  %v54 = vld [vmem:[%s1 + $0x6c] sm:$0xf]
  %v55 = vld [vmem:[%s1 + $0x70] sm:$0xf]
  %v56 = vld [vmem:[%s1 + $0x74] sm:$0xf]
  %v57 = vld [vmem:[%s1 + $0x78] sm:$0xf]
  %v58 = vld [vmem:[%s1 + $0x7c] sm:$0xf]
  %v59 = vld [vmem:[%s1 + $0x80] sm:$0xf]
  %v60 = vld [vmem:[%s1 + $0x84] sm:$0xf]
  %v61 = vld [vmem:[%s1 + $0x88] sm:$0xf]
  %v62 = vld [vmem:[%s1 + $0x8c] sm:$0xf]
  %v63 = vld [vmem:[%s1 + $0x90] sm:$0xf]
  %v64 = vld [vmem:[%s1 + $0x94] sm:$0xf]
  %v65 = vld [vmem:[%s1 + $0x98] sm:$0xf]
  %v66 = vld [vmem:[%s1 + $0x9c] sm:$0xf]
  %v67 = vld [vmem:[%s1 + $0xa0] sm:$0xf]
  %v68 = vld [vmem:[%s1 + $0xa4] sm:$0xf]
  %v69 = vld [vmem:[%s1 + $0xa8] sm:$0xf]
  %v70 = vld [vmem:[%s1 + $0xac] sm:$0xf]
  %v71 = vld [vmem:[%s1 + $0xb0] sm:$0xf]
  %v72 = vld [vmem:[%s1 + $0xb4] sm:$0xf]
  %v73 = vld [vmem:[%s1 + $0xb8] sm:$0xf]
  %v74 = vld [vmem:[%s1 + $0xbc] sm:$0xf]
  %v75 = vld [vmem:[%s1 + $0xc0] sm:$0xf]
  %v76 = vld [vmem:[%s1 + $0xc4] sm:$0xf]
  %v77 = vld [vmem:[%s1 + $0xc8] sm:$0xf]
  %v78 = vld [vmem:[%s1 + $0xcc] sm:$0xf]
  %v79 = vld [vmem:[%s1 + $0xd0] sm:$0xf]
  %v80 = vld [vmem:[%s1 + $0xd4] sm:$0xf]
  %v81 = vld [vmem:[%s1 + $0xd8] sm:$0xf]
  %v82 = vld [vmem:[%s1 + $0xdc] sm:$0xf]
  %v83 = vld [vmem:[%s1 + $0xe0] sm:$0xf]
  %v84 = vld [vmem:[%s1 + $0xe4] sm:$0xf]
  %v85 = vld [vmem:[%s1 + $0xe8] sm:$0xf]
  %v86 = vld [vmem:[%s1 + $0xec] sm:$0xf]
  %v87 = vld [vmem:[%s1 + $0xf0] sm:$0xf]
  %v88 = vld [vmem:[%s1 + $0xf4] sm:$0xf]
  %v89 = vld [vmem:[%s1 + $0xf8] sm:$0xf]
  %v90 = vld [vmem:[%s1 + $0xfc] sm:$0xf]
  %v91 = vld [vmem:[%s1 + $0x100] sm:$0xf]
  %v92 = vld [vmem:[%s1 + $0x104] sm:$0xf]
  %v93 = vld [vmem:[%s1 + $0x108] sm:$0xf]
  %v94 = vld [vmem:[%s1 + $0x10c] sm:$0xf]
  %v95 = vld [vmem:[%s1 + $0x110] sm:$0xf]
  %v96 = vld [vmem:[%s1 + $0x114] sm:$0xf]
  %v97 = vld [vmem:[%s1 + $0x118] sm:$0xf]
  %v98 = vld [vmem:[%s1 + $0x11c] sm:$0xf]
  %v99 = vld [vmem:[%s1 + $0x120] sm:$0xf]
  %v100 = vld [vmem:[%s1 + $0x124] sm:$0xf]
  %v101 = vld [vmem:[%s1 + $0x128] sm:$0xf]
  %v102 = vld [vmem:[%s1 + $0x12c] sm:$0xf]
  %v103 = vld [vmem:[%s1 + $0x130] sm:$0xf]
  %v104 = vld [vmem:[%s1 + $0x134] sm:$0xf]
  %v105 = vld [vmem:[%s1 + $0x138] sm:$0xf]
  %v106 = vld [vmem:[%s1 + $0x13c] sm:$0xf]
  %v107 = vld [vmem:[%s1 + $0x140] sm:$0xf]
  %v108 = vld [vmem:[%s1 + $0x144] sm:$0xf]
  %v109 = vld [vmem:[%s1 + $0x148] sm:$0xf]
  %v110 = vld [vmem:[%s1 + $0x14c] sm:$0xf]
  %v111 = vld [vmem:[%s1 + $0x150] sm:$0xf]
  %v112 = vld [vmem:[%s1 + $0x154] sm:$0xf]
  %v113 = vld [vmem:[%s1 + $0x158] sm:$0xf]
  %v114 = vld [vmem:[%s1 + $0x15c] sm:$0xf]
  %v115 = vld [vmem:[%s1 + $0x160] sm:$0xf]
  %v116 = vld [vmem:[%s1 + $0x164] sm:$0xf]
  %v117 = vld [vmem:[%s1 + $0x168] sm:$0xf]
  %v118 = vld [vmem:[%s1 + $0x16c] sm:$0xf]
  %v119 = vld [vmem:[%s1 + $0x170] sm:$0xf]
  %v120 = vld [vmem:[%s1 + $0x174] sm:$0xf]
  %v121 = vld [vmem:[%s1 + $0x178] sm:$0xf]
  %v122 = vld [vmem:[%s1 + $0x17c] sm:$0xf]
  %v219 = vunpack.c.l.b16 %v27
  %v220 = vunpack.c.l.b16 %v28
  %v221 = vunpack.c.l.b16 %v29
  %v222 = vunpack.c.l.b16 %v30
  %v223 = vunpack.c.l.b16 %v31
  %v224 = vunpack.c.l.b16 %v32
  %v225 = vunpack.c.l.b16 %v33
  %v226 = vunpack.c.l.b16 %v34
  %v227 = vunpack.c.l.b16 %v35
  %v228 = vunpack.c.l.b16 %v36
  %v229 = vunpack.c.l.b16 %v37
  %v230 = vunpack.c.l.b16 %v38
  %v231 = vunpack.c.l.b16 %v39
  %v232 = vunpack.c.l.b16 %v40
  %v233 = vunpack.c.l.b16 %v41
  %v234 = vunpack.c.l.b16 %v42
  %v235 = vunpack.c.l.b16 %v43
  %v236 = vunpack.c.l.b16 %v44
  %v237 = vunpack.c.l.b16 %v45
  %v238 = vunpack.c.l.b16 %v46
  %v239 = vunpack.c.l.b16 %v47
  %v240 = vunpack.c.l.b16 %v48
  %v241 = vunpack.c.l.b16 %v49
  %v242 = vunpack.c.l.b16 %v50
  %v243 = vunpack.c.l.b16 %v51
  %v244 = vunpack.c.l.b16 %v52
  %v245 = vunpack.c.l.b16 %v53
  %v246 = vunpack.c.l.b16 %v54
  %v247 = vunpack.c.l.b16 %v55
  %v248 = vunpack.c.l.b16 %v56
  %v249 = vunpack.c.l.b16 %v57
  %v250 = vunpack.c.l.b16 %v58
  %v251 = vunpack.c.l.b16 %v59
  %v252 = vunpack.c.l.b16 %v60
  %v253 = vunpack.c.l.b16 %v61
  %v254 = vunpack.c.l.b16 %v62
  %v255 = vunpack.c.l.b16 %v63
  %v256 = vunpack.c.l.b16 %v64
  %v257 = vunpack.c.l.b16 %v65
  %v258 = vunpack.c.l.b16 %v66
  %v259 = vunpack.c.l.b16 %v67
  %v260 = vunpack.c.l.b16 %v68
  %v261 = vunpack.c.l.b16 %v69
  %v262 = vunpack.c.l.b16 %v70
  %v263 = vunpack.c.l.b16 %v71
  %v264 = vunpack.c.l.b16 %v72
  %v265 = vunpack.c.l.b16 %v73
  %v266 = vunpack.c.l.b16 %v74
  %v267 = vunpack.c.l.b16 %v75
  %v268 = vunpack.c.l.b16 %v76
  %v269 = vunpack.c.l.b16 %v77
  %v270 = vunpack.c.l.b16 %v78
  %v271 = vunpack.c.l.b16 %v79
  %v272 = vunpack.c.l.b16 %v80
  %v273 = vunpack.c.l.b16 %v81
  %v274 = vunpack.c.l.b16 %v82
  %v275 = vunpack.c.l.b16 %v83
  %v276 = vunpack.c.l.b16 %v84
  %v277 = vunpack.c.l.b16 %v85
  %v278 = vunpack.c.l.b16 %v86
  %v279 = vunpack.c.l.b16 %v87
  %v280 = vunpack.c.l.b16 %v88
  %v281 = vunpack.c.l.b16 %v89
  %v282 = vunpack.c.l.b16 %v90
  %v283 = vunpack.c.l.b16 %v91
  %v284 = vunpack.c.l.b16 %v92
  %v285 = vunpack.c.l.b16 %v93
  %v286 = vunpack.c.l.b16 %v94
  %v287 = vunpack.c.l.b16 %v95
  %v288 = vunpack.c.l.b16 %v96
  %v289 = vunpack.c.l.b16 %v97
  %v290 = vunpack.c.l.b16 %v98
  %v291 = vunpack.c.l.b16 %v99
  %v292 = vunpack.c.l.b16 %v100
  %v293 = vunpack.c.l.b16 %v101
  %v294 = vunpack.c.l.b16 %v102
  %v295 = vunpack.c.l.b16 %v103
  %v296 = vunpack.c.l.b16 %v104
  %v297 = vunpack.c.l.b16 %v105
  %v298 = vunpack.c.l.b16 %v106
  %v299 = vunpack.c.l.b16 %v107
  %v300 = vunpack.c.l.b16 %v108
  %v301 = vunpack.c.l.b16 %v109
  %v302 = vunpack.c.l.b16 %v110
  %v303 = vunpack.c.l.b16 %v111
  %v304 = vunpack.c.l.b16 %v112
  %v305 = vunpack.c.l.b16 %v113
  %v306 = vunpack.c.l.b16 %v114
  %v307 = vunpack.c.l.b16 %v115
  %v308 = vunpack.c.l.b16 %v116
  %v309 = vunpack.c.l.b16 %v117
  %v310 = vunpack.c.l.b16 %v118
  %v311 = vunpack.c.l.b16 %v119
  %v312 = vunpack.c.l.b16 %v120
  %v313 = vunpack.c.l.b16 %v121
  %v314 = vunpack.c.l.b16 %v122
  %v315 = vpack.c.b16 %v220, %v219
  %v316 = vpack.c.b16 %v222, %v221
  %v317 = vpack.c.b16 %v224, %v223
  %v318 = vpack.c.b16 %v226, %v225
  %v319 = vpack.c.b16 %v228, %v227
  %v320 = vpack.c.b16 %v230, %v229
  %v321 = vpack.c.b16 %v232, %v231
  %v322 = vpack.c.b16 %v234, %v233
  %v323 = vpack.c.b16 %v236, %v235
  %v324 = vpack.c.b16 %v238, %v237
  %v325 = vpack.c.b16 %v240, %v239
  %v326 = vpack.c.b16 %v242, %v241
  %v327 = vpack.c.b16 %v244, %v243
  %v328 = vpack.c.b16 %v246, %v245
  %v329 = vpack.c.b16 %v248, %v247
  %v330 = vpack.c.b16 %v250, %v249
  %v331 = vpack.c.b16 %v252, %v251
  %v332 = vpack.c.b16 %v254, %v253
  %v333 = vpack.c.b16 %v256, %v255
  %v334 = vpack.c.b16 %v258, %v257
  %v335 = vpack.c.b16 %v260, %v259
  %v336 = vpack.c.b16 %v262, %v261
  %v337 = vpack.c.b16 %v264, %v263
  %v338 = vpack.c.b16 %v266, %v265
  %v339 = vpack.c.b16 %v268, %v267
  %v340 = vpack.c.b16 %v270, %v269
  %v341 = vpack.c.b16 %v272, %v271
  %v342 = vpack.c.b16 %v274, %v273
  %v343 = vpack.c.b16 %v276, %v275
  %v344 = vpack.c.b16 %v278, %v277
  %v345 = vpack.c.b16 %v280, %v279
  %v346 = vpack.c.b16 %v282, %v281
  %v347 = vpack.c.b16 %v284, %v283
  %v348 = vpack.c.b16 %v286, %v285
  %v349 = vpack.c.b16 %v288, %v287
  %v350 = vpack.c.b16 %v290, %v289
  %v351 = vpack.c.b16 %v292, %v291
  %v352 = vpack.c.b16 %v294, %v293
  %v353 = vpack.c.b16 %v296, %v295
  %v354 = vpack.c.b16 %v298, %v297
  %v355 = vpack.c.b16 %v300, %v299
  %v356 = vpack.c.b16 %v302, %v301
  %v357 = vpack.c.b16 %v304, %v303
  %v358 = vpack.c.b16 %v306, %v305
  %v359 = vpack.c.b16 %v308, %v307
  %v360 = vpack.c.b16 %v310, %v309
  %v361 = vpack.c.b16 %v312, %v311
  %v362 = vpack.c.b16 %v314, %v313
  %411 = vmatprep.subr.bf16.mxu0 0
  %412 = vmatpush1.bf16.msra.mxu0 %v315
  %413 = vmatprep.subr.bf16.mxu0 0
  %414 = vmatpush1.bf16.msra.mxu0 %v316
  %415 = vmatprep.subr.bf16.mxu0 0
  %416 = vmatpush1.bf16.msra.mxu0 %v317
  %417 = vmatprep.subr.bf16.mxu0 0
  %418 = vmatpush1.bf16.msra.mxu0 %v318
  %419 = vmatprep.subr.bf16.mxu0 0
  %420 = vmatpush1.bf16.msra.mxu0 %v319
  %421 = vmatprep.subr.bf16.mxu0 0
  %422 = vmatpush1.bf16.msra.mxu0 %v320
  %423 = vmatprep.subr.bf16.mxu0 0
  %424 = vmatpush1.bf16.msra.mxu0 %v321
  %425 = vmatprep.subr.bf16.mxu0 0
  %426 = vmatpush1.bf16.msra.mxu0 %v322
  %427 = vmatprep.subr.bf16.mxu0 0
  %428 = vmatpush1.bf16.msra.mxu0 %v323
  %429 = vmatprep.subr.bf16.mxu0 0
  %430 = vmatpush1.bf16.msra.mxu0 %v324
  %431 = vmatprep.subr.bf16.mxu0 0
  %432 = vmatpush1.bf16.msra.mxu0 %v325
  %433 = vmatprep.subr.bf16.mxu0 0
  %434 = vmatpush1.bf16.msra.mxu0 %v326
  %435 = vmatprep.subr.bf16.mxu0 0
  %436 = vmatpush1.bf16.msra.mxu0 %v327
  %437 = vmatprep.subr.bf16.mxu0 0
  %438 = vmatpush1.bf16.msra.mxu0 %v328
  %439 = vmatprep.subr.bf16.mxu0 0
  %440 = vmatpush1.bf16.msra.mxu0 %v329
  %441 = vmatprep.subr.bf16.mxu0 0
  %442 = vmatpush1.bf16.msra.mxu0 %v330
  %443 = vmatprep.mubr.bf16.mxu0 %v22
  %444 = vmatmul.mubr.bf16.gmra.mrb[0].mxu0 %v21
  %v445 = vpop.f32.mrb[0].mxu0
  %v446 = vadd.f32 0.0, %v445
  %v447 = vpop.f32.mrb[0].mxu0
  %v448 = vpop.f32.mrb[0].mxu0
  %v449 = vpop.f32.mrb[0].mxu0
  %450 = vdwg.mxu0
  %451 = vmatprep.subr.bf16.mxu0 0
  %452 = vmatpush1.bf16.msra.mxu0 %v331
  %453 = vmatprep.subr.bf16.mxu0 0
  %454 = vmatpush1.bf16.msra.mxu0 %v332
  %455 = vmatprep.subr.bf16.mxu0 0
  %456 = vmatpush1.bf16.msra.mxu0 %v333
  %457 = vmatprep.subr.bf16.mxu0 0
  %458 = vmatpush1.bf16.msra.mxu0 %v334
  %459 = vmatprep.subr.bf16.mxu0 0
  %460 = vmatpush1.bf16.msra.mxu0 %v335
  %461 = vmatprep.subr.bf16.mxu0 0
  %462 = vmatpush1.bf16.msra.mxu0 %v336
  %463 = vmatprep.subr.bf16.mxu0 0
  %464 = vmatpush1.bf16.msra.mxu0 %v337
  %465 = vmatprep.subr.bf16.mxu0 0
  %466 = vmatpush1.bf16.msra.mxu0 %v338
  %467 = vmatprep.subr.bf16.mxu0 0
  %468 = vmatpush1.bf16.msra.mxu0 %v339
  %469 = vmatprep.subr.bf16.mxu0 0
  %470 = vmatpush1.bf16.msra.mxu0 %v340
  %471 = vmatprep.subr.bf16.mxu0 0
  %472 = vmatpush1.bf16.msra.mxu0 %v341
  %473 = vmatprep.subr.bf16.mxu0 0
  %474 = vmatpush1.bf16.msra.mxu0 %v342
  %475 = vmatprep.subr.bf16.mxu0 0
  %476 = vmatpush1.bf16.msra.mxu0 %v343
  %477 = vmatprep.subr.bf16.mxu0 0
  %478 = vmatpush1.bf16.msra.mxu0 %v344
  %479 = vmatprep.subr.bf16.mxu0 0
  %480 = vmatpush1.bf16.msra.mxu0 %v345
  %481 = vmatprep.subr.bf16.mxu0 0
  %482 = vmatpush1.bf16.msra.mxu0 %v346
  %483 = vmatprep.mubr.bf16.mxu0 %v24
  %484 = vmatmul.mubr.bf16.gmra.mrb[0].mxu0 %v23
  %v485 = vpop.f32.mrb[0].mxu0
  %v486 = vadd.f32 %v446, %v485
  %v487 = vpop.f32.mrb[0].mxu0
  %v488 = vpop.f32.mrb[0].mxu0
  %v489 = vpop.f32.mrb[0].mxu0
  %490 = vdwg.mxu0
  %491 = vmatprep.subr.bf16.mxu0 0
  %492 = vmatpush1.bf16.msra.mxu0 %v347
  %493 = vmatprep.subr.bf16.mxu0 0
  %494 = vmatpush1.bf16.msra.mxu0 %v348
  %495 = vmatprep.subr.bf16.mxu0 0
  %496 = vmatpush1.bf16.msra.mxu0 %v349
  %497 = vmatprep.subr.bf16.mxu0 0
  %498 = vmatpush1.bf16.msra.mxu0 %v350
  %499 = vmatprep.subr.bf16.mxu0 0
  %500 = vmatpush1.bf16.msra.mxu0 %v351
  %501 = vmatprep.subr.bf16.mxu0 0
  %502 = vmatpush1.bf16.msra.mxu0 %v352
  %503 = vmatprep.subr.bf16.mxu0 0
  %504 = vmatpush1.bf16.msra.mxu0 %v353
  %505 = vmatprep.subr.bf16.mxu0 0
  %506 = vmatpush1.bf16.msra.mxu0 %v354
  %507 = vmatprep.subr.bf16.mxu0 0
  %508 = vmatpush1.bf16.msra.mxu0 %v355
  %509 = vmatprep.subr.bf16.mxu0 0
  %510 = vmatpush1.bf16.msra.mxu0 %v356
  %511 = vmatprep.subr.bf16.mxu0 0
  %512 = vmatpush1.bf16.msra.mxu0 %v357
  %513 = vmatprep.subr.bf16.mxu0 0
  %514 = vmatpush1.bf16.msra.mxu0 %v358
  %515 = vmatprep.subr.bf16.mxu0 0
  %516 = vmatpush1.bf16.msra.mxu0 %v359
  %517 = vmatprep.subr.bf16.mxu0 0
  %518 = vmatpush1.bf16.msra.mxu0 %v360
  %519 = vmatprep.subr.bf16.mxu0 0
  %520 = vmatpush1.bf16.msra.mxu0 %v361
  %521 = vmatprep.subr.bf16.mxu0 0
  %522 = vmatpush1.bf16.msra.mxu0 %v362
  %523 = vmatprep.mubr.bf16.mxu0 %v26
  %524 = vmatmul.mubr.bf16.gmra.mrb[0].mxu0 %v25
  %v525 = vpop.f32.mrb[0].mxu0
  %v526 = vadd.f32 %v486, %v525
  %v527 = vpop.f32.mrb[0].mxu0
  %v528 = vpop.f32.mrb[0].mxu0
  %v529 = vpop.f32.mrb[0].mxu0
  %530 = vdwg.mxu0
  %v531 = vld [vmem:[%s2] sm:$0xff]
  %532 = vst [vmem:[%s3] sm:$0xff] %v531
  %v534 = vrot.slane %v526, 7
  %v536 = vadd.f32 %v531, %v534
  %537 = vst [vmem:[%s3] sm:$0x1e] %v536
  %s538 = scalar_lea.vmem %s3, 8
  %539 = vst [vmem:[%s538] sm:$0xff] %v531
  %v540 = vrot.slane %v526, 3
  %v542 = vadd.f32 %v531, %v540
  %543 = vst [vmem:[%s538] sm:$0x1e] %v542
  // Predicated region
  $region14: #{vit_extractor_forward.2} parent=0 // pred_check
    _
  $region15: #{vit_extractor_forward.2} parent=0 // pred_check_branch
    %545 = sbr.rel (0) target = $region17
  $region16: #{vit_extractor_forward.2} parent=0 // pred_region
    _
  $region17: #{vit_extractor_forward.2} parent=0 // pred_fallthru
    _
  // Predicated region
  $region18: #{vit_extractor_forward.2} parent=0 // pred_check
    _
  $region19: #{vit_extractor_forward.2} parent=0 // pred_check_branch
    %547 = sbr.rel (0) target = $region21
  $region20: #{vit_extractor_forward.2} parent=0 // pred_region
    _
  $region21: #{vit_extractor_forward.2} parent=0 // pred_fallthru
    _

// kernel: vit_extractor_forward.3
$region0: #{vit_extractor_forward.3}
  #allocation0 [shape = 'u32[]', space=smem, size = 0x4, offset = 0x4, fixed_abs, tag = 'smem constant byte address 0x4 - core index']
  #allocation1 [shape = 'u32[144,128]{1,0:T(1,128)}', space=vmem, size = 0x12000, scoped, tag = 'internal scratch']
  %s0 = inlined_call_operand.vmem [shape: f32[2,8,128], index: 0, kind: input, shape index: {}]
  %s1 = inlined_call_operand.vmem [shape: f32[2,1,128], index: 1, kind: input, shape index: {}]
  %s2 = inlined_call_operand.vmem [shape: f32[2,1,128], index: 2, kind: input, shape index: {}]
  %s3 = inlined_call_operand.vmem [shape: bf16[2,128,384], index: 3, kind: input, shape index: {}]
  %s4 = inlined_call_operand.vmem [shape: f32[2,1,384], index: 4, kind: input, shape index: {}]
  %s5 = inlined_call_operand.vmem [shape: bf16[2,128,128], index: 5, kind: input, shape index: {}]
  %s6 = inlined_call_operand.vmem [shape: f32[2,1,128], index: 6, kind: input, shape index: {}]
  %s7 = inlined_call_operand.vmem [shape: f32[2,1,128], index: 7, kind: input, shape index: {}]
  %s8 = inlined_call_operand.vmem [shape: f32[2,1,128], index: 8, kind: input, shape index: {}]
  %s9 = inlined_call_operand.vmem [shape: bf16[2,128,512], index: 9, kind: input, shape index: {}]
  %s10 = inlined_call_operand.vmem [shape: f32[2,1,512], index: 10, kind: input, shape index: {}]
  %s11 = inlined_call_operand.vmem [shape: bf16[2,512,128], index: 11, kind: input, shape index: {}]
  %s12 = inlined_call_operand.vmem [shape: f32[2,1,128], index: 12, kind: input, shape index: {}]
  %s13 = inlined_call_operand.vmem [shape: f32[2,8,128], index: 13, kind: output, shape index: {}]
  %s14 = sld [smem:[#allocation0]]
  $region89: #{vit_extractor_forward.3} parent=0
    _
  %s16 = ssub.s32 1, %s14
  %s17 = scalar_select 0, %s16, %s14
  loop: start=0, step=1, limit=4
  $region2: #{vit_extractor_forward.3} parent=0 // loop_pre_header
    _
  $region3: #{vit_extractor_forward.3} parent=0 // loop_header
    %s19 = sphi 0, %s23
    %p20 = scmp.ge.s32.totalorder %s19, 4
    %s27 = sphi 0, %s27
    %s29 = sphi 0, %s27
    %s30 = sphi 0, %s29
    %s44 = sphi 0, %s30
    %s50 = sphi 0, %s52
    %s53 = sphi 0, %s50
    %s54 = sphi 0, %s53
    %s70 = sphi 0, %s54
    %s76 = sphi 0, %s78
    %s79 = sphi 0, %s76
    %s80 = sphi 0, %s79
    %s96 = sphi 0, %s80
    %s102 = sphi 0, %s104
    %s105 = sphi 0, %s102
    %s106 = sphi 0, %s105
    %s122 = sphi 0, %s106
    %s128 = sphi 0, %s130
    %s131 = sphi 0, %s128
    %s132 = sphi 0, %s131
    %s148 = sphi 0, %s132
    %s154 = sphi 0, %s156
    %s157 = sphi 0, %s154
    %s158 = sphi 0, %s157
    %s174 = sphi 0, %s158
    %s180 = sphi 0, %s182
    %s183 = sphi 0, %s180
    %s184 = sphi 0, %s183
    %s200 = sphi 0, %s184
    %s206 = sphi 0, %s208
    %s209 = sphi 0, %s206
    %s210 = sphi 0, %s209
    %s226 = sphi 0, %s210
    %s232 = sphi 0, %s234
    %s235 = sphi 0, %s232
    %s236 = sphi 0, %s235
    %s252 = sphi 0, %s236
    %s258 = sphi 0, %s260
    %s261 = sphi 0, %s258
    %s262 = sphi 0, %s261
    %s278 = sphi 0, %s262
    %s284 = sphi 0, %s286
    %s287 = sphi 0, %s284
    %s288 = sphi 0, %s287
    %s304 = sphi 0, %s288
    %s310 = sphi 0, %s312
    %s313 = sphi 0, %s310
    %s314 = sphi 0, %s313
    %s330 = sphi 0, %s314
    %s336 = sphi 0, %s338
    %s339 = sphi 0, %s336
    %s340 = sphi 0, %s339
    %s356 = sphi 0, %s340
    %s360 = sphi 0, %s360
    %s362 = sphi 0, %s360
    %s363 = sphi 0, %s362
    %s377 = sphi 0, %s363
  $region4: #{vit_extractor_forward.3} parent=0 // loop_header_branch
    %22 = sbr.rel (%p20) target = $region8
  $region5: #{vit_extractor_forward.3} parent=0 // loop_body
    %s24 = ssub.s32 %s19, 1
    %s25 = ssub.s32 %s19, 2
    %s26 = sadd.s32 %s19, 1
    %s28 = sadd.s32 %s27, 1
    %p31 = scmp.eq.s32.totalorder %s19, 1
    %p32 = scmp.ne.s32.totalorder %s27, %s29
    %p33 = scmp.eq.s32.totalorder %s19, 0
    %p34 = por %p32, %p33
    %p35 = scmp.ne.s32.totalorder %s27, %s29
    %p36 = scmp.eq.s32.totalorder %s24, 1
    %p37 = por %p35, %p36
    %p38 = scmp.ne.s32.totalorder %s29, %s30
    %p39 = scmp.eq.s32.totalorder %s24, 0
    %p40 = por %p38, %p39
    %p41 = scmp.ne.s32.totalorder %s29, %s30
    %p42 = scmp.eq.s32.totalorder %s25, 1
    %p43 = por %p41, %p42
    %p45 = scmp.ne.s32.totalorder %s30, %s44
    %p46 = scmp.eq.s32.totalorder %s25, 0
    %p47 = por %p45, %p46
    %s48 = ssub.s32 %s19, %s26
    %p49 = scmp.eq.s32.totalorder %s48, 0
    %s51 = sadd.s32 %s50, 1
    %s52 = scalar_select %p49, %s50, %s51
    %p55 = pneg %p49
    %p56 = scmp.eq.s32.totalorder %s19, 1
    %p57 = por %p55, %p56
    %p58 = scmp.ne.s32.totalorder %s50, %s53
    %p59 = scmp.eq.s32.totalorder %s19, 0
    %p60 = por %p58, %p59
    %p61 = scmp.ne.s32.totalorder %s50, %s53
    %p62 = scmp.eq.s32.totalorder %s24, 1
    %p63 = por %p61, %p62
    %p64 = scmp.ne.s32.totalorder %s53, %s54
    %p65 = scmp.eq.s32.totalorder %s24, 0
    %p66 = por %p64, %p65
    %p67 = scmp.ne.s32.totalorder %s53, %s54
    %p68 = scmp.eq.s32.totalorder %s25, 1
    %p69 = por %p67, %p68
    %p71 = scmp.ne.s32.totalorder %s54, %s70
    %p72 = scmp.eq.s32.totalorder %s25, 0
    %p73 = por %p71, %p72
    %s74 = ssub.s32 %s19, %s26
    %p75 = scmp.eq.s32.totalorder %s74, 0
    %s77 = sadd.s32 %s76, 1
    %s78 = scalar_select %p75, %s76, %s77
    %p81 = pneg %p75
    %p82 = scmp.eq.s32.totalorder %s19, 1
    %p83 = por %p81, %p82
    %p84 = scmp.ne.s32.totalorder %s76, %s79
    %p85 = scmp.eq.s32.totalorder %s19, 0
    %p86 = por %p84, %p85
    %p87 = scmp.ne.s32.totalorder %s76, %s79
    %p88 = scmp.eq.s32.totalorder %s24, 1
    %p89 = por %p87, %p88
    %p90 = scmp.ne.s32.totalorder %s79, %s80
    %p91 = scmp.eq.s32.totalorder %s24, 0
    %p92 = por %p90, %p91
    %p93 = scmp.ne.s32.totalorder %s79, %s80
    %p94 = scmp.eq.s32.totalorder %s25, 1
    %p95 = por %p93, %p94
    %p97 = scmp.ne.s32.totalorder %s80, %s96
    %p98 = scmp.eq.s32.totalorder %s25, 0
    %p99 = por %p97, %p98
    %s100 = ssub.s32 %s19, %s26
    %p101 = scmp.eq.s32.totalorder %s100, 0
    %s103 = sadd.s32 %s102, 1
    %s104 = scalar_select %p101, %s102, %s103
    %p107 = pneg %p101
    %p108 = scmp.eq.s32.totalorder %s19, 1
    %p109 = por %p107, %p108
    %p110 = scmp.ne.s32.totalorder %s102, %s105
    %p111 = scmp.eq.s32.totalorder %s19, 0
    %p112 = por %p110, %p111
    %p113 = scmp.ne.s32.totalorder %s102, %s105
    %p114 = scmp.eq.s32.totalorder %s24, 1
    %p115 = por %p113, %p114
    %p116 = scmp.ne.s32.totalorder %s105, %s106
    %p117 = scmp.eq.s32.totalorder %s24, 0
    %p118 = por %p116, %p117
    %p119 = scmp.ne.s32.totalorder %s105, %s106
    %p120 = scmp.eq.s32.totalorder %s25, 1
    %p121 = por %p119, %p120
    %p123 = scmp.ne.s32.totalorder %s106, %s122
    %p124 = scmp.eq.s32.totalorder %s25, 0
    %p125 = por %p123, %p124
    %s126 = ssub.s32 %s19, %s26
    %p127 = scmp.eq.s32.totalorder %s126, 0
    %s129 = sadd.s32 %s128, 1
    %s130 = scalar_select %p127, %s128, %s129
    %p133 = pneg %p127
    %p134 = scmp.eq.s32.totalorder %s19, 1
    %p135 = por %p133, %p134
    %p136 = scmp.ne.s32.totalorder %s128, %s131
    %p137 = scmp.eq.s32.totalorder %s19, 0
    %p138 = por %p136, %p137
    %p139 = scmp.ne.s32.totalorder %s128, %s131
    %p140 = scmp.eq.s32.totalorder %s24, 1
    %p141 = por %p139, %p140
    %p142 = scmp.ne.s32.totalorder %s131, %s132
    %p143 = scmp.eq.s32.totalorder %s24, 0
    %p144 = por %p142, %p143
    %p145 = scmp.ne.s32.totalorder %s131, %s132
    %p146 = scmp.eq.s32.totalorder %s25, 1
    %p147 = por %p145, %p146
    %p149 = scmp.ne.s32.totalorder %s132, %s148
    %p150 = scmp.eq.s32.totalorder %s25, 0
    %p151 = por %p149, %p150
    %s152 = ssub.s32 %s19, %s26
    %p153 = scmp.eq.s32.totalorder %s152, 0
    %s155 = sadd.s32 %s154, 1
    %s156 = scalar_select %p153, %s154, %s155
    %p159 = pneg %p153
    %p160 = scmp.eq.s32.totalorder %s19, 1
    %p161 = por %p159, %p160
    %p162 = scmp.ne.s32.totalorder %s154, %s157
    %p163 = scmp.eq.s32.totalorder %s19, 0
    %p164 = por %p162, %p163
    %p165 = scmp.ne.s32.totalorder %s154, %s157
    %p166 = scmp.eq.s32.totalorder %s24, 1
    %p167 = por %p165, %p166
    %p168 = scmp.ne.s32.totalorder %s157, %s158
    %p169 = scmp.eq.s32.totalorder %s24, 0
    %p170 = por %p168, %p169
    %p171 = scmp.ne.s32.totalorder %s157, %s158
    %p172 = scmp.eq.s32.totalorder %s25, 1
    %p173 = por %p171, %p172
    %p175 = scmp.ne.s32.totalorder %s158, %s174
    %p176 = scmp.eq.s32.totalorder %s25, 0
    %p177 = por %p175, %p176
    %s178 = ssub.s32 %s19, %s26
    %p179 = scmp.eq.s32.totalorder %s178, 0
    %s181 = sadd.s32 %s180, 1
    %s182 = scalar_select %p179, %s180, %s181
    %p185 = pneg %p179
    %p186 = scmp.eq.s32.totalorder %s19, 1
    %p187 = por %p185, %p186
    %p188 = scmp.ne.s32.totalorder %s180, %s183
    %p189 = scmp.eq.s32.totalorder %s19, 0
    %p190 = por %p188, %p189
    %p191 = scmp.ne.s32.totalorder %s180, %s183
    %p192 = scmp.eq.s32.totalorder %s24, 1
    %p193 = por %p191, %p192
    %p194 = scmp.ne.s32.totalorder %s183, %s184
    %p195 = scmp.eq.s32.totalorder %s24, 0
    %p196 = por %p194, %p195
    %p197 = scmp.ne.s32.totalorder %s183, %s184
    %p198 = scmp.eq.s32.totalorder %s25, 1
    %p199 = por %p197, %p198
    %p201 = scmp.ne.s32.totalorder %s184, %s200
    %p202 = scmp.eq.s32.totalorder %s25, 0
    %p203 = por %p201, %p202
    %s204 = ssub.s32 %s19, %s26
    %p205 = scmp.eq.s32.totalorder %s204, 0
    %s207 = sadd.s32 %s206, 1
    %s208 = scalar_select %p205, %s206, %s207
    %p211 = pneg %p205
    %p212 = scmp.eq.s32.totalorder %s19, 1
    %p213 = por %p211, %p212
    %p214 = scmp.ne.s32.totalorder %s206, %s209
    %p215 = scmp.eq.s32.totalorder %s19, 0
    %p216 = por %p214, %p215
    %p217 = scmp.ne.s32.totalorder %s206, %s209
    %p218 = scmp.eq.s32.totalorder %s24, 1
    %p219 = por %p217, %p218
    %p220 = scmp.ne.s32.totalorder %s209, %s210
    %p221 = scmp.eq.s32.totalorder %s24, 0
    %p222 = por %p220, %p221
    %p223 = scmp.ne.s32.totalorder %s209, %s210
    %p224 = scmp.eq.s32.totalorder %s25, 1
    %p225 = por %p223, %p224
    %p227 = scmp.ne.s32.totalorder %s210, %s226
    %p228 = scmp.eq.s32.totalorder %s25, 0
    %p229 = por %p227, %p228
    %s230 = ssub.s32 %s19, %s26
    %p231 = scmp.eq.s32.totalorder %s230, 0
    %s233 = sadd.s32 %s232, 1
    %s234 = scalar_select %p231, %s232, %s233
    %p237 = pneg %p231
    %p238 = scmp.eq.s32.totalorder %s19, 1
    %p239 = por %p237, %p238
    %p240 = scmp.ne.s32.totalorder %s232, %s235
    %p241 = scmp.eq.s32.totalorder %s19, 0
    %p242 = por %p240, %p241
    %p243 = scmp.ne.s32.totalorder %s232, %s235
    %p244 = scmp.eq.s32.totalorder %s24, 1
    %p245 = por %p243, %p244
    %p246 = scmp.ne.s32.totalorder %s235, %s236
    %p247 = scmp.eq.s32.totalorder %s24, 0
    %p248 = por %p246, %p247
    %p249 = scmp.ne.s32.totalorder %s235, %s236
    %p250 = scmp.eq.s32.totalorder %s25, 1
    %p251 = por %p249, %p250
    %p253 = scmp.ne.s32.totalorder %s236, %s252
    %p254 = scmp.eq.s32.totalorder %s25, 0
    %p255 = por %p253, %p254
    %s256 = ssub.s32 %s19, %s26
    %p257 = scmp.eq.s32.totalorder %s256, 0
    %s259 = sadd.s32 %s258, 1
    %s260 = scalar_select %p257, %s258, %s259
    %p263 = pneg %p257
    %p264 = scmp.eq.s32.totalorder %s19, 1
    %p265 = por %p263, %p264
    %p266 = scmp.ne.s32.totalorder %s258, %s261
    %p267 = scmp.eq.s32.totalorder %s19, 0
    %p268 = por %p266, %p267
    %p269 = scmp.ne.s32.totalorder %s258, %s261
    %p270 = scmp.eq.s32.totalorder %s24, 1
    %p271 = por %p269, %p270
    %p272 = scmp.ne.s32.totalorder %s261, %s262
    %p273 = scmp.eq.s32.totalorder %s24, 0
    %p274 = por %p272, %p273
    %p275 = scmp.ne.s32.totalorder %s261, %s262
    %p276 = scmp.eq.s32.totalorder %s25, 1
    %p277 = por %p275, %p276
    %p279 = scmp.ne.s32.totalorder %s262, %s278
    %p280 = scmp.eq.s32.totalorder %s25, 0
    %p281 = por %p279, %p280
    %s282 = ssub.s32 %s19, %s26
    %p283 = scmp.eq.s32.totalorder %s282, 0
    %s285 = sadd.s32 %s284, 1
    %s286 = scalar_select %p283, %s284, %s285
    %p289 = pneg %p283
    %p290 = scmp.eq.s32.totalorder %s19, 1
    %p291 = por %p289, %p290
    %p292 = scmp.ne.s32.totalorder %s284, %s287
    %p293 = scmp.eq.s32.totalorder %s19, 0
    %p294 = por %p292, %p293
    %p295 = scmp.ne.s32.totalorder %s284, %s287
    %p296 = scmp.eq.s32.totalorder %s24, 1
    %p297 = por %p295, %p296
    %p298 = scmp.ne.s32.totalorder %s287, %s288
    %p299 = scmp.eq.s32.totalorder %s24, 0
    %p300 = por %p298, %p299
    %p301 = scmp.ne.s32.totalorder %s287, %s288
    %p302 = scmp.eq.s32.totalorder %s25, 1
    %p303 = por %p301, %p302
    %p305 = scmp.ne.s32.totalorder %s288, %s304
    %p306 = scmp.eq.s32.totalorder %s25, 0
    %p307 = por %p305, %p306
    %s308 = ssub.s32 %s19, %s26
    %p309 = scmp.eq.s32.totalorder %s308, 0
    %s311 = sadd.s32 %s310, 1
    %s312 = scalar_select %p309, %s310, %s311
    %p315 = pneg %p309
    %p316 = scmp.eq.s32.totalorder %s19, 1
    %p317 = por %p315, %p316
    %p318 = scmp.ne.s32.totalorder %s310, %s313
    %p319 = scmp.eq.s32.totalorder %s19, 0
    %p320 = por %p318, %p319
    %p321 = scmp.ne.s32.totalorder %s310, %s313
    %p322 = scmp.eq.s32.totalorder %s24, 1
    %p323 = por %p321, %p322
    %p324 = scmp.ne.s32.totalorder %s313, %s314
    %p325 = scmp.eq.s32.totalorder %s24, 0
    %p326 = por %p324, %p325
    %p327 = scmp.ne.s32.totalorder %s313, %s314
    %p328 = scmp.eq.s32.totalorder %s25, 1
    %p329 = por %p327, %p328
    %p331 = scmp.ne.s32.totalorder %s314, %s330
    %p332 = scmp.eq.s32.totalorder %s25, 0
    %p333 = por %p331, %p332
    %s334 = ssub.s32 %s19, %s26
    %p335 = scmp.eq.s32.totalorder %s334, 0
    %s337 = sadd.s32 %s336, 1
    %s338 = scalar_select %p335, %s336, %s337
    %p341 = pneg %p335
    %p342 = scmp.eq.s32.totalorder %s19, 1
    %p343 = por %p341, %p342
    %p344 = scmp.ne.s32.totalorder %s336, %s339
    %p345 = scmp.eq.s32.totalorder %s19, 0
    %p346 = por %p344, %p345
    %p347 = scmp.ne.s32.totalorder %s336, %s339
    %p348 = scmp.eq.s32.totalorder %s24, 1
    %p349 = por %p347, %p348
    %p350 = scmp.ne.s32.totalorder %s339, %s340
    %p351 = scmp.eq.s32.totalorder %s24, 0
    %p352 = por %p350, %p351
    %p353 = scmp.ne.s32.totalorder %s339, %s340
    %p354 = scmp.eq.s32.totalorder %s25, 1
    %p355 = por %p353, %p354
    %p357 = scmp.ne.s32.totalorder %s340, %s356
    %p358 = scmp.eq.s32.totalorder %s25, 0
    %p359 = por %p357, %p358
    %s361 = sadd.s32 %s360, 1
    %p364 = scmp.eq.s32.totalorder %s19, 1
    %p365 = scmp.ne.s32.totalorder %s360, %s362
    %p366 = scmp.eq.s32.totalorder %s19, 0
    %p367 = por %p365, %p366
    %p368 = scmp.ne.s32.totalorder %s360, %s362
    %p369 = scmp.eq.s32.totalorder %s24, 1
    %p370 = por %p368, %p369
    %p371 = scmp.ne.s32.totalorder %s362, %s363
    %p372 = scmp.eq.s32.totalorder %s24, 0
    %p373 = por %p371, %p372
    %p374 = scmp.ne.s32.totalorder %s362, %s363
    %p375 = scmp.eq.s32.totalorder %s25, 1
    %p376 = por %p374, %p375
    %p378 = scmp.ne.s32.totalorder %s363, %s377
    %p379 = scmp.eq.s32.totalorder %s25, 0
    %p380 = por %p378, %p379
    %p381 = scmp.le.s32.totalorder 1, %s19
    %p382 = scmp.lt.s32.totalorder %s19, 3
    %p383 = pnand %p381, %p382
    %p384 = pneg %p383
    // Predicated region
    $region9: #{vit_extractor_forward.3} parent=5 // pred_check
      _
    $region10: #{vit_extractor_forward.3} parent=5 // pred_check_branch
      %386 = sbr.rel (%p383) target = $region12
    $region11: #{vit_extractor_forward.3} parent=5 // pred_region
      %s387 = ssub.s32 %s19, 1
      // Predicated region
      $region13: #{vit_extractor_forward.3} parent=11 // pred_check
        %p388 = pneg %p40
      $region14: #{vit_extractor_forward.3} parent=11 // pred_check_branch
        %390 = sbr.rel (%p388) target = $region16
      $region15: #{vit_extractor_forward.3} parent=11 // pred_region
        _
      $region16: #{vit_extractor_forward.3} parent=11 // pred_fallthru
        _
    $region12: #{vit_extractor_forward.3} parent=5 // pred_fallthru
      _
    %p391 = scmp.lt.s32.totalorder %s19, 2
    // Predicated region
    $region17: #{vit_extractor_forward.3} parent=5 // pred_check
      %p392 = pneg %p391
    $region18: #{vit_extractor_forward.3} parent=5 // pred_check_branch
      %394 = sbr.rel (%p392) target = $region20
    $region19: #{vit_extractor_forward.3} parent=5 // pred_region
      // Predicated region
      $region21: #{vit_extractor_forward.3} parent=19 // pred_check
        %p395 = pneg %p60
      $region22: #{vit_extractor_forward.3} parent=19 // pred_check_branch
        %397 = sbr.rel (%p395) target = $region24
      $region23: #{vit_extractor_forward.3} parent=19 // pred_region
        %p398 = scmp.lt.s32.totalorder %s19, 1
        %s399 = scalar_select %p398, %s19, 1
        %s400 = scalar_lea.vmem %s1, %s399
      $region24: #{vit_extractor_forward.3} parent=19 // pred_fallthru
        _
      // Predicated region
      $region25: #{vit_extractor_forward.3} parent=19 // pred_check
        %p401 = pneg %p86
      $region26: #{vit_extractor_forward.3} parent=19 // pred_check_branch
        %403 = sbr.rel (%p401) target = $region28
      $region27: #{vit_extractor_forward.3} parent=19 // pred_region
        %p404 = scmp.lt.s32.totalorder %s19, 1
        %s405 = scalar_select %p404, %s19, 1
        %s406 = scalar_lea.vmem %s2, %s405
      $region28: #{vit_extractor_forward.3} parent=19 // pred_fallthru
        _
      // Predicated region
      $region29: #{vit_extractor_forward.3} parent=19 // pred_check
        %p407 = pneg %p112
      $region30: #{vit_extractor_forward.3} parent=19 // pred_check_branch
        %409 = sbr.rel (%p407) target = $region32
      $region31: #{vit_extractor_forward.3} parent=19 // pred_region
        %p410 = scmp.lt.s32.totalorder %s19, 1
        %s411 = scalar_select %p410, %s19, 1
        %s412 = smul.addr %s411, 48
        %s413 = smul.addr %s412, 4
        %s414 = scalar_lea.vmem %s3, %s413
      $region32: #{vit_extractor_forward.3} parent=19 // pred_fallthru
        _
      // Predicated region
      $region33: #{vit_extractor_forward.3} parent=19 // pred_check
        %p415 = pneg %p138
      $region34: #{vit_extractor_forward.3} parent=19 // pred_check_branch
        %417 = sbr.rel (%p415) target = $region36
      $region35: #{vit_extractor_forward.3} parent=19 // pred_region
        %p418 = scmp.lt.s32.totalorder %s19, 1
        %s419 = scalar_select %p418, %s19, 1
        %s420 = smul.addr %s419, 3
        %s421 = scalar_lea.vmem %s4, %s420
      $region36: #{vit_extractor_forward.3} parent=19 // pred_fallthru
        _
      // Predicated region
      $region37: #{vit_extractor_forward.3} parent=19 // pred_check
        %p422 = pneg %p164
      $region38: #{vit_extractor_forward.3} parent=19 // pred_check_branch
        %424 = sbr.rel (%p422) target = $region40
      $region39: #{vit_extractor_forward.3} parent=19 // pred_region
        %p425 = scmp.lt.s32.totalorder %s19, 1
        %s426 = scalar_select %p425, %s19, 1
        %s427 = smul.addr %s426, 16
        %s428 = smul.addr %s427, 4
        %s429 = scalar_lea.vmem %s5, %s428
      $region40: #{vit_extractor_forward.3} parent=19 // pred_fallthru
        _
      // Predicated region
      $region41: #{vit_extractor_forward.3} parent=19 // pred_check
        %p430 = pneg %p190
      $region42: #{vit_extractor_forward.3} parent=19 // pred_check_branch
        %432 = sbr.rel (%p430) target = $region44
      $region43: #{vit_extractor_forward.3} parent=19 // pred_region
        %p433 = scmp.lt.s32.totalorder %s19, 1
        %s434 = scalar_select %p433, %s19, 1
        %s435 = scalar_lea.vmem %s6, %s434
      $region44: #{vit_extractor_forward.3} parent=19 // pred_fallthru
        _
      // Predicated region
      $region45: #{vit_extractor_forward.3} parent=19 // pred_check
        %p436 = pneg %p216
      $region46: #{vit_extractor_forward.3} parent=19 // pred_check_branch
        %438 = sbr.rel (%p436) target = $region48
      $region47: #{vit_extractor_forward.3} parent=19 // pred_region
        %p439 = scmp.lt.s32.totalorder %s19, 1
        %s440 = scalar_select %p439, %s19, 1
        %s441 = scalar_lea.vmem %s7, %s440
      $region48: #{vit_extractor_forward.3} parent=19 // pred_fallthru
        _
      // Predicated region
      $region49: #{vit_extractor_forward.3} parent=19 // pred_check
        %p442 = pneg %p242
      $region50: #{vit_extractor_forward.3} parent=19 // pred_check_branch
        %444 = sbr.rel (%p442) target = $region52
      $region51: #{vit_extractor_forward.3} parent=19 // pred_region
        %p445 = scmp.lt.s32.totalorder %s19, 1
        %s446 = scalar_select %p445, %s19, 1
        %s447 = scalar_lea.vmem %s8, %s446
      $region52: #{vit_extractor_forward.3} parent=19 // pred_fallthru
        _
      // Predicated region
      $region53: #{vit_extractor_forward.3} parent=19 // pred_check
        %p448 = pneg %p268
      $region54: #{vit_extractor_forward.3} parent=19 // pred_check_branch
        %450 = sbr.rel (%p448) target = $region56
      $region55: #{vit_extractor_forward.3} parent=19 // pred_region
        %p451 = scmp.lt.s32.totalorder %s19, 1
        %s452 = scalar_select %p451, %s19, 1
        %s453 = smul.addr %s452, 64
        %s454 = smul.addr %s453, 4
        %s455 = scalar_lea.vmem %s9, %s454
      $region56: #{vit_extractor_forward.3} parent=19 // pred_fallthru
        _
      // Predicated region
      $region57: #{vit_extractor_forward.3} parent=19 // pred_check
        %p456 = pneg %p294
      $region58: #{vit_extractor_forward.3} parent=19 // pred_check_branch
        %458 = sbr.rel (%p456) target = $region60
      $region59: #{vit_extractor_forward.3} parent=19 // pred_region
        %p459 = scmp.lt.s32.totalorder %s19, 1
        %s460 = scalar_select %p459, %s19, 1
        %s461 = smul.addr %s460, 4
        %s462 = scalar_lea.vmem %s10, %s461
      $region60: #{vit_extractor_forward.3} parent=19 // pred_fallthru
        _
      // Predicated region
      $region61: #{vit_extractor_forward.3} parent=19 // pred_check
        %p463 = pneg %p320
      $region62: #{vit_extractor_forward.3} parent=19 // pred_check_branch
        %465 = sbr.rel (%p463) target = $region64
      $region63: #{vit_extractor_forward.3} parent=19 // pred_region
        %p466 = scmp.lt.s32.totalorder %s19, 1
        %s467 = scalar_select %p466, %s19, 1
        %s468 = smul.addr %s467, 64
        %s469 = smul.addr %s468, 4
        %s470 = scalar_lea.vmem %s11, %s469
      $region64: #{vit_extractor_forward.3} parent=19 // pred_fallthru
        _
      // Predicated region
      $region65: #{vit_extractor_forward.3} parent=19 // pred_check
        %p471 = pneg %p346
      $region66: #{vit_extractor_forward.3} parent=19 // pred_check_branch
        %473 = sbr.rel (%p471) target = $region68
      $region67: #{vit_extractor_forward.3} parent=19 // pred_region
        %p474 = scmp.lt.s32.totalorder %s19, 1
        %s475 = scalar_select %p474, %s19, 1
        %s476 = scalar_lea.vmem %s12, %s475
      $region68: #{vit_extractor_forward.3} parent=19 // pred_fallthru
        _
    $region20: #{vit_extractor_forward.3} parent=5 // pred_fallthru
      _
    %p477 = scmp.le.s32.totalorder 1, %s19
    %p478 = scmp.lt.s32.totalorder %s19, 3
    %p479 = pnand %p477, %p478
    %p480 = pneg %p479
    // Predicated region
    $region69: #{vit_extractor_forward.3} parent=5 // pred_check
      _
    $region70: #{vit_extractor_forward.3} parent=5 // pred_check_branch
      %482 = sbr.rel (%p479) target = $region72
    $region71: #{vit_extractor_forward.3} parent=5 // pred_region
      %s483 = ssub.s32 %s19, 1
      %p484 = pneg %p40
      %p485 = pneg %p37
      %p486 = scmp.lt.s32.totalorder %s24, 1
      %s487 = scalar_select %p486, %s24, 1
      %s488 = scalar_lea.vmem %s1, %s487
      %p489 = pneg %p66
      %p490 = pneg %p63
      %p491 = scmp.lt.s32.totalorder %s24, 1
      %s492 = scalar_select %p491, %s24, 1
      %s493 = scalar_lea.vmem %s2, %s492
      %p494 = pneg %p92
      %p495 = pneg %p89
      %p496 = scmp.lt.s32.totalorder %s24, 1
      %s497 = scalar_select %p496, %s24, 1
      %s498 = smul.addr %s497, 48
      %s499 = smul.addr %s498, 4
      %s500 = scalar_lea.vmem %s3, %s499
      %p501 = pneg %p118
      %p502 = pneg %p115
      %p503 = scmp.lt.s32.totalorder %s24, 1
      %s504 = scalar_select %p503, %s24, 1
      %s505 = smul.addr %s504, 3
      %s506 = scalar_lea.vmem %s4, %s505
      %p507 = pneg %p144
      %p508 = pneg %p141
      %p509 = scmp.lt.s32.totalorder %s24, 1
      %s510 = scalar_select %p509, %s24, 1
      %s511 = smul.addr %s510, 16
      %s512 = smul.addr %s511, 4
      %s513 = scalar_lea.vmem %s5, %s512
      %p514 = pneg %p170
      %p515 = pneg %p167
      %p516 = scmp.lt.s32.totalorder %s24, 1
      %s517 = scalar_select %p516, %s24, 1
      %s518 = scalar_lea.vmem %s6, %s517
      %p519 = pneg %p196
      %p520 = pneg %p193
      %p521 = scmp.lt.s32.totalorder %s24, 1
      %s522 = scalar_select %p521, %s24, 1
      %s523 = scalar_lea.vmem %s7, %s522
      %p524 = pneg %p222
      %p525 = pneg %p219
      %p526 = scmp.lt.s32.totalorder %s24, 1
      %s527 = scalar_select %p526, %s24, 1
      %s528 = scalar_lea.vmem %s8, %s527
      %p529 = pneg %p248
      %p530 = pneg %p245
      %p531 = scmp.lt.s32.totalorder %s24, 1
      %s532 = scalar_select %p531, %s24, 1
      %s533 = smul.addr %s532, 64
      %s534 = smul.addr %s533, 4
      %s535 = scalar_lea.vmem %s9, %s534
      %p536 = pneg %p274
      %p537 = pneg %p271
      %p538 = scmp.lt.s32.totalorder %s24, 1
      %s539 = scalar_select %p538, %s24, 1
      %s540 = smul.addr %s539, 4
      %s541 = scalar_lea.vmem %s10, %s540
      %p542 = pneg %p300
      %p543 = pneg %p297
      %p544 = scmp.lt.s32.totalorder %s24, 1
      %s545 = scalar_select %p544, %s24, 1
      %s546 = smul.addr %s545, 64
      %s547 = smul.addr %s546, 4
      %s548 = scalar_lea.vmem %s11, %s547
      %p549 = pneg %p326
      %p550 = pneg %p323
      %p551 = scmp.lt.s32.totalorder %s24, 1
      %s552 = scalar_select %p551, %s24, 1
      %s553 = scalar_lea.vmem %s12, %s552
      %p554 = pneg %p352
      %p555 = pneg %p349
      %p556 = pneg %p373
      %p557 = pneg %p370
      %p558 = scmp.lt.s32.totalorder %s24, 1
      %s559 = scalar_select %p558, %s24, 1
      %s560 = scalar_lea.vmem %s1, %s559
      %p561 = scmp.lt.s32.totalorder %s24, 1
      %s562 = scalar_select %p561, %s24, 1
      %s563 = scalar_lea.vmem %s2, %s562
      %p564 = scmp.lt.s32.totalorder %s24, 1
      %s565 = scalar_select %p564, %s24, 1
      %s566 = smul.addr %s565, 48
      %s567 = smul.addr %s566, 4
      %s568 = scalar_lea.vmem %s3, %s567
      %p569 = scmp.lt.s32.totalorder %s24, 1
      %s570 = scalar_select %p569, %s24, 1
      %s571 = smul.addr %s570, 3
      %s572 = scalar_lea.vmem %s4, %s571
      %p573 = scmp.lt.s32.totalorder %s24, 1
      %s574 = scalar_select %p573, %s24, 1
      %s575 = smul.addr %s574, 16
      %s576 = smul.addr %s575, 4
      %s577 = scalar_lea.vmem %s5, %s576
      %p578 = scmp.lt.s32.totalorder %s24, 1
      %s579 = scalar_select %p578, %s24, 1
      %s580 = scalar_lea.vmem %s6, %s579
      %p581 = scmp.lt.s32.totalorder %s24, 1
      %s582 = scalar_select %p581, %s24, 1
      %s583 = scalar_lea.vmem %s7, %s582
      %p584 = scmp.lt.s32.totalorder %s24, 1
      %s585 = scalar_select %p584, %s24, 1
      %s586 = scalar_lea.vmem %s8, %s585
      %p587 = scmp.lt.s32.totalorder %s24, 1
      %s588 = scalar_select %p587, %s24, 1
      %s589 = smul.addr %s588, 64
      %s590 = smul.addr %s589, 4
      %s591 = scalar_lea.vmem %s9, %s590
      %p592 = scmp.lt.s32.totalorder %s24, 1
      %s593 = scalar_select %p592, %s24, 1
      %s594 = smul.addr %s593, 4
      %s595 = scalar_lea.vmem %s10, %s594
      %p596 = scmp.lt.s32.totalorder %s24, 1
      %s597 = scalar_select %p596, %s24, 1
      %s598 = smul.addr %s597, 64
      %s599 = smul.addr %s598, 4
      %s600 = scalar_lea.vmem %s11, %s599
      %p601 = scmp.lt.s32.totalorder %s24, 1
      %s602 = scalar_select %p601, %s24, 1
      %s603 = scalar_lea.vmem %s12, %s602
      %p605 = scmp.eq.s32.totalorder %s24, 0
      // Predicated region
      $region73: #{vit_extractor_forward.3} parent=71 // pred_check
        %p606 = pneg %p605
      $region74: #{vit_extractor_forward.3} parent=71 // pred_check_branch
        %608 = sbr.rel (%p606) target = $region76
      $region75: #{vit_extractor_forward.3} parent=71 // pred_region
        %v609 = vld [vmem:[%s0] sm:$0xff]
        %v610 = vld [vmem:[%s0 + $0x8] sm:$0xff]
        %611 = vst [vmem:[%s13] sm:$0xff] %v609
        %612 = vst [vmem:[%s13 + $0x8] sm:$0xff] %v610
      $region76: #{vit_extractor_forward.3} parent=71 // pred_fallthru
        _
      %v613 = vld [vmem:[%s13] sm:$0xff]
      %v614 = vld [vmem:[%s13 + $0x8] sm:$0xff]
      %v615 = vlaneseq
      %v616 = vand.u32 %v615, 127
      %vm617 = vcmp.lt.s32.totalorder %v616, 5
      %v618 = vld [vmem:[%s560] sm:$0x1]
      %v619 = vld [vmem:[%s563] sm:$0x1]
      %620 = vadd.xlane.f32.xlu0 %v613
      %v621 = vpop.xlane.xlu0 %620
      %622 = vadd.xlane.f32.xlu0 %v614
      %v623 = vpop.xlane.xlu0 %622
      %v624 = vrcp.pop 128.0
      %v625 = vmul.f32 %v621, %v624
      %v626 = vmul.f32 %v623, %v624
      %v627 = vsub.f32 %v613, %v625
      %v628 = vsub.f32 %v614, %v626
      %v629 = vmul.f32 %v627, %v627
      %v630 = vmul.f32 %v628, %v628
      %631 = vadd.xlane.f32.xlu0 %v629
      %v632 = vpop.xlane.xlu0 %631
      %633 = vadd.xlane.f32.xlu0 %v630
      %v634 = vpop.xlane.xlu0 %633
      %v635 = vmul.f32 %v632, %v624
      %v636 = vmul.f32 %v634, %v624
      %v637 = vadd.f32 %v635, 1e-06
      %v638 = vadd.f32 %v636, 1e-06
      %v639 = vrsqrt.pop %v637
      %v640 = vrsqrt.pop %v638
      %v641 = vmul.f32 %v627, %v639
      %v642 = vmul.f32 %v628, %v640
      %v644 = vlaneseq
      %v645 = vshrl.u32 %v644, 7
      %v646 = vsub.s32 0, %v645
      %v647 = vrot.slane %v618, %v646
      %v649 = vmul.f32 %v641, %v647
      %v650 = vmul.f32 %v642, %v647
      %v652 = vlaneseq
      %v653 = vshrl.u32 %v652, 7
      %v654 = vsub.s32 0, %v653
      %v655 = vrot.slane %v619, %v654
      %v657 = vadd.f32 %v649, %v655
      %v658 = vadd.f32 %v650, %v655
      %v659 = vpack.c.bf16 %v658, %v657
      %v660 = vld [vmem:[%s568] sm:$0xff]
      %v661 = vld [vmem:[%s568 + $0x8] sm:$0xf]
      %v662 = vld [vmem:[%s568 + $0xc] sm:$0xff]
      %v663 = vld [vmem:[%s568 + $0x14] sm:$0xf]
      %v664 = vld [vmem:[%s568 + $0x18] sm:$0xff]
      %v665 = vld [vmem:[%s568 + $0x20] sm:$0xf]
      %v666 = vld [vmem:[%s568 + $0x24] sm:$0xff]
      %v667 = vld [vmem:[%s568 + $0x2c] sm:$0xf]
      %v668 = vld [vmem:[%s568 + $0x30] sm:$0xff]
      %v669 = vld [vmem:[%s568 + $0x38] sm:$0xf]
      %v670 = vld [vmem:[%s568 + $0x3c] sm:$0xff]
      %v671 = vld [vmem:[%s568 + $0x44] sm:$0xf]
      %v672 = vld [vmem:[%s568 + $0x48] sm:$0xff]
      %v673 = vld [vmem:[%s568 + $0x50] sm:$0xf]
      %v674 = vld [vmem:[%s568 + $0x54] sm:$0xff]
      %v675 = vld [vmem:[%s568 + $0x5c] sm:$0xf]
      %v676 = vld [vmem:[%s568 + $0x60] sm:$0xff]
      %v677 = vld [vmem:[%s568 + $0x68] sm:$0xf]
      %v678 = vld [vmem:[%s568 + $0x6c] sm:$0xff]
      %v679 = vld [vmem:[%s568 + $0x74] sm:$0xf]
      %v680 = vld [vmem:[%s568 + $0x78] sm:$0xff]
      %v681 = vld [vmem:[%s568 + $0x80] sm:$0xf]
      %v682 = vld [vmem:[%s568 + $0x84] sm:$0xff]
      %v683 = vld [vmem:[%s568 + $0x8c] sm:$0xf]
      %v684 = vld [vmem:[%s568 + $0x90] sm:$0xff]
      %v685 = vld [vmem:[%s568 + $0x98] sm:$0xf]
      %v686 = vld [vmem:[%s568 + $0x9c] sm:$0xff]
      %v687 = vld [vmem:[%s568 + $0xa4] sm:$0xf]
      %v688 = vld [vmem:[%s568 + $0xa8] sm:$0xff]
      %v689 = vld [vmem:[%s568 + $0xb0] sm:$0xf]
      %v690 = vld [vmem:[%s568 + $0xb4] sm:$0xff]
      %v691 = vld [vmem:[%s568 + $0xbc] sm:$0xf]
      %v692 = vld [vmem:[%s572] sm:$0x7]
      %v694 = vlaneseq
      %v695 = vshrl.u32 %v694, 7
      %v696 = vsub.s32 0, %v695
      %v697 = vrot.slane %v692, %v696
      %v698 = vlaneseq
      %v699 = vshrl.u32 %v698, 7
      %v700 = vsub.s32 1, %v699
      %v701 = vrot.slane %v692, %v700
      %v702 = vlaneseq
      %v703 = vshrl.u32 %v702, 7
      %v704 = vsub.s32 2, %v703
      %v705 = vrot.slane %v692, %v704
      %v741 = vunpack.c.l.b16 %v660
      %v742 = vunpack.c.h.b16 %v660
      %v743 = vunpack.c.l.b16 %v661
      %v744 = vunpack.c.l.b16 %v662
      %v745 = vunpack.c.h.b16 %v662
      %v746 = vunpack.c.l.b16 %v663
      %v747 = vunpack.c.l.b16 %v664
      %v748 = vunpack.c.h.b16 %v664
      %v749 = vunpack.c.l.b16 %v665
      %v750 = vunpack.c.l.b16 %v666
      %v751 = vunpack.c.h.b16 %v666
      %v752 = vunpack.c.l.b16 %v667
      %v753 = vunpack.c.l.b16 %v668
      %v754 = vunpack.c.h.b16 %v668
      %v755 = vunpack.c.l.b16 %v669
      %v756 = vunpack.c.l.b16 %v670
      %v757 = vunpack.c.h.b16 %v670
      %v758 = vunpack.c.l.b16 %v671
      %v759 = vunpack.c.l.b16 %v672
      %v760 = vunpack.c.h.b16 %v672
      %v761 = vunpack.c.l.b16 %v673
      %v762 = vunpack.c.l.b16 %v674
      %v763 = vunpack.c.h.b16 %v674
      %v764 = vunpack.c.l.b16 %v675
      %v765 = vunpack.c.l.b16 %v676
      %v766 = vunpack.c.h.b16 %v676
      %v767 = vunpack.c.l.b16 %v677
      %v768 = vunpack.c.l.b16 %v678
      %v769 = vunpack.c.h.b16 %v678
      %v770 = vunpack.c.l.b16 %v679
      %v771 = vunpack.c.l.b16 %v680
      %v772 = vunpack.c.h.b16 %v680
      %v773 = vunpack.c.l.b16 %v681
      %v774 = vunpack.c.l.b16 %v682
      %v775 = vunpack.c.h.b16 %v682
      %v776 = vunpack.c.l.b16 %v683
      %v777 = vunpack.c.l.b16 %v684
      %v778 = vunpack.c.h.b16 %v684
      %v779 = vunpack.c.l.b16 %v685
      %v780 = vunpack.c.l.b16 %v686
      %v781 = vunpack.c.h.b16 %v686
      %v782 = vunpack.c.l.b16 %v687
      %v783 = vunpack.c.l.b16 %v688
      %v784 = vunpack.c.h.b16 %v688
      %v785 = vunpack.c.l.b16 %v689
      %v786 = vunpack.c.l.b16 %v690
      %v787 = vunpack.c.h.b16 %v690
      %v788 = vunpack.c.l.b16 %v691
      %v789 = vpack.c.b16 %v744, %v741
      %v790 = vpack.c.b16 %v745, %v742
      %v791 = vpack.c.b16 %v746, %v743
      %v792 = vpack.c.b16 %v750, %v747
      %v793 = vpack.c.b16 %v751, %v748
      %v794 = vpack.c.b16 %v752, %v749
      %v795 = vpack.c.b16 %v756, %v753
      %v796 = vpack.c.b16 %v757, %v754
      %v797 = vpack.c.b16 %v758, %v755
      %v798 = vpack.c.b16 %v762, %v759
      %v799 = vpack.c.b16 %v763, %v760
      %v800 = vpack.c.b16 %v764, %v761
      %v801 = vpack.c.b16 %v768, %v765
      %v802 = vpack.c.b16 %v769, %v766
      %v803 = vpack.c.b16 %v770, %v767
      %v804 = vpack.c.b16 %v774, %v771
      %v805 = vpack.c.b16 %v775, %v772
      %v806 = vpack.c.b16 %v776, %v773
      %v807 = vpack.c.b16 %v780, %v777
      %v808 = vpack.c.b16 %v781, %v778
      %v809 = vpack.c.b16 %v782, %v779
      %v810 = vpack.c.b16 %v786, %v783
      %v811 = vpack.c.b16 %v787, %v784
      %v812 = vpack.c.b16 %v788, %v785
      %837 = vmatprep.subr.bf16.mxu0 %v790
      %838 = vmatpush1.bf16.msra.mxu0 %v789
      %839 = vmatprep.subr.bf16.mxu0 %v793
      %840 = vmatpush1.bf16.msra.mxu0 %v792
      %841 = vmatprep.subr.bf16.mxu0 %v796
      %842 = vmatpush1.bf16.msra.mxu0 %v795
      %843 = vmatprep.subr.bf16.mxu0 %v799
      %844 = vmatpush1.bf16.msra.mxu0 %v798
      %845 = vmatprep.subr.bf16.mxu0 %v802
      %846 = vmatpush1.bf16.msra.mxu0 %v801
      %847 = vmatprep.subr.bf16.mxu0 %v805
      %848 = vmatpush1.bf16.msra.mxu0 %v804
      %849 = vmatprep.subr.bf16.mxu0 %v808
      %850 = vmatpush1.bf16.msra.mxu0 %v807
      %851 = vmatprep.subr.bf16.mxu0 %v811
      %852 = vmatpush1.bf16.msra.mxu0 %v810
      %853 = vmatprep.subr.bf16.mxu0 0
      %854 = vmatpush1.bf16.msra.mxu0 0
      %855 = vmatprep.subr.bf16.mxu0 0
      %856 = vmatpush1.bf16.msra.mxu0 0
      %857 = vmatprep.subr.bf16.mxu0 0
      %858 = vmatpush1.bf16.msra.mxu0 0
      %859 = vmatprep.subr.bf16.mxu0 0
      %860 = vmatpush1.bf16.msra.mxu0 0
      %861 = vmatprep.subr.bf16.mxu0 0
      %862 = vmatpush1.bf16.msra.mxu0 0
      %863 = vmatprep.subr.bf16.mxu0 0
      %864 = vmatpush1.bf16.msra.mxu0 0
      %865 = vmatprep.subr.bf16.mxu0 0
      %866 = vmatpush1.bf16.msra.mxu0 0
      %867 = vmatprep.subr.bf16.mxu0 0
      %868 = vmatpush1.bf16.msra.mxu0 0
      %869 = vmatprep.mubr.bf16.mxu0 0
      %870 = vmatmul.mubr.bf16.gmra.mrb[0].mxu0 %v659
      %v871 = vpop.f32.mrb[0].mxu0
      %v872 = vadd.f32 %v697, %v871
      %v873 = vpop.f32.mrb[0].mxu0
      %v874 = vadd.f32 %v701, %v873
      %v875 = vpop.f32.mrb[0].mxu0
      %v876 = vadd.f32 %v697, %v875
      %v877 = vpop.f32.mrb[0].mxu0
      %v878 = vadd.f32 %v701, %v877
      %879 = vdwg.mxu0
      %880 = vmatprep.subr.bf16.mxu0 0
      %881 = vmatpush1.bf16.msra.mxu0 %v791
      %882 = vmatprep.subr.bf16.mxu0 0
      %883 = vmatpush1.bf16.msra.mxu0 %v794
      %884 = vmatprep.subr.bf16.mxu0 0
      %885 = vmatpush1.bf16.msra.mxu0 %v797
      %886 = vmatprep.subr.bf16.mxu0 0
      %887 = vmatpush1.bf16.msra.mxu0 %v800
      %888 = vmatprep.subr.bf16.mxu0 0
      %889 = vmatpush1.bf16.msra.mxu0 %v803
      %890 = vmatprep.subr.bf16.mxu0 0
      %891 = vmatpush1.bf16.msra.mxu0 %v806
      %892 = vmatprep.subr.bf16.mxu0 0
      %893 = vmatpush1.bf16.msra.mxu0 %v809
      %894 = vmatprep.subr.bf16.mxu0 0
      %895 = vmatpush1.bf16.msra.mxu0 %v812
      %896 = vmatprep.subr.bf16.mxu0 0
      %897 = vmatpush1.bf16.msra.mxu0 0
      %898 = vmatprep.subr.bf16.mxu0 0
      %899 = vmatpush1.bf16.msra.mxu0 0
      %900 = vmatprep.subr.bf16.mxu0 0
      %901 = vmatpush1.bf16.msra.mxu0 0
      %902 = vmatprep.subr.bf16.mxu0 0
      %903 = vmatpush1.bf16.msra.mxu0 0
      %904 = vmatprep.subr.bf16.mxu0 0
      %905 = vmatpush1.bf16.msra.mxu0 0
      %906 = vmatprep.subr.bf16.mxu0 0
      %907 = vmatpush1.bf16.msra.mxu0 0
      %908 = vmatprep.subr.bf16.mxu0 0
      %909 = vmatpush1.bf16.msra.mxu0 0
      %910 = vmatprep.subr.bf16.mxu0 0
      %911 = vmatpush1.bf16.msra.mxu0 0
      %912 = vmatprep.mubr.bf16.mxu0 0
      %913 = vmatmul.mubr.bf16.gmra.mrb[0].mxu0 %v659
      %v914 = vpop.f32.mrb[0].mxu0
      %v915 = vadd.f32 %v705, %v914
      %v916 = vpop.f32.mrb[0].mxu0
      %v917 = vpop.f32.mrb[0].mxu0
      %v918 = vadd.f32 %v705, %v917
      %v919 = vpop.f32.mrb[0].mxu0
      %920 = vdwg.mxu0
      %v921 = vpack.c.bf16 %v872, %v872
      %v922 = vpack.c.bf16 %v874, %v874
      %v923 = vpack.c.bf16 %v915, %v915
      %v924 = vpack.c.bf16 %v876, %v876
      %v925 = vpack.c.bf16 %v878, %v878
      %v926 = vpack.c.bf16 %v918, %v918
      %vm927 = vcmask 261120
      %v929 = vsel %vm927, %v921, 0
      %v932 = vsel %vm927, %v922, 0
      %934 = vmatprep.subr.bf16.mxu0 0
      %935 = vmatpush1.bf16.xpose.msra.mxu0 %v932
      %936 = vmatprep.subr.bf16.mxu0 0
      %937 = vmatpush1.bf16.xpose.msra.mxu0 0
      %938 = vmatprep.subr.bf16.mxu0 0
      %939 = vmatpush1.bf16.xpose.msra.mxu0 0
      %940 = vmatprep.subr.bf16.mxu0 0
      %941 = vmatpush1.bf16.xpose.msra.mxu0 0
      %942 = vmatprep.subr.bf16.mxu0 0
      %943 = vmatpush1.bf16.xpose.msra.mxu0 0
      %944 = vmatprep.subr.bf16.mxu0 0
      %945 = vmatpush1.bf16.xpose.msra.mxu0 0
      %946 = vmatprep.subr.bf16.mxu0 0
      %947 = vmatpush1.bf16.xpose.msra.mxu0 0
      %948 = vmatprep.subr.bf16.mxu0 0
      %949 = vmatpush1.bf16.xpose.msra.mxu0 0
      %950 = vmatprep.subr.bf16.mxu0 0
      %951 = vmatpush1.bf16.xpose.msra.mxu0 0
      %952 = vmatprep.subr.bf16.mxu0 0
      %953 = vmatpush1.bf16.xpose.msra.mxu0 0
      %954 = vmatprep.subr.bf16.mxu0 0
      %955 = vmatpush1.bf16.xpose.msra.mxu0 0
      %956 = vmatprep.subr.bf16.mxu0 0
      %957 = vmatpush1.bf16.xpose.msra.mxu0 0
      %958 = vmatprep.subr.bf16.mxu0 0
      %959 = vmatpush1.bf16.xpose.msra.mxu0 0
      %960 = vmatprep.subr.bf16.mxu0 0
      %961 = vmatpush1.bf16.xpose.msra.mxu0 0
      %962 = vmatprep.subr.bf16.mxu0 0
      %963 = vmatpush1.bf16.xpose.msra.mxu0 0
      %964 = vmatprep.subr.bf16.mxu0 0
      %965 = vmatpush1.bf16.xpose.msra.mxu0 0
      %966 = vmatprep.mubr.bf16.mxu0 0
      %967 = vmatmul.mubr.bf16.gmra.mrb[0].mxu0 %v929
      %v968 = vpop.f32.mrb[0].mxu0
      %v969 = vadd.f32 0.0, %v968
      %v970 = vpop.f32.mrb[0].mxu0
      %v971 = vpop.f32.mrb[0].mxu0
      %v972 = vpop.f32.mrb[0].mxu0
      %973 = vdwg.mxu0
      %v975 = vsel %vm927, %v924, 0
      %v978 = vsel %vm927, %v925, 0
      %980 = vmatprep.subr.bf16.mxu0 0
      %981 = vmatpush1.bf16.xpose.msra.mxu0 %v978
      %982 = vmatprep.subr.bf16.mxu0 0
      %983 = vmatpush1.bf16.xpose.msra.mxu0 0
      %984 = vmatprep.subr.bf16.mxu0 0
      %985 = vmatpush1.bf16.xpose.msra.mxu0 0
      %986 = vmatprep.subr.bf16.mxu0 0
      %987 = vmatpush1.bf16.xpose.msra.mxu0 0
      %988 = vmatprep.subr.bf16.mxu0 0
      %989 = vmatpush1.bf16.xpose.msra.mxu0 0
      %990 = vmatprep.subr.bf16.mxu0 0
      %991 = vmatpush1.bf16.xpose.msra.mxu0 0
      %992 = vmatprep.subr.bf16.mxu0 0
      %993 = vmatpush1.bf16.xpose.msra.mxu0 0
      %994 = vmatprep.subr.bf16.mxu0 0
      %995 = vmatpush1.bf16.xpose.msra.mxu0 0
      %996 = vmatprep.subr.bf16.mxu0 0
      %997 = vmatpush1.bf16.xpose.msra.mxu0 0
      %998 = vmatprep.subr.bf16.mxu0 0
      %999 = vmatpush1.bf16.xpose.msra.mxu0 0
      %1000 = vmatprep.subr.bf16.mxu0 0
      %1001 = vmatpush1.bf16.xpose.msra.mxu0 0
      %1002 = vmatprep.subr.bf16.mxu0 0
      %1003 = vmatpush1.bf16.xpose.msra.mxu0 0
      %1004 = vmatprep.subr.bf16.mxu0 0
      %1005 = vmatpush1.bf16.xpose.msra.mxu0 0
      %1006 = vmatprep.subr.bf16.mxu0 0
      %1007 = vmatpush1.bf16.xpose.msra.mxu0 0
      %1008 = vmatprep.subr.bf16.mxu0 0
      %1009 = vmatpush1.bf16.xpose.msra.mxu0 0
      %1010 = vmatprep.subr.bf16.mxu0 0
      %1011 = vmatpush1.bf16.xpose.msra.mxu0 0
      %1012 = vmatprep.mubr.bf16.mxu0 0
      %1013 = vmatmul.mubr.bf16.gmra.mrb[0].mxu0 %v975
      %v1014 = vpop.f32.mrb[0].mxu0
      %v1015 = vadd.f32 0.0, %v1014
      %v1016 = vpop.f32.mrb[0].mxu0
      %v1017 = vpop.f32.mrb[0].mxu0
      %v1018 = vpop.f32.mrb[0].mxu0
      %1019 = vdwg.mxu0
      %v1020 = vsel %vm617, 1, 0
      %vm1021 = vcmp.eq.s32.totalorder %v1020, 1
      %v1022 = vsel %vm1021, %v969, -1e+30
      %v1023 = vsel %vm1021, %v1015, -1e+30
      %vm1024 = vcmask 64512
      %v1025 = vsel %vm1024, %v1022, -inf
      %1026 = vmax.xlane.f32.xlu0 %v1025
      %v1027 = vpop.xlane.xlu0 %1026
      %v1028 = vsel %vm1024, %v1023, -inf
      %1029 = vmax.xlane.f32.xlu0 %v1028
      %v1030 = vpop.xlane.xlu0 %1029
      %v1031 = vsub.f32 %v1022, %v1027
      %v1032 = vsub.f32 %v1023, %v1030
      %v1033 = vmul.f32 %v1031, 1.442695
      %v1034 = vpow.pop %v1033
      %v1035 = vmul.f32 %v1032, 1.442695
      %v1036 = vpow.pop %v1035
      %v1037 = vsel %vm1024, %v1034, 0.0
      %1038 = vadd.xlane.f32.xlu0 %v1037
      %v1039 = vpop.xlane.xlu0 %1038
      %v1040 = vsel %vm1024, %v1036, 0.0
      %1041 = vadd.xlane.f32.xlu0 %v1040
      %v1042 = vpop.xlane.xlu0 %1041
      %v1043 = vrcp.pop %v1039
      %v1044 = vrcp.pop %v1042
      %v1045 = vmul.f32 %v1034, %v1043
      %v1046 = vmul.f32 %v1036, %v1044
      %v1047 = vpack.c.bf16 %v1045, %v1045
      %v1048 = vpack.c.bf16 %v1046, %v1046
      %v1050 = vsel %vm1024, %v1047, 0
      %vm1052 = vcmask 1043456
      %v1054 = vsel %vm1052, %v923, 0
      %1056 = vmatprep.subr.bf16.mxu0 0
      %1057 = vmatpush1.bf16.msra.mxu0 %v1054
      %1058 = vmatprep.subr.bf16.mxu0 0
      %1059 = vmatpush1.bf16.msra.mxu0 0
      %1060 = vmatprep.subr.bf16.mxu0 0
      %1061 = vmatpush1.bf16.msra.mxu0 0
      %1062 = vmatprep.subr.bf16.mxu0 0
      %1063 = vmatpush1.bf16.msra.mxu0 0
      %1064 = vmatprep.subr.bf16.mxu0 0
      %1065 = vmatpush1.bf16.msra.mxu0 0
      %1066 = vmatprep.subr.bf16.mxu0 0
      %1067 = vmatpush1.bf16.msra.mxu0 0
      %1068 = vmatprep.subr.bf16.mxu0 0
      %1069 = vmatpush1.bf16.msra.mxu0 0
      %1070 = vmatprep.subr.bf16.mxu0 0
      %1071 = vmatpush1.bf16.msra.mxu0 0
      %1072 = vmatprep.subr.bf16.mxu0 0
      %1073 = vmatpush1.bf16.msra.mxu0 0
      %1074 = vmatprep.subr.bf16.mxu0 0
      %1075 = vmatpush1.bf16.msra.mxu0 0
      %1076 = vmatprep.subr.bf16.mxu0 0
      %1077 = vmatpush1.bf16.msra.mxu0 0
      %1078 = vmatprep.subr.bf16.mxu0 0
      %1079 = vmatpush1.bf16.msra.mxu0 0
      %1080 = vmatprep.subr.bf16.mxu0 0
      %1081 = vmatpush1.bf16.msra.mxu0 0
      %1082 = vmatprep.subr.bf16.mxu0 0
      %1083 = vmatpush1.bf16.msra.mxu0 0
      %1084 = vmatprep.subr.bf16.mxu0 0
      %1085 = vmatpush1.bf16.msra.mxu0 0
      %1086 = vmatprep.subr.bf16.mxu0 0
      %1087 = vmatpush1.bf16.msra.mxu0 0
      %1088 = vmatprep.mubr.bf16.mxu0 0
      %1089 = vmatmul.mubr.bf16.gmra.mrb[0].mxu0 %v1050
      %v1090 = vpop.f32.mrb[0].mxu0
      %v1091 = vadd.f32 0.0, %v1090
      %v1092 = vpop.f32.mrb[0].mxu0
      %v1093 = vpop.f32.mrb[0].mxu0
      %v1094 = vpop.f32.mrb[0].mxu0
      %1095 = vdwg.mxu0
      %v1097 = vsel %vm1024, %v1048, 0
      %v1100 = vsel %vm1052, %v926, 0
      %1102 = vmatprep.subr.bf16.mxu0 0
      %1103 = vmatpush1.bf16.msra.mxu0 %v1100
      %1104 = vmatprep.subr.bf16.mxu0 0
      %1105 = vmatpush1.bf16.msra.mxu0 0
      %1106 = vmatprep.subr.bf16.mxu0 0
      %1107 = vmatpush1.bf16.msra.mxu0 0
      %1108 = vmatprep.subr.bf16.mxu0 0
      %1109 = vmatpush1.bf16.msra.mxu0 0
      %1110 = vmatprep.subr.bf16.mxu0 0
      %1111 = vmatpush1.bf16.msra.mxu0 0
      %1112 = vmatprep.subr.bf16.mxu0 0
      %1113 = vmatpush1.bf16.msra.mxu0 0
      %1114 = vmatprep.subr.bf16.mxu0 0
      %1115 = vmatpush1.bf16.msra.mxu0 0
      %1116 = vmatprep.subr.bf16.mxu0 0
      %1117 = vmatpush1.bf16.msra.mxu0 0
      %1118 = vmatprep.subr.bf16.mxu0 0
      %1119 = vmatpush1.bf16.msra.mxu0 0
      %1120 = vmatprep.subr.bf16.mxu0 0
      %1121 = vmatpush1.bf16.msra.mxu0 0
      %1122 = vmatprep.subr.bf16.mxu0 0
      %1123 = vmatpush1.bf16.msra.mxu0 0
      %1124 = vmatprep.subr.bf16.mxu0 0
      %1125 = vmatpush1.bf16.msra.mxu0 0
      %1126 = vmatprep.subr.bf16.mxu0 0
      %1127 = vmatpush1.bf16.msra.mxu0 0
      %1128 = vmatprep.subr.bf16.mxu0 0
      %1129 = vmatpush1.bf16.msra.mxu0 0
      %1130 = vmatprep.subr.bf16.mxu0 0
      %1131 = vmatpush1.bf16.msra.mxu0 0
      %1132 = vmatprep.subr.bf16.mxu0 0
      %1133 = vmatpush1.bf16.msra.mxu0 0
      %1134 = vmatprep.mubr.bf16.mxu0 0
      %1135 = vmatmul.mubr.bf16.gmra.mrb[0].mxu0 %v1097
      %v1136 = vpop.f32.mrb[0].mxu0
      %v1137 = vadd.f32 0.0, %v1136
      %v1138 = vpop.f32.mrb[0].mxu0
      %v1139 = vpop.f32.mrb[0].mxu0
      %v1140 = vpop.f32.mrb[0].mxu0
      %1141 = vdwg.mxu0
      %1143 = vrot.lane.b32.xlu0 %v921, 96
      %v1144 = vpop.permute.xlu0 %1143
      %1146 = vrot.lane.b32.xlu0 %v922, 96
      %v1147 = vpop.permute.xlu0 %1146
      %v1149 = vsel %vm927, %v1144, 0
      %v1152 = vsel %vm927, %v1147, 0
      %1154 = vmatprep.subr.bf16.mxu0 0
      %1155 = vmatpush1.bf16.xpose.msra.mxu0 %v1152
      %1156 = vmatprep.subr.bf16.mxu0 0
      %1157 = vmatpush1.bf16.xpose.msra.mxu0 0
      %1158 = vmatprep.subr.bf16.mxu0 0
      %1159 = vmatpush1.bf16.xpose.msra.mxu0 0
      %1160 = vmatprep.subr.bf16.mxu0 0
      %1161 = vmatpush1.bf16.xpose.msra.mxu0 0
      %1162 = vmatprep.subr.bf16.mxu0 0
      %1163 = vmatpush1.bf16.xpose.msra.mxu0 0
      %1164 = vmatprep.subr.bf16.mxu0 0
      %1165 = vmatpush1.bf16.xpose.msra.mxu0 0
      %1166 = vmatprep.subr.bf16.mxu0 0
      %1167 = vmatpush1.bf16.xpose.msra.mxu0 0
      %1168 = vmatprep.subr.bf16.mxu0 0
      %1169 = vmatpush1.bf16.xpose.msra.mxu0 0
      %1170 = vmatprep.subr.bf16.mxu0 0
      %1171 = vmatpush1.bf16.xpose.msra.mxu0 0
      %1172 = vmatprep.subr.bf16.mxu0 0
      %1173 = vmatpush1.bf16.xpose.msra.mxu0 0
      %1174 = vmatprep.subr.bf16.mxu0 0
      %1175 = vmatpush1.bf16.xpose.msra.mxu0 0
      %1176 = vmatprep.subr.bf16.mxu0 0
      %1177 = vmatpush1.bf16.xpose.msra.mxu0 0
      %1178 = vmatprep.subr.bf16.mxu0 0
      %1179 = vmatpush1.bf16.xpose.msra.mxu0 0
      %1180 = vmatprep.subr.bf16.mxu0 0
      %1181 = vmatpush1.bf16.xpose.msra.mxu0 0
      %1182 = vmatprep.subr.bf16.mxu0 0
      %1183 = vmatpush1.bf16.xpose.msra.mxu0 0
      %1184 = vmatprep.subr.bf16.mxu0 0
      %1185 = vmatpush1.bf16.xpose.msra.mxu0 0
      %1186 = vmatprep.mubr.bf16.mxu0 0
      %1187 = vmatmul.mubr.bf16.gmra.mrb[0].mxu0 %v1149
      %v1188 = vpop.f32.mrb[0].mxu0
      %v1189 = vadd.f32 0.0, %v1188
      %v1190 = vpop.f32.mrb[0].mxu0
      %v1191 = vpop.f32.mrb[0].mxu0
      %v1192 = vpop.f32.mrb[0].mxu0
      %1193 = vdwg.mxu0
      %1195 = vrot.lane.b32.xlu0 %v924, 96
      %v1196 = vpop.permute.xlu0 %1195
      %1198 = vrot.lane.b32.xlu0 %v925, 96
      %v1199 = vpop.permute.xlu0 %1198
      %v1201 = vsel %vm927, %v1196, 0
      %v1204 = vsel %vm927, %v1199, 0
      %1206 = vmatprep.subr.bf16.mxu0 0
      %1207 = vmatpush1.bf16.xpose.msra.mxu0 %v1204
      %1208 = vmatprep.subr.bf16.mxu0 0
      %1209 = vmatpush1.bf16.xpose.msra.mxu0 0
      %1210 = vmatprep.subr.bf16.mxu0 0
      %1211 = vmatpush1.bf16.xpose.msra.mxu0 0
      %1212 = vmatprep.subr.bf16.mxu0 0
      %1213 = vmatpush1.bf16.xpose.msra.mxu0 0
      %1214 = vmatprep.subr.bf16.mxu0 0
      %1215 = vmatpush1.bf16.xpose.msra.mxu0 0
      %1216 = vmatprep.subr.bf16.mxu0 0
      %1217 = vmatpush1.bf16.xpose.msra.mxu0 0
      %1218 = vmatprep.subr.bf16.mxu0 0
      %1219 = vmatpush1.bf16.xpose.msra.mxu0 0
      %1220 = vmatprep.subr.bf16.mxu0 0
      %1221 = vmatpush1.bf16.xpose.msra.mxu0 0
      %1222 = vmatprep.subr.bf16.mxu0 0
      %1223 = vmatpush1.bf16.xpose.msra.mxu0 0
      %1224 = vmatprep.subr.bf16.mxu0 0
      %1225 = vmatpush1.bf16.xpose.msra.mxu0 0
      %1226 = vmatprep.subr.bf16.mxu0 0
      %1227 = vmatpush1.bf16.xpose.msra.mxu0 0
      %1228 = vmatprep.subr.bf16.mxu0 0
      %1229 = vmatpush1.bf16.xpose.msra.mxu0 0
      %1230 = vmatprep.subr.bf16.mxu0 0
      %1231 = vmatpush1.bf16.xpose.msra.mxu0 0
      %1232 = vmatprep.subr.bf16.mxu0 0
      %1233 = vmatpush1.bf16.xpose.msra.mxu0 0
      %1234 = vmatprep.subr.bf16.mxu0 0
      %1235 = vmatpush1.bf16.xpose.msra.mxu0 0
      %1236 = vmatprep.subr.bf16.mxu0 0
      %1237 = vmatpush1.bf16.xpose.msra.mxu0 0
      %1238 = vmatprep.mubr.bf16.mxu0 0
      %1239 = vmatmul.mubr.bf16.gmra.mrb[0].mxu0 %v1201
      %v1240 = vpop.f32.mrb[0].mxu0
      %v1241 = vadd.f32 0.0, %v1240
      %v1242 = vpop.f32.mrb[0].mxu0
      %v1243 = vpop.f32.mrb[0].mxu0
      %v1244 = vpop.f32.mrb[0].mxu0
      %1245 = vdwg.mxu0
      %v1246 = vsel %vm1021, %v1189, -1e+30
      %v1247 = vsel %vm1021, %v1241, -1e+30
      %v1248 = vsel %vm1024, %v1246, -inf
      %1249 = vmax.xlane.f32.xlu0 %v1248
      %v1250 = vpop.xlane.xlu0 %1249
      %v1251 = vsel %vm1024, %v1247, -inf
      %1252 = vmax.xlane.f32.xlu0 %v1251
      %v1253 = vpop.xlane.xlu0 %1252
      %v1254 = vsub.f32 %v1246, %v1250
      %v1255 = vsub.f32 %v1247, %v1253
      %v1256 = vmul.f32 %v1254, 1.442695
      %v1257 = vpow.pop %v1256
      %v1258 = vmul.f32 %v1255, 1.442695
      %v1259 = vpow.pop %v1258
      %v1260 = vsel %vm1024, %v1257, 0.0
      %1261 = vadd.xlane.f32.xlu0 %v1260
      %v1262 = vpop.xlane.xlu0 %1261
      %v1263 = vsel %vm1024, %v1259, 0.0
      %1264 = vadd.xlane.f32.xlu0 %v1263
      %v1265 = vpop.xlane.xlu0 %1264
      %v1266 = vrcp.pop %v1262
      %v1267 = vrcp.pop %v1265
      %v1268 = vmul.f32 %v1257, %v1266
      %v1269 = vmul.f32 %v1259, %v1267
      %v1270 = vpack.c.bf16 %v1268, %v1268
      %v1271 = vpack.c.bf16 %v1269, %v1269
      %1273 = vrot.lane.b32.xlu0 %v923, 96
      %v1274 = vpop.permute.xlu0 %1273
      %v1276 = vsel %vm1024, %v1270, 0
      %v1279 = vsel %vm1052, %v1274, 0
      %1281 = vmatprep.subr.bf16.mxu0 0
      %1282 = vmatpush1.bf16.msra.mxu0 %v1279
      %1283 = vmatprep.subr.bf16.mxu0 0
      %1284 = vmatpush1.bf16.msra.mxu0 0
      %1285 = vmatprep.subr.bf16.mxu0 0
      %1286 = vmatpush1.bf16.msra.mxu0 0
      %1287 = vmatprep.subr.bf16.mxu0 0
      %1288 = vmatpush1.bf16.msra.mxu0 0
      %1289 = vmatprep.subr.bf16.mxu0 0
      %1290 = vmatpush1.bf16.msra.mxu0 0
      %1291 = vmatprep.subr.bf16.mxu0 0
      %1292 = vmatpush1.bf16.msra.mxu0 0
      %1293 = vmatprep.subr.bf16.mxu0 0
      %1294 = vmatpush1.bf16.msra.mxu0 0
      %1295 = vmatprep.subr.bf16.mxu0 0
      %1296 = vmatpush1.bf16.msra.mxu0 0
      %1297 = vmatprep.subr.bf16.mxu0 0
      %1298 = vmatpush1.bf16.msra.mxu0 0
      %1299 = vmatprep.subr.bf16.mxu0 0
      %1300 = vmatpush1.bf16.msra.mxu0 0
      %1301 = vmatprep.subr.bf16.mxu0 0
      %1302 = vmatpush1.bf16.msra.mxu0 0
      %1303 = vmatprep.subr.bf16.mxu0 0
      %1304 = vmatpush1.bf16.msra.mxu0 0
      %1305 = vmatprep.subr.bf16.mxu0 0
      %1306 = vmatpush1.bf16.msra.mxu0 0
      %1307 = vmatprep.subr.bf16.mxu0 0
      %1308 = vmatpush1.bf16.msra.mxu0 0
      %1309 = vmatprep.subr.bf16.mxu0 0
      %1310 = vmatpush1.bf16.msra.mxu0 0
      %1311 = vmatprep.subr.bf16.mxu0 0
      %1312 = vmatpush1.bf16.msra.mxu0 0
      %1313 = vmatprep.mubr.bf16.mxu0 0
      %1314 = vmatmul.mubr.bf16.gmra.mrb[0].mxu0 %v1276
      %v1315 = vpop.f32.mrb[0].mxu0
      %v1316 = vadd.f32 0.0, %v1315
      %v1317 = vpop.f32.mrb[0].mxu0
      %v1318 = vpop.f32.mrb[0].mxu0
      %v1319 = vpop.f32.mrb[0].mxu0
      %1320 = vdwg.mxu0
      %1322 = vrot.lane.b32.xlu0 %v926, 96
      %v1323 = vpop.permute.xlu0 %1322
      %v1325 = vsel %vm1024, %v1271, 0
      %v1328 = vsel %vm1052, %v1323, 0
      %1330 = vmatprep.subr.bf16.mxu0 0
      %1331 = vmatpush1.bf16.msra.mxu0 %v1328
      %1332 = vmatprep.subr.bf16.mxu0 0
      %1333 = vmatpush1.bf16.msra.mxu0 0
      %1334 = vmatprep.subr.bf16.mxu0 0
      %1335 = vmatpush1.bf16.msra.mxu0 0
      %1336 = vmatprep.subr.bf16.mxu0 0
      %1337 = vmatpush1.bf16.msra.mxu0 0
      %1338 = vmatprep.subr.bf16.mxu0 0
      %1339 = vmatpush1.bf16.msra.mxu0 0
      %1340 = vmatprep.subr.bf16.mxu0 0
      %1341 = vmatpush1.bf16.msra.mxu0 0
      %1342 = vmatprep.subr.bf16.mxu0 0
      %1343 = vmatpush1.bf16.msra.mxu0 0
      %1344 = vmatprep.subr.bf16.mxu0 0
      %1345 = vmatpush1.bf16.msra.mxu0 0
      %1346 = vmatprep.subr.bf16.mxu0 0
      %1347 = vmatpush1.bf16.msra.mxu0 0
      %1348 = vmatprep.subr.bf16.mxu0 0
      %1349 = vmatpush1.bf16.msra.mxu0 0
      %1350 = vmatprep.subr.bf16.mxu0 0
      %1351 = vmatpush1.bf16.msra.mxu0 0
      %1352 = vmatprep.subr.bf16.mxu0 0
      %1353 = vmatpush1.bf16.msra.mxu0 0
      %1354 = vmatprep.subr.bf16.mxu0 0
      %1355 = vmatpush1.bf16.msra.mxu0 0
      %1356 = vmatprep.subr.bf16.mxu0 0
      %1357 = vmatpush1.bf16.msra.mxu0 0
      %1358 = vmatprep.subr.bf16.mxu0 0
      %1359 = vmatpush1.bf16.msra.mxu0 0
      %1360 = vmatprep.subr.bf16.mxu0 0
      %1361 = vmatpush1.bf16.msra.mxu0 0
      %1362 = vmatprep.mubr.bf16.mxu0 0
      %1363 = vmatmul.mubr.bf16.gmra.mrb[0].mxu0 %v1325
      %v1364 = vpop.f32.mrb[0].mxu0
      %v1365 = vadd.f32 0.0, %v1364
      %v1366 = vpop.f32.mrb[0].mxu0
      %v1367 = vpop.f32.mrb[0].mxu0
      %v1368 = vpop.f32.mrb[0].mxu0
      %1369 = vdwg.mxu0
      %1370 = vrot.lane.b32.xlu0 %v921, 64
      %v1371 = vpop.permute.xlu0 %1370
      %1372 = vrot.lane.b32.xlu0 %v922, 64
      %v1373 = vpop.permute.xlu0 %1372
      %v1375 = vsel %vm927, %v1371, 0
      %v1378 = vsel %vm927, %v1373, 0
      %1380 = vmatprep.subr.bf16.mxu0 0
      %1381 = vmatpush1.bf16.xpose.msra.mxu0 %v1378
      %1382 = vmatprep.subr.bf16.mxu0 0
      %1383 = vmatpush1.bf16.xpose.msra.mxu0 0
      %1384 = vmatprep.subr.bf16.mxu0 0
      %1385 = vmatpush1.bf16.xpose.msra.mxu0 0
      %1386 = vmatprep.subr.bf16.mxu0 0
      %1387 = vmatpush1.bf16.xpose.msra.mxu0 0
      %1388 = vmatprep.subr.bf16.mxu0 0
      %1389 = vmatpush1.bf16.xpose.msra.mxu0 0
      %1390 = vmatprep.subr.bf16.mxu0 0
      %1391 = vmatpush1.bf16.xpose.msra.mxu0 0
      %1392 = vmatprep.subr.bf16.mxu0 0
      %1393 = vmatpush1.bf16.xpose.msra.mxu0 0
      %1394 = vmatprep.subr.bf16.mxu0 0
      %1395 = vmatpush1.bf16.xpose.msra.mxu0 0
      %1396 = vmatprep.subr.bf16.mxu0 0
      %1397 = vmatpush1.bf16.xpose.msra.mxu0 0
      %1398 = vmatprep.subr.bf16.mxu0 0
      %1399 = vmatpush1.bf16.xpose.msra.mxu0 0
      %1400 = vmatprep.subr.bf16.mxu0 0
      %1401 = vmatpush1.bf16.xpose.msra.mxu0 0
      %1402 = vmatprep.subr.bf16.mxu0 0
      %1403 = vmatpush1.bf16.xpose.msra.mxu0 0
      %1404 = vmatprep.subr.bf16.mxu0 0
      %1405 = vmatpush1.bf16.xpose.msra.mxu0 0
      %1406 = vmatprep.subr.bf16.mxu0 0
      %1407 = vmatpush1.bf16.xpose.msra.mxu0 0
      %1408 = vmatprep.subr.bf16.mxu0 0
      %1409 = vmatpush1.bf16.xpose.msra.mxu0 0
      %1410 = vmatprep.subr.bf16.mxu0 0
      %1411 = vmatpush1.bf16.xpose.msra.mxu0 0
      %1412 = vmatprep.mubr.bf16.mxu0 0
      %1413 = vmatmul.mubr.bf16.gmra.mrb[0].mxu0 %v1375
      %v1414 = vpop.f32.mrb[0].mxu0
      %v1415 = vadd.f32 0.0, %v1414
      %v1416 = vpop.f32.mrb[0].mxu0
      %v1417 = vpop.f32.mrb[0].mxu0
      %v1418 = vpop.f32.mrb[0].mxu0
      %1419 = vdwg.mxu0
      %1420 = vrot.lane.b32.xlu0 %v924, 64
      %v1421 = vpop.permute.xlu0 %1420
      %1422 = vrot.lane.b32.xlu0 %v925, 64
      %v1423 = vpop.permute.xlu0 %1422
      %v1425 = vsel %vm927, %v1421, 0
      %v1428 = vsel %vm927, %v1423, 0
      %1430 = vmatprep.subr.bf16.mxu0 0
      %1431 = vmatpush1.bf16.xpose.msra.mxu0 %v1428
      %1432 = vmatprep.subr.bf16.mxu0 0
      %1433 = vmatpush1.bf16.xpose.msra.mxu0 0
      %1434 = vmatprep.subr.bf16.mxu0 0
      %1435 = vmatpush1.bf16.xpose.msra.mxu0 0
      %1436 = vmatprep.subr.bf16.mxu0 0
      %1437 = vmatpush1.bf16.xpose.msra.mxu0 0
      %1438 = vmatprep.subr.bf16.mxu0 0
      %1439 = vmatpush1.bf16.xpose.msra.mxu0 0
      %1440 = vmatprep.subr.bf16.mxu0 0
      %1441 = vmatpush1.bf16.xpose.msra.mxu0 0
      %1442 = vmatprep.subr.bf16.mxu0 0
      %1443 = vmatpush1.bf16.xpose.msra.mxu0 0
      %1444 = vmatprep.subr.bf16.mxu0 0
      %1445 = vmatpush1.bf16.xpose.msra.mxu0 0
      %1446 = vmatprep.subr.bf16.mxu0 0
      %1447 = vmatpush1.bf16.xpose.msra.mxu0 0
      %1448 = vmatprep.subr.bf16.mxu0 0
      %1449 = vmatpush1.bf16.xpose.msra.mxu0 0
      %1450 = vmatprep.subr.bf16.mxu0 0
      %1451 = vmatpush1.bf16.xpose.msra.mxu0 0
      %1452 = vmatprep.subr.bf16.mxu0 0
      %1453 = vmatpush1.bf16.xpose.msra.mxu0 0
      %1454 = vmatprep.subr.bf16.mxu0 0
      %1455 = vmatpush1.bf16.xpose.msra.mxu0 0
      %1456 = vmatprep.subr.bf16.mxu0 0
      %1457 = vmatpush1.bf16.xpose.msra.mxu0 0
      %1458 = vmatprep.subr.bf16.mxu0 0
      %1459 = vmatpush1.bf16.xpose.msra.mxu0 0
      %1460 = vmatprep.subr.bf16.mxu0 0
      %1461 = vmatpush1.bf16.xpose.msra.mxu0 0
      %1462 = vmatprep.mubr.bf16.mxu0 0
      %1463 = vmatmul.mubr.bf16.gmra.mrb[0].mxu0 %v1425
      %v1464 = vpop.f32.mrb[0].mxu0
      %v1465 = vadd.f32 0.0, %v1464
      %v1466 = vpop.f32.mrb[0].mxu0
      %v1467 = vpop.f32.mrb[0].mxu0
      %v1468 = vpop.f32.mrb[0].mxu0
      %1469 = vdwg.mxu0
      %v1470 = vsel %vm1021, %v1415, -1e+30
      %v1471 = vsel %vm1021, %v1465, -1e+30
      %v1472 = vsel %vm1024, %v1470, -inf
      %1473 = vmax.xlane.f32.xlu0 %v1472
      %v1474 = vpop.xlane.xlu0 %1473
      %v1475 = vsel %vm1024, %v1471, -inf
      %1476 = vmax.xlane.f32.xlu0 %v1475
      %v1477 = vpop.xlane.xlu0 %1476
      %v1478 = vsub.f32 %v1470, %v1474
      %v1479 = vsub.f32 %v1471, %v1477
      %v1480 = vmul.f32 %v1478, 1.442695
      %v1481 = vpow.pop %v1480
      %v1482 = vmul.f32 %v1479, 1.442695
      %v1483 = vpow.pop %v1482
      %v1484 = vsel %vm1024, %v1481, 0.0
      %1485 = vadd.xlane.f32.xlu0 %v1484
      %v1486 = vpop.xlane.xlu0 %1485
      %v1487 = vsel %vm1024, %v1483, 0.0
      %1488 = vadd.xlane.f32.xlu0 %v1487
      %v1489 = vpop.xlane.xlu0 %1488
      %v1490 = vrcp.pop %v1486
      %v1491 = vrcp.pop %v1489
      %v1492 = vmul.f32 %v1481, %v1490
      %v1493 = vmul.f32 %v1483, %v1491
      %v1494 = vpack.c.bf16 %v1492, %v1492
      %v1495 = vpack.c.bf16 %v1493, %v1493
      %1496 = vrot.lane.b32.xlu0 %v923, 64
      %v1497 = vpop.permute.xlu0 %1496
      %v1499 = vsel %vm1024, %v1494, 0
      %v1502 = vsel %vm1052, %v1497, 0
      %1504 = vmatprep.subr.bf16.mxu0 0
      %1505 = vmatpush1.bf16.msra.mxu0 %v1502
      %1506 = vmatprep.subr.bf16.mxu0 0
      %1507 = vmatpush1.bf16.msra.mxu0 0
      %1508 = vmatprep.subr.bf16.mxu0 0
      %1509 = vmatpush1.bf16.msra.mxu0 0
      %1510 = vmatprep.subr.bf16.mxu0 0
      %1511 = vmatpush1.bf16.msra.mxu0 0
      %1512 = vmatprep.subr.bf16.mxu0 0
      %1513 = vmatpush1.bf16.msra.mxu0 0
      %1514 = vmatprep.subr.bf16.mxu0 0
      %1515 = vmatpush1.bf16.msra.mxu0 0
      %1516 = vmatprep.subr.bf16.mxu0 0
      %1517 = vmatpush1.bf16.msra.mxu0 0
      %1518 = vmatprep.subr.bf16.mxu0 0
      %1519 = vmatpush1.bf16.msra.mxu0 0
      %1520 = vmatprep.subr.bf16.mxu0 0
      %1521 = vmatpush1.bf16.msra.mxu0 0
      %1522 = vmatprep.subr.bf16.mxu0 0
      %1523 = vmatpush1.bf16.msra.mxu0 0
      %1524 = vmatprep.subr.bf16.mxu0 0
      %1525 = vmatpush1.bf16.msra.mxu0 0
      %1526 = vmatprep.subr.bf16.mxu0 0
      %1527 = vmatpush1.bf16.msra.mxu0 0
      %1528 = vmatprep.subr.bf16.mxu0 0
      %1529 = vmatpush1.bf16.msra.mxu0 0
      %1530 = vmatprep.subr.bf16.mxu0 0
      %1531 = vmatpush1.bf16.msra.mxu0 0
      %1532 = vmatprep.subr.bf16.mxu0 0
      %1533 = vmatpush1.bf16.msra.mxu0 0
      %1534 = vmatprep.subr.bf16.mxu0 0
      %1535 = vmatpush1.bf16.msra.mxu0 0
      %1536 = vmatprep.mubr.bf16.mxu0 0
      %1537 = vmatmul.mubr.bf16.gmra.mrb[0].mxu0 %v1499
      %v1538 = vpop.f32.mrb[0].mxu0
      %v1539 = vadd.f32 0.0, %v1538
      %v1540 = vpop.f32.mrb[0].mxu0
      %v1541 = vpop.f32.mrb[0].mxu0
      %v1542 = vpop.f32.mrb[0].mxu0
      %1543 = vdwg.mxu0
      %1544 = vrot.lane.b32.xlu0 %v926, 64
      %v1545 = vpop.permute.xlu0 %1544
      %v1547 = vsel %vm1024, %v1495, 0
      %v1550 = vsel %vm1052, %v1545, 0
      %1552 = vmatprep.subr.bf16.mxu0 0
      %1553 = vmatpush1.bf16.msra.mxu0 %v1550
      %1554 = vmatprep.subr.bf16.mxu0 0
      %1555 = vmatpush1.bf16.msra.mxu0 0
      %1556 = vmatprep.subr.bf16.mxu0 0
      %1557 = vmatpush1.bf16.msra.mxu0 0
      %1558 = vmatprep.subr.bf16.mxu0 0
      %1559 = vmatpush1.bf16.msra.mxu0 0
      %1560 = vmatprep.subr.bf16.mxu0 0
      %1561 = vmatpush1.bf16.msra.mxu0 0
      %1562 = vmatprep.subr.bf16.mxu0 0
      %1563 = vmatpush1.bf16.msra.mxu0 0
      %1564 = vmatprep.subr.bf16.mxu0 0
      %1565 = vmatpush1.bf16.msra.mxu0 0
      %1566 = vmatprep.subr.bf16.mxu0 0
      %1567 = vmatpush1.bf16.msra.mxu0 0
      %1568 = vmatprep.subr.bf16.mxu0 0
      %1569 = vmatpush1.bf16.msra.mxu0 0
      %1570 = vmatprep.subr.bf16.mxu0 0
      %1571 = vmatpush1.bf16.msra.mxu0 0
      %1572 = vmatprep.subr.bf16.mxu0 0
      %1573 = vmatpush1.bf16.msra.mxu0 0
      %1574 = vmatprep.subr.bf16.mxu0 0
      %1575 = vmatpush1.bf16.msra.mxu0 0
      %1576 = vmatprep.subr.bf16.mxu0 0
      %1577 = vmatpush1.bf16.msra.mxu0 0
      %1578 = vmatprep.subr.bf16.mxu0 0
      %1579 = vmatpush1.bf16.msra.mxu0 0
      %1580 = vmatprep.subr.bf16.mxu0 0
      %1581 = vmatpush1.bf16.msra.mxu0 0
      %1582 = vmatprep.subr.bf16.mxu0 0
      %1583 = vmatpush1.bf16.msra.mxu0 0
      %1584 = vmatprep.mubr.bf16.mxu0 0
      %1585 = vmatmul.mubr.bf16.gmra.mrb[0].mxu0 %v1547
      %v1586 = vpop.f32.mrb[0].mxu0
      %v1587 = vadd.f32 0.0, %v1586
      %v1588 = vpop.f32.mrb[0].mxu0
      %v1589 = vpop.f32.mrb[0].mxu0
      %v1590 = vpop.f32.mrb[0].mxu0
      %1591 = vdwg.mxu0
      %1592 = vrot.lane.b32.xlu0 %v921, 32
      %v1593 = vpop.permute.xlu0 %1592
      %1594 = vrot.lane.b32.xlu0 %v922, 32
      %v1595 = vpop.permute.xlu0 %1594
      %v1597 = vsel %vm927, %v1593, 0
      %v1600 = vsel %vm927, %v1595, 0
      %1602 = vmatprep.subr.bf16.mxu0 0
      %1603 = vmatpush1.bf16.xpose.msra.mxu0 %v1600
      %1604 = vmatprep.subr.bf16.mxu0 0
      %1605 = vmatpush1.bf16.xpose.msra.mxu0 0
      %1606 = vmatprep.subr.bf16.mxu0 0
      %1607 = vmatpush1.bf16.xpose.msra.mxu0 0
      %1608 = vmatprep.subr.bf16.mxu0 0
      %1609 = vmatpush1.bf16.xpose.msra.mxu0 0
      %1610 = vmatprep.subr.bf16.mxu0 0
      %1611 = vmatpush1.bf16.xpose.msra.mxu0 0
      %1612 = vmatprep.subr.bf16.mxu0 0
      %1613 = vmatpush1.bf16.xpose.msra.mxu0 0
      %1614 = vmatprep.subr.bf16.mxu0 0
      %1615 = vmatpush1.bf16.xpose.msra.mxu0 0
      %1616 = vmatprep.subr.bf16.mxu0 0
      %1617 = vmatpush1.bf16.xpose.msra.mxu0 0
      %1618 = vmatprep.subr.bf16.mxu0 0
      %1619 = vmatpush1.bf16.xpose.msra.mxu0 0
      %1620 = vmatprep.subr.bf16.mxu0 0
      %1621 = vmatpush1.bf16.xpose.msra.mxu0 0
      %1622 = vmatprep.subr.bf16.mxu0 0
      %1623 = vmatpush1.bf16.xpose.msra.mxu0 0
      %1624 = vmatprep.subr.bf16.mxu0 0
      %1625 = vmatpush1.bf16.xpose.msra.mxu0 0
      %1626 = vmatprep.subr.bf16.mxu0 0
      %1627 = vmatpush1.bf16.xpose.msra.mxu0 0
      %1628 = vmatprep.subr.bf16.mxu0 0
      %1629 = vmatpush1.bf16.xpose.msra.mxu0 0
      %1630 = vmatprep.subr.bf16.mxu0 0
      %1631 = vmatpush1.bf16.xpose.msra.mxu0 0
      %1632 = vmatprep.subr.bf16.mxu0 0
      %1633 = vmatpush1.bf16.xpose.msra.mxu0 0
      %1634 = vmatprep.mubr.bf16.mxu0 0
      %1635 = vmatmul.mubr.bf16.gmra.mrb[0].mxu0 %v1597
      %v1636 = vpop.f32.mrb[0].mxu0
      %v1637 = vadd.f32 0.0, %v1636
      %v1638 = vpop.f32.mrb[0].mxu0
      %v1639 = vpop.f32.mrb[0].mxu0
      %v1640 = vpop.f32.mrb[0].mxu0
      %1641 = vdwg.mxu0
      %1642 = vrot.lane.b32.xlu0 %v924, 32
      %v1643 = vpop.permute.xlu0 %1642
      %1644 = vrot.lane.b32.xlu0 %v925, 32
      %v1645 = vpop.permute.xlu0 %1644
      %v1647 = vsel %vm927, %v1643, 0
      %v1650 = vsel %vm927, %v1645, 0
      %1652 = vmatprep.subr.bf16.mxu0 0
      %1653 = vmatpush1.bf16.xpose.msra.mxu0 %v1650
      %1654 = vmatprep.subr.bf16.mxu0 0
      %1655 = vmatpush1.bf16.xpose.msra.mxu0 0
      %1656 = vmatprep.subr.bf16.mxu0 0
      %1657 = vmatpush1.bf16.xpose.msra.mxu0 0
      %1658 = vmatprep.subr.bf16.mxu0 0
      %1659 = vmatpush1.bf16.xpose.msra.mxu0 0
      %1660 = vmatprep.subr.bf16.mxu0 0
      %1661 = vmatpush1.bf16.xpose.msra.mxu0 0
      %1662 = vmatprep.subr.bf16.mxu0 0
      %1663 = vmatpush1.bf16.xpose.msra.mxu0 0
      %1664 = vmatprep.subr.bf16.mxu0 0
      %1665 = vmatpush1.bf16.xpose.msra.mxu0 0
      %1666 = vmatprep.subr.bf16.mxu0 0
      %1667 = vmatpush1.bf16.xpose.msra.mxu0 0
      %1668 = vmatprep.subr.bf16.mxu0 0
      %1669 = vmatpush1.bf16.xpose.msra.mxu0 0
      %1670 = vmatprep.subr.bf16.mxu0 0
      %1671 = vmatpush1.bf16.xpose.msra.mxu0 0
      %1672 = vmatprep.subr.bf16.mxu0 0
      %1673 = vmatpush1.bf16.xpose.msra.mxu0 0
      %1674 = vmatprep.subr.bf16.mxu0 0
      %1675 = vmatpush1.bf16.xpose.msra.mxu0 0
      %1676 = vmatprep.subr.bf16.mxu0 0
      %1677 = vmatpush1.bf16.xpose.msra.mxu0 0
      %1678 = vmatprep.subr.bf16.mxu0 0
      %1679 = vmatpush1.bf16.xpose.msra.mxu0 0
      %1680 = vmatprep.subr.bf16.mxu0 0
      %1681 = vmatpush1.bf16.xpose.msra.mxu0 0
      %1682 = vmatprep.subr.bf16.mxu0 0
      %1683 = vmatpush1.bf16.xpose.msra.mxu0 0
      %1684 = vmatprep.mubr.bf16.mxu0 0
      %1685 = vmatmul.mubr.bf16.gmra.mrb[0].mxu0 %v1647
      %v1686 = vpop.f32.mrb[0].mxu0
      %v1687 = vadd.f32 0.0, %v1686
      %v1688 = vpop.f32.mrb[0].mxu0
      %v1689 = vpop.f32.mrb[0].mxu0
      %v1690 = vpop.f32.mrb[0].mxu0
      %1691 = vdwg.mxu0
      %v1692 = vsel %vm1021, %v1637, -1e+30
      %v1693 = vsel %vm1021, %v1687, -1e+30
      %v1694 = vsel %vm1024, %v1692, -inf
      %1695 = vmax.xlane.f32.xlu0 %v1694
      %v1696 = vpop.xlane.xlu0 %1695
      %v1697 = vsel %vm1024, %v1693, -inf
      %1698 = vmax.xlane.f32.xlu0 %v1697
      %v1699 = vpop.xlane.xlu0 %1698
      %v1700 = vsub.f32 %v1692, %v1696
      %v1701 = vsub.f32 %v1693, %v1699
      %v1702 = vmul.f32 %v1700, 1.442695
      %v1703 = vpow.pop %v1702
      %v1704 = vmul.f32 %v1701, 1.442695
      %v1705 = vpow.pop %v1704
      %v1706 = vsel %vm1024, %v1703, 0.0
      %1707 = vadd.xlane.f32.xlu0 %v1706
      %v1708 = vpop.xlane.xlu0 %1707
      %v1709 = vsel %vm1024, %v1705, 0.0
      %1710 = vadd.xlane.f32.xlu0 %v1709
      %v1711 = vpop.xlane.xlu0 %1710
      %v1712 = vrcp.pop %v1708
      %v1713 = vrcp.pop %v1711
      %v1714 = vmul.f32 %v1703, %v1712
      %v1715 = vmul.f32 %v1705, %v1713
      %v1716 = vpack.c.bf16 %v1714, %v1714
      %v1717 = vpack.c.bf16 %v1715, %v1715
      %1718 = vrot.lane.b32.xlu0 %v923, 32
      %v1719 = vpop.permute.xlu0 %1718
      %v1721 = vsel %vm1024, %v1716, 0
      %v1724 = vsel %vm1052, %v1719, 0
      %1726 = vmatprep.subr.bf16.mxu0 0
      %1727 = vmatpush1.bf16.msra.mxu0 %v1724
      %1728 = vmatprep.subr.bf16.mxu0 0
      %1729 = vmatpush1.bf16.msra.mxu0 0
      %1730 = vmatprep.subr.bf16.mxu0 0
      %1731 = vmatpush1.bf16.msra.mxu0 0
      %1732 = vmatprep.subr.bf16.mxu0 0
      %1733 = vmatpush1.bf16.msra.mxu0 0
      %1734 = vmatprep.subr.bf16.mxu0 0
      %1735 = vmatpush1.bf16.msra.mxu0 0
      %1736 = vmatprep.subr.bf16.mxu0 0
      %1737 = vmatpush1.bf16.msra.mxu0 0
      %1738 = vmatprep.subr.bf16.mxu0 0
      %1739 = vmatpush1.bf16.msra.mxu0 0
      %1740 = vmatprep.subr.bf16.mxu0 0
      %1741 = vmatpush1.bf16.msra.mxu0 0
      %1742 = vmatprep.subr.bf16.mxu0 0
      %1743 = vmatpush1.bf16.msra.mxu0 0
      %1744 = vmatprep.subr.bf16.mxu0 0
      %1745 = vmatpush1.bf16.msra.mxu0 0
      %1746 = vmatprep.subr.bf16.mxu0 0
      %1747 = vmatpush1.bf16.msra.mxu0 0
      %1748 = vmatprep.subr.bf16.mxu0 0
      %1749 = vmatpush1.bf16.msra.mxu0 0
      %1750 = vmatprep.subr.bf16.mxu0 0
      %1751 = vmatpush1.bf16.msra.mxu0 0
      %1752 = vmatprep.subr.bf16.mxu0 0
      %1753 = vmatpush1.bf16.msra.mxu0 0
      %1754 = vmatprep.subr.bf16.mxu0 0
      %1755 = vmatpush1.bf16.msra.mxu0 0
      %1756 = vmatprep.subr.bf16.mxu0 0
      %1757 = vmatpush1.bf16.msra.mxu0 0
      %1758 = vmatprep.mubr.bf16.mxu0 0
      %1759 = vmatmul.mubr.bf16.gmra.mrb[0].mxu0 %v1721
      %v1760 = vpop.f32.mrb[0].mxu0
      %v1761 = vadd.f32 0.0, %v1760
      %v1762 = vpop.f32.mrb[0].mxu0
      %v1763 = vpop.f32.mrb[0].mxu0
      %v1764 = vpop.f32.mrb[0].mxu0
      %1765 = vdwg.mxu0
      %1766 = vrot.lane.b32.xlu0 %v926, 32
      %v1767 = vpop.permute.xlu0 %1766
      %v1769 = vsel %vm1024, %v1717, 0
      %v1772 = vsel %vm1052, %v1767, 0
      %1774 = vmatprep.subr.bf16.mxu0 0
      %1775 = vmatpush1.bf16.msra.mxu0 %v1772
      %1776 = vmatprep.subr.bf16.mxu0 0
      %1777 = vmatpush1.bf16.msra.mxu0 0
      %1778 = vmatprep.subr.bf16.mxu0 0
      %1779 = vmatpush1.bf16.msra.mxu0 0
      %1780 = vmatprep.subr.bf16.mxu0 0
      %1781 = vmatpush1.bf16.msra.mxu0 0
      %1782 = vmatprep.subr.bf16.mxu0 0
      %1783 = vmatpush1.bf16.msra.mxu0 0
      %1784 = vmatprep.subr.bf16.mxu0 0
      %1785 = vmatpush1.bf16.msra.mxu0 0
      %1786 = vmatprep.subr.bf16.mxu0 0
      %1787 = vmatpush1.bf16.msra.mxu0 0
      %1788 = vmatprep.subr.bf16.mxu0 0
      %1789 = vmatpush1.bf16.msra.mxu0 0
      %1790 = vmatprep.subr.bf16.mxu0 0
      %1791 = vmatpush1.bf16.msra.mxu0 0
      %1792 = vmatprep.subr.bf16.mxu0 0
      %1793 = vmatpush1.bf16.msra.mxu0 0
      %1794 = vmatprep.subr.bf16.mxu0 0
      %1795 = vmatpush1.bf16.msra.mxu0 0
      %1796 = vmatprep.subr.bf16.mxu0 0
      %1797 = vmatpush1.bf16.msra.mxu0 0
      %1798 = vmatprep.subr.bf16.mxu0 0
      %1799 = vmatpush1.bf16.msra.mxu0 0
      %1800 = vmatprep.subr.bf16.mxu0 0
      %1801 = vmatpush1.bf16.msra.mxu0 0
      %1802 = vmatprep.subr.bf16.mxu0 0
      %1803 = vmatpush1.bf16.msra.mxu0 0
      %1804 = vmatprep.subr.bf16.mxu0 0
      %1805 = vmatpush1.bf16.msra.mxu0 0
      %1806 = vmatprep.mubr.bf16.mxu0 0
      %1807 = vmatmul.mubr.bf16.gmra.mrb[0].mxu0 %v1769
      %v1808 = vpop.f32.mrb[0].mxu0
      %v1809 = vadd.f32 0.0, %v1808
      %v1810 = vpop.f32.mrb[0].mxu0
      %v1811 = vpop.f32.mrb[0].mxu0
      %v1812 = vpop.f32.mrb[0].mxu0
      %1813 = vdwg.mxu0
      %1816 = vrot.lane.b32.xlu0 %v1316, 32
      %v1817 = vpop.permute.xlu0 %1816
      %1818 = vrot.lane.b32.xlu0 %v1365, 32
      %v1819 = vpop.permute.xlu0 %1818
      %1824 = vrot.lane.b32.xlu0 %v1539, 64
      %v1825 = vpop.permute.xlu0 %1824
      %1826 = vrot.lane.b32.xlu0 %v1587, 64
      %v1827 = vpop.permute.xlu0 %1826
      %1832 = vrot.lane.b32.xlu0 %v1761, 96
      %v1833 = vpop.permute.xlu0 %1832
      %1834 = vrot.lane.b32.xlu0 %v1809, 96
      %v1835 = vpop.permute.xlu0 %1834
      %v1838 = vsel %vm927, %v1091, %v1817
      %v1839 = vsel %vm927, %v1137, %v1819
      %vm1840 = vcmask 523264
      %v1841 = vsel %vm1840, %v1838, %v1825
      %v1842 = vsel %vm1840, %v1839, %v1827
      %vm1843 = vcmask 785408
      %v1844 = vsel %vm1843, %v1841, %v1833
      %v1845 = vsel %vm1843, %v1842, %v1835
      %v1846 = vpack.c.bf16 %v1845, %v1844
      %v1847 = vld [vmem:[%s577] sm:$0xf]
      %v1848 = vld [vmem:[%s577 + $0x4] sm:$0xf]
      %v1849 = vld [vmem:[%s577 + $0x8] sm:$0xf]
      %v1850 = vld [vmem:[%s577 + $0xc] sm:$0xf]
      %v1851 = vld [vmem:[%s577 + $0x10] sm:$0xf]
      %v1852 = vld [vmem:[%s577 + $0x14] sm:$0xf]
      %v1853 = vld [vmem:[%s577 + $0x18] sm:$0xf]
      %v1854 = vld [vmem:[%s577 + $0x1c] sm:$0xf]
      %v1855 = vld [vmem:[%s577 + $0x20] sm:$0xf]
      %v1856 = vld [vmem:[%s577 + $0x24] sm:$0xf]
      %v1857 = vld [vmem:[%s577 + $0x28] sm:$0xf]
      %v1858 = vld [vmem:[%s577 + $0x2c] sm:$0xf]
      %v1859 = vld [vmem:[%s577 + $0x30] sm:$0xf]
      %v1860 = vld [vmem:[%s577 + $0x34] sm:$0xf]
      %v1861 = vld [vmem:[%s577 + $0x38] sm:$0xf]
      %v1862 = vld [vmem:[%s577 + $0x3c] sm:$0xf]
      %v1863 = vld [vmem:[%s580] sm:$0x1]
      %v1865 = vlaneseq
      %v1866 = vshrl.u32 %v1865, 7
      %v1867 = vsub.s32 0, %v1866
      %v1868 = vrot.slane %v1863, %v1867
      %v1886 = vunpack.c.l.b16 %v1847
      %v1887 = vunpack.c.l.b16 %v1848
      %v1888 = vunpack.c.l.b16 %v1849
      %v1889 = vunpack.c.l.b16 %v1850
      %v1890 = vunpack.c.l.b16 %v1851
      %v1891 = vunpack.c.l.b16 %v1852
      %v1892 = vunpack.c.l.b16 %v1853
      %v1893 = vunpack.c.l.b16 %v1854
      %v1894 = vunpack.c.l.b16 %v1855
      %v1895 = vunpack.c.l.b16 %v1856
      %v1896 = vunpack.c.l.b16 %v1857
      %v1897 = vunpack.c.l.b16 %v1858
      %v1898 = vunpack.c.l.b16 %v1859
      %v1899 = vunpack.c.l.b16 %v1860
      %v1900 = vunpack.c.l.b16 %v1861
      %v1901 = vunpack.c.l.b16 %v1862
      %v1902 = vpack.c.b16 %v1887, %v1886
      %v1903 = vpack.c.b16 %v1889, %v1888
      %v1904 = vpack.c.b16 %v1891, %v1890
      %v1905 = vpack.c.b16 %v1893, %v1892
      %v1906 = vpack.c.b16 %v1895, %v1894
      %v1907 = vpack.c.b16 %v1897, %v1896
      %v1908 = vpack.c.b16 %v1899, %v1898
      %v1909 = vpack.c.b16 %v1901, %v1900
      %1918 = vmatprep.subr.bf16.mxu0 0
      %1919 = vmatpush1.bf16.msra.mxu0 %v1902
      %1920 = vmatprep.subr.bf16.mxu0 0
      %1921 = vmatpush1.bf16.msra.mxu0 %v1903
      %1922 = vmatprep.subr.bf16.mxu0 0
      %1923 = vmatpush1.bf16.msra.mxu0 %v1904
      %1924 = vmatprep.subr.bf16.mxu0 0
      %1925 = vmatpush1.bf16.msra.mxu0 %v1905
      %1926 = vmatprep.subr.bf16.mxu0 0
      %1927 = vmatpush1.bf16.msra.mxu0 %v1906
      %1928 = vmatprep.subr.bf16.mxu0 0
      %1929 = vmatpush1.bf16.msra.mxu0 %v1907
      %1930 = vmatprep.subr.bf16.mxu0 0
      %1931 = vmatpush1.bf16.msra.mxu0 %v1908
      %1932 = vmatprep.subr.bf16.mxu0 0
      %1933 = vmatpush1.bf16.msra.mxu0 %v1909
      %1934 = vmatprep.subr.bf16.mxu0 0
      %1935 = vmatpush1.bf16.msra.mxu0 0
      %1936 = vmatprep.subr.bf16.mxu0 0
      %1937 = vmatpush1.bf16.msra.mxu0 0
      %1938 = vmatprep.subr.bf16.mxu0 0
      %1939 = vmatpush1.bf16.msra.mxu0 0
      %1940 = vmatprep.subr.bf16.mxu0 0
      %1941 = vmatpush1.bf16.msra.mxu0 0
      %1942 = vmatprep.subr.bf16.mxu0 0
      %1943 = vmatpush1.bf16.msra.mxu0 0
      %1944 = vmatprep.subr.bf16.mxu0 0
      %1945 = vmatpush1.bf16.msra.mxu0 0
      %1946 = vmatprep.subr.bf16.mxu0 0
      %1947 = vmatpush1.bf16.msra.mxu0 0
      %1948 = vmatprep.subr.bf16.mxu0 0
      %1949 = vmatpush1.bf16.msra.mxu0 0
      %1950 = vmatprep.mubr.bf16.mxu0 0
      %1951 = vmatmul.mubr.bf16.gmra.mrb[0].mxu0 %v1846
      %v1952 = vpop.f32.mrb[0].mxu0
      %v1953 = vadd.f32 %v1868, %v1952
      %v1954 = vpop.f32.mrb[0].mxu0
      %v1955 = vpop.f32.mrb[0].mxu0
      %v1956 = vadd.f32 %v1868, %v1955
      %v1957 = vpop.f32.mrb[0].mxu0
      %1958 = vdwg.mxu0
      %v1959 = vadd.f32 %v613, %v1953
      %v1960 = vadd.f32 %v614, %v1956
      %v1961 = vld [vmem:[%s583] sm:$0x1]
      %v1962 = vld [vmem:[%s586] sm:$0x1]
      %1963 = vadd.xlane.f32.xlu0 %v1959
      %v1964 = vpop.xlane.xlu0 %1963
      %1965 = vadd.xlane.f32.xlu0 %v1960
      %v1966 = vpop.xlane.xlu0 %1965
      %v1967 = vmul.f32 %v1964, %v624
      %v1968 = vmul.f32 %v1966, %v624
      %v1969 = vsub.f32 %v1959, %v1967
      %v1970 = vsub.f32 %v1960, %v1968
      %v1971 = vmul.f32 %v1969, %v1969
      %v1972 = vmul.f32 %v1970, %v1970
      %1973 = vadd.xlane.f32.xlu0 %v1971
      %v1974 = vpop.xlane.xlu0 %1973
      %1975 = vadd.xlane.f32.xlu0 %v1972
      %v1976 = vpop.xlane.xlu0 %1975
      %v1977 = vmul.f32 %v1974, %v624
      %v1978 = vmul.f32 %v1976, %v624
      %v1979 = vadd.f32 %v1977, 1e-06
      %v1980 = vadd.f32 %v1978, 1e-06
      %v1981 = vrsqrt.pop %v1979
      %v1982 = vrsqrt.pop %v1980
      %v1983 = vmul.f32 %v1969, %v1981
      %v1984 = vmul.f32 %v1970, %v1982
      %v1986 = vlaneseq
      %v1987 = vshrl.u32 %v1986, 7
      %v1988 = vsub.s32 0, %v1987
      %v1989 = vrot.slane %v1961, %v1988
      %v1991 = vmul.f32 %v1983, %v1989
      %v1992 = vmul.f32 %v1984, %v1989
      %v1994 = vlaneseq
      %v1995 = vshrl.u32 %v1994, 7
      %v1996 = vsub.s32 0, %v1995
      %v1997 = vrot.slane %v1962, %v1996
      %v1999 = vadd.f32 %v1991, %v1997
      %v2000 = vadd.f32 %v1992, %v1997
      %v2001 = vpack.c.bf16 %v2000, %v1999
      %v2002 = vld [vmem:[%s591] sm:$0xff]
      %v2003 = vld [vmem:[%s591 + $0x8] sm:$0xff]
      %v2004 = vld [vmem:[%s591 + $0x10] sm:$0xff]
      %v2005 = vld [vmem:[%s591 + $0x18] sm:$0xff]
      %v2006 = vld [vmem:[%s591 + $0x20] sm:$0xff]
      %v2007 = vld [vmem:[%s591 + $0x28] sm:$0xff]
      %v2008 = vld [vmem:[%s591 + $0x30] sm:$0xff]
      %v2009 = vld [vmem:[%s591 + $0x38] sm:$0xff]
      %v2010 = vld [vmem:[%s591 + $0x40] sm:$0xff]
      %v2011 = vld [vmem:[%s591 + $0x48] sm:$0xff]
      %v2012 = vld [vmem:[%s591 + $0x50] sm:$0xff]
      %v2013 = vld [vmem:[%s591 + $0x58] sm:$0xff]
      %v2014 = vld [vmem:[%s591 + $0x60] sm:$0xff]
      %v2015 = vld [vmem:[%s591 + $0x68] sm:$0xff]
      %v2016 = vld [vmem:[%s591 + $0x70] sm:$0xff]
      %v2017 = vld [vmem:[%s591 + $0x78] sm:$0xff]
      %v2018 = vld [vmem:[%s591 + $0x80] sm:$0xff]
      %v2019 = vld [vmem:[%s591 + $0x88] sm:$0xff]
      %v2020 = vld [vmem:[%s591 + $0x90] sm:$0xff]
      %v2021 = vld [vmem:[%s591 + $0x98] sm:$0xff]
      %v2022 = vld [vmem:[%s591 + $0xa0] sm:$0xff]
      %v2023 = vld [vmem:[%s591 + $0xa8] sm:$0xff]
      %v2024 = vld [vmem:[%s591 + $0xb0] sm:$0xff]
      %v2025 = vld [vmem:[%s591 + $0xb8] sm:$0xff]
      %v2026 = vld [vmem:[%s591 + $0xc0] sm:$0xff]
      %v2027 = vld [vmem:[%s591 + $0xc8] sm:$0xff]
      %v2028 = vld [vmem:[%s591 + $0xd0] sm:$0xff]
      %v2029 = vld [vmem:[%s591 + $0xd8] sm:$0xff]
      %v2030 = vld [vmem:[%s591 + $0xe0] sm:$0xff]
      %v2031 = vld [vmem:[%s591 + $0xe8] sm:$0xff]
      %v2032 = vld [vmem:[%s591 + $0xf0] sm:$0xff]
      %v2033 = vld [vmem:[%s591 + $0xf8] sm:$0xff]
      %v2034 = vld [vmem:[%s595] sm:$0xf]
      %v2036 = vlaneseq
      %v2037 = vshrl.u32 %v2036, 7
      %v2038 = vsub.s32 0, %v2037
      %v2039 = vrot.slane %v2034, %v2038
      %v2040 = vlaneseq
      %v2041 = vshrl.u32 %v2040, 7
      %v2042 = vsub.s32 1, %v2041
      %v2043 = vrot.slane %v2034, %v2042
      %v2044 = vlaneseq
      %v2045 = vshrl.u32 %v2044, 7
      %v2046 = vsub.s32 2, %v2045
      %v2047 = vrot.slane %v2034, %v2046
      %v2048 = vlaneseq
      %v2049 = vshrl.u32 %v2048, 7
      %v2050 = vsub.s32 3, %v2049
      %v2051 = vrot.slane %v2034, %v2050
      %v2088 = vunpack.c.l.b16 %v2002
      %v2089 = vunpack.c.h.b16 %v2002
      %v2090 = vunpack.c.l.b16 %v2003
      %v2091 = vunpack.c.h.b16 %v2003
      %v2092 = vunpack.c.l.b16 %v2004
      %v2093 = vunpack.c.h.b16 %v2004
      %v2094 = vunpack.c.l.b16 %v2005
      %v2095 = vunpack.c.h.b16 %v2005
      %v2096 = vunpack.c.l.b16 %v2006
      %v2097 = vunpack.c.h.b16 %v2006
      %v2098 = vunpack.c.l.b16 %v2007
      %v2099 = vunpack.c.h.b16 %v2007
      %v2100 = vunpack.c.l.b16 %v2008
      %v2101 = vunpack.c.h.b16 %v2008
      %v2102 = vunpack.c.l.b16 %v2009
      %v2103 = vunpack.c.h.b16 %v2009
      %v2104 = vunpack.c.l.b16 %v2010
      %v2105 = vunpack.c.h.b16 %v2010
      %v2106 = vunpack.c.l.b16 %v2011
      %v2107 = vunpack.c.h.b16 %v2011
      %v2108 = vunpack.c.l.b16 %v2012
      %v2109 = vunpack.c.h.b16 %v2012
      %v2110 = vunpack.c.l.b16 %v2013
      %v2111 = vunpack.c.h.b16 %v2013
      %v2112 = vunpack.c.l.b16 %v2014
      %v2113 = vunpack.c.h.b16 %v2014
      %v2114 = vunpack.c.l.b16 %v2015
      %v2115 = vunpack.c.h.b16 %v2015
      %v2116 = vunpack.c.l.b16 %v2016
      %v2117 = vunpack.c.h.b16 %v2016
      %v2118 = vunpack.c.l.b16 %v2017
      %v2119 = vunpack.c.h.b16 %v2017
      %v2120 = vunpack.c.l.b16 %v2018
      %v2121 = vunpack.c.h.b16 %v2018
      %v2122 = vunpack.c.l.b16 %v2019
      %v2123 = vunpack.c.h.b16 %v2019
      %v2124 = vunpack.c.l.b16 %v2020
      %v2125 = vunpack.c.h.b16 %v2020
      %v2126 = vunpack.c.l.b16 %v2021
      %v2127 = vunpack.c.h.b16 %v2021
      %v2128 = vunpack.c.l.b16 %v2022
      %v2129 = vunpack.c.h.b16 %v2022
      %v2130 = vunpack.c.l.b16 %v2023
      %v2131 = vunpack.c.h.b16 %v2023
      %v2132 = vunpack.c.l.b16 %v2024
      %v2133 = vunpack.c.h.b16 %v2024
      %v2134 = vunpack.c.l.b16 %v2025
      %v2135 = vunpack.c.h.b16 %v2025
      %v2136 = vunpack.c.l.b16 %v2026
      %v2137 = vunpack.c.h.b16 %v2026
      %v2138 = vunpack.c.l.b16 %v2027
      %v2139 = vunpack.c.h.b16 %v2027
      %v2140 = vunpack.c.l.b16 %v2028
      %v2141 = vunpack.c.h.b16 %v2028
      %v2142 = vunpack.c.l.b16 %v2029
      %v2143 = vunpack.c.h.b16 %v2029
      %v2144 = vunpack.c.l.b16 %v2030
      %v2145 = vunpack.c.h.b16 %v2030
      %v2146 = vunpack.c.l.b16 %v2031
      %v2147 = vunpack.c.h.b16 %v2031
      %v2148 = vunpack.c.l.b16 %v2032
      %v2149 = vunpack.c.h.b16 %v2032
      %v2150 = vunpack.c.l.b16 %v2033
      %v2151 = vunpack.c.h.b16 %v2033
      %v2152 = vpack.c.b16 %v2092, %v2088
      %v2153 = vpack.c.b16 %v2093, %v2089
      %v2154 = vpack.c.b16 %v2094, %v2090
      %v2155 = vpack.c.b16 %v2095, %v2091
      %v2156 = vpack.c.b16 %v2100, %v2096
      %v2157 = vpack.c.b16 %v2101, %v2097
      %v2158 = vpack.c.b16 %v2102, %v2098
      %v2159 = vpack.c.b16 %v2103, %v2099
      %v2160 = vpack.c.b16 %v2108, %v2104
      %v2161 = vpack.c.b16 %v2109, %v2105
      %v2162 = vpack.c.b16 %v2110, %v2106
      %v2163 = vpack.c.b16 %v2111, %v2107
      %v2164 = vpack.c.b16 %v2116, %v2112
      %v2165 = vpack.c.b16 %v2117, %v2113
      %v2166 = vpack.c.b16 %v2118, %v2114
      %v2167 = vpack.c.b16 %v2119, %v2115
      %v2168 = vpack.c.b16 %v2124, %v2120
      %v2169 = vpack.c.b16 %v2125, %v2121
      %v2170 = vpack.c.b16 %v2126, %v2122
      %v2171 = vpack.c.b16 %v2127, %v2123
      %v2172 = vpack.c.b16 %v2132, %v2128
      %v2173 = vpack.c.b16 %v2133, %v2129
      %v2174 = vpack.c.b16 %v2134, %v2130
      %v2175 = vpack.c.b16 %v2135, %v2131
      %v2176 = vpack.c.b16 %v2140, %v2136
      %v2177 = vpack.c.b16 %v2141, %v2137
      %v2178 = vpack.c.b16 %v2142, %v2138
      %v2179 = vpack.c.b16 %v2143, %v2139
      %v2180 = vpack.c.b16 %v2148, %v2144
      %v2181 = vpack.c.b16 %v2149, %v2145
      %v2182 = vpack.c.b16 %v2150, %v2146
      %v2183 = vpack.c.b16 %v2151, %v2147
      %2216 = vmatprep.subr.bf16.mxu0 %v2153
      %2217 = vmatpush1.bf16.msra.mxu0 %v2152
      %2218 = vmatprep.subr.bf16.mxu0 %v2157
      %2219 = vmatpush1.bf16.msra.mxu0 %v2156
      %2220 = vmatprep.subr.bf16.mxu0 %v2161
      %2221 = vmatpush1.bf16.msra.mxu0 %v2160
      %2222 = vmatprep.subr.bf16.mxu0 %v2165
      %2223 = vmatpush1.bf16.msra.mxu0 %v2164
      %2224 = vmatprep.subr.bf16.mxu0 %v2169
      %2225 = vmatpush1.bf16.msra.mxu0 %v2168
      %2226 = vmatprep.subr.bf16.mxu0 %v2173
      %2227 = vmatpush1.bf16.msra.mxu0 %v2172
      %2228 = vmatprep.subr.bf16.mxu0 %v2177
      %2229 = vmatpush1.bf16.msra.mxu0 %v2176
      %2230 = vmatprep.subr.bf16.mxu0 %v2181
      %2231 = vmatpush1.bf16.msra.mxu0 %v2180
      %2232 = vmatprep.subr.bf16.mxu0 0
      %2233 = vmatpush1.bf16.msra.mxu0 0
      %2234 = vmatprep.subr.bf16.mxu0 0
      %2235 = vmatpush1.bf16.msra.mxu0 0
      %2236 = vmatprep.subr.bf16.mxu0 0
      %2237 = vmatpush1.bf16.msra.mxu0 0
      %2238 = vmatprep.subr.bf16.mxu0 0
      %2239 = vmatpush1.bf16.msra.mxu0 0
      %2240 = vmatprep.subr.bf16.mxu0 0
      %2241 = vmatpush1.bf16.msra.mxu0 0
      %2242 = vmatprep.subr.bf16.mxu0 0
      %2243 = vmatpush1.bf16.msra.mxu0 0
      %2244 = vmatprep.subr.bf16.mxu0 0
      %2245 = vmatpush1.bf16.msra.mxu0 0
      %2246 = vmatprep.subr.bf16.mxu0 0
      %2247 = vmatpush1.bf16.msra.mxu0 0
      %2248 = vmatprep.mubr.bf16.mxu0 0
      %2249 = vmatmul.mubr.bf16.gmra.mrb[0].mxu0 %v2001
      %v2250 = vpop.f32.mrb[0].mxu0
      %v2251 = vadd.f32 %v2039, %v2250
      %v2252 = vpop.f32.mrb[0].mxu0
      %v2253 = vadd.f32 %v2043, %v2252
      %v2254 = vpop.f32.mrb[0].mxu0
      %v2255 = vadd.f32 %v2039, %v2254
      %v2256 = vpop.f32.mrb[0].mxu0
      %v2257 = vadd.f32 %v2043, %v2256
      %2258 = vdwg.mxu0
      %2259 = vmatprep.subr.bf16.mxu0 %v2155
      %2260 = vmatpush1.bf16.msra.mxu0 %v2154
      %2261 = vmatprep.subr.bf16.mxu0 %v2159
      %2262 = vmatpush1.bf16.msra.mxu0 %v2158
      %2263 = vmatprep.subr.bf16.mxu0 %v2163
      %2264 = vmatpush1.bf16.msra.mxu0 %v2162
      %2265 = vmatprep.subr.bf16.mxu0 %v2167
      %2266 = vmatpush1.bf16.msra.mxu0 %v2166
      %2267 = vmatprep.subr.bf16.mxu0 %v2171
      %2268 = vmatpush1.bf16.msra.mxu0 %v2170
      %2269 = vmatprep.subr.bf16.mxu0 %v2175
      %2270 = vmatpush1.bf16.msra.mxu0 %v2174
      %2271 = vmatprep.subr.bf16.mxu0 %v2179
      %2272 = vmatpush1.bf16.msra.mxu0 %v2178
      %2273 = vmatprep.subr.bf16.mxu0 %v2183
      %2274 = vmatpush1.bf16.msra.mxu0 %v2182
      %2275 = vmatprep.subr.bf16.mxu0 0
      %2276 = vmatpush1.bf16.msra.mxu0 0
      %2277 = vmatprep.subr.bf16.mxu0 0
      %2278 = vmatpush1.bf16.msra.mxu0 0
      %2279 = vmatprep.subr.bf16.mxu0 0
      %2280 = vmatpush1.bf16.msra.mxu0 0
      %2281 = vmatprep.subr.bf16.mxu0 0
      %2282 = vmatpush1.bf16.msra.mxu0 0
      %2283 = vmatprep.subr.bf16.mxu0 0
      %2284 = vmatpush1.bf16.msra.mxu0 0
      %2285 = vmatprep.subr.bf16.mxu0 0
      %2286 = vmatpush1.bf16.msra.mxu0 0
      %2287 = vmatprep.subr.bf16.mxu0 0
      %2288 = vmatpush1.bf16.msra.mxu0 0
      %2289 = vmatprep.subr.bf16.mxu0 0
      %2290 = vmatpush1.bf16.msra.mxu0 0
      %2291 = vmatprep.mubr.bf16.mxu0 0
      %2292 = vmatmul.mubr.bf16.gmra.mrb[0].mxu0 %v2001
      %v2293 = vpop.f32.mrb[0].mxu0
      %v2294 = vadd.f32 %v2047, %v2293
      %v2295 = vpop.f32.mrb[0].mxu0
      %v2296 = vadd.f32 %v2051, %v2295
      %v2297 = vpop.f32.mrb[0].mxu0
      %v2298 = vadd.f32 %v2047, %v2297
      %v2299 = vpop.f32.mrb[0].mxu0
      %v2300 = vadd.f32 %v2051, %v2299
      %2301 = vdwg.mxu0
      %v2302 = vmul.f32 %v2251, %v2251
      %v2303 = vmul.f32 %v2253, %v2253
      %v2304 = vmul.f32 %v2294, %v2294
      %v2305 = vmul.f32 %v2296, %v2296
      %v2306 = vmul.f32 %v2255, %v2255
      %v2307 = vmul.f32 %v2257, %v2257
      %v2308 = vmul.f32 %v2298, %v2298
      %v2309 = vmul.f32 %v2300, %v2300
      %v2310 = vmul.f32 %v2251, %v2302
      %v2311 = vmul.f32 %v2253, %v2303
      %v2312 = vmul.f32 %v2294, %v2304
      %v2313 = vmul.f32 %v2296, %v2305
      %v2314 = vmul.f32 %v2255, %v2306
      %v2315 = vmul.f32 %v2257, %v2307
      %v2316 = vmul.f32 %v2298, %v2308
      %v2317 = vmul.f32 %v2300, %v2309
      %v2318 = vmul.f32 %v2310, 0.044715
      %v2319 = vmul.f32 %v2311, 0.044715
      %v2320 = vmul.f32 %v2312, 0.044715
      %v2321 = vmul.f32 %v2313, 0.044715
      %v2322 = vmul.f32 %v2314, 0.044715
      %v2323 = vmul.f32 %v2315, 0.044715
      %v2324 = vmul.f32 %v2316, 0.044715
      %v2325 = vmul.f32 %v2317, 0.044715
      %v2326 = vadd.f32 %v2251, %v2318
      %v2327 = vadd.f32 %v2253, %v2319
      %v2328 = vadd.f32 %v2294, %v2320
      %v2329 = vadd.f32 %v2296, %v2321
      %v2330 = vadd.f32 %v2255, %v2322
      %v2331 = vadd.f32 %v2257, %v2323
      %v2332 = vadd.f32 %v2298, %v2324
      %v2333 = vadd.f32 %v2300, %v2325
      %v2334 = vmul.f32 %v2326, 0.7978846
      %v2335 = vmul.f32 %v2327, 0.7978846
      %v2336 = vmul.f32 %v2328, 0.7978846
      %v2337 = vmul.f32 %v2329, 0.7978846
      %v2338 = vmul.f32 %v2330, 0.7978846
      %v2339 = vmul.f32 %v2331, 0.7978846
      %v2340 = vmul.f32 %v2332, 0.7978846
      %v2341 = vmul.f32 %v2333, 0.7978846
      %v2342 = vtanh.pop %v2334
      %v2343 = vtanh.pop %v2335
      %v2344 = vtanh.pop %v2336
      %v2345 = vtanh.pop %v2337
      %v2346 = vtanh.pop %v2338
      %v2347 = vtanh.pop %v2339
      %v2348 = vtanh.pop %v2340
      %v2349 = vtanh.pop %v2341
      %v2350 = vadd.f32 %v2342, 1.0
      %v2351 = vadd.f32 %v2343, 1.0
      %v2352 = vadd.f32 %v2344, 1.0
      %v2353 = vadd.f32 %v2345, 1.0
      %v2354 = vadd.f32 %v2346, 1.0
      %v2355 = vadd.f32 %v2347, 1.0
      %v2356 = vadd.f32 %v2348, 1.0
      %v2357 = vadd.f32 %v2349, 1.0
      %v2358 = vmul.f32 %v2350, 0.5
      %v2359 = vmul.f32 %v2351, 0.5
      %v2360 = vmul.f32 %v2352, 0.5
      %v2361 = vmul.f32 %v2353, 0.5
      %v2362 = vmul.f32 %v2354, 0.5
      %v2363 = vmul.f32 %v2355, 0.5
      %v2364 = vmul.f32 %v2356, 0.5
      %v2365 = vmul.f32 %v2357, 0.5
      %v2366 = vmul.f32 %v2251, %v2358
      %v2367 = vmul.f32 %v2253, %v2359
      %v2368 = vmul.f32 %v2294, %v2360
      %v2369 = vmul.f32 %v2296, %v2361
      %v2370 = vmul.f32 %v2255, %v2362
      %v2371 = vmul.f32 %v2257, %v2363
      %v2372 = vmul.f32 %v2298, %v2364
      %v2373 = vmul.f32 %v2300, %v2365
      %v2374 = vpack.c.bf16 %v2370, %v2366
      %v2375 = vpack.c.bf16 %v2371, %v2367
      %v2376 = vpack.c.bf16 %v2372, %v2368
      %v2377 = vpack.c.bf16 %v2373, %v2369
      %v2378 = vld [vmem:[%s600] sm:$0xf]
      %v2379 = vld [vmem:[%s600 + $0x4] sm:$0xf]
      %v2380 = vld [vmem:[%s600 + $0x8] sm:$0xf]
      %v2381 = vld [vmem:[%s600 + $0xc] sm:$0xf]
      %v2382 = vld [vmem:[%s600 + $0x10] sm:$0xf]
      %v2383 = vld [vmem:[%s600 + $0x14] sm:$0xf]
      %v2384 = vld [vmem:[%s600 + $0x18] sm:$0xf]
      %v2385 = vld [vmem:[%s600 + $0x1c] sm:$0xf]
      %v2386 = vld [vmem:[%s600 + $0x20] sm:$0xf]
      %v2387 = vld [vmem:[%s600 + $0x24] sm:$0xf]
      %v2388 = vld [vmem:[%s600 + $0x28] sm:$0xf]
      %v2389 = vld [vmem:[%s600 + $0x2c] sm:$0xf]
      %v2390 = vld [vmem:[%s600 + $0x30] sm:$0xf]
      %v2391 = vld [vmem:[%s600 + $0x34] sm:$0xf]
      %v2392 = vld [vmem:[%s600 + $0x38] sm:$0xf]
      %v2393 = vld [vmem:[%s600 + $0x3c] sm:$0xf]
      %v2394 = vld [vmem:[%s600 + $0x40] sm:$0xf]
      %v2395 = vld [vmem:[%s600 + $0x44] sm:$0xf]
      %v2396 = vld [vmem:[%s600 + $0x48] sm:$0xf]
      %v2397 = vld [vmem:[%s600 + $0x4c] sm:$0xf]
      %v2398 = vld [vmem:[%s600 + $0x50] sm:$0xf]
      %v2399 = vld [vmem:[%s600 + $0x54] sm:$0xf]
      %v2400 = vld [vmem:[%s600 + $0x58] sm:$0xf]
      %v2401 = vld [vmem:[%s600 + $0x5c] sm:$0xf]
      %v2402 = vld [vmem:[%s600 + $0x60] sm:$0xf]
      %v2403 = vld [vmem:[%s600 + $0x64] sm:$0xf]
      %v2404 = vld [vmem:[%s600 + $0x68] sm:$0xf]
      %v2405 = vld [vmem:[%s600 + $0x6c] sm:$0xf]
      %v2406 = vld [vmem:[%s600 + $0x70] sm:$0xf]
      %v2407 = vld [vmem:[%s600 + $0x74] sm:$0xf]
      %v2408 = vld [vmem:[%s600 + $0x78] sm:$0xf]
      %v2409 = vld [vmem:[%s600 + $0x7c] sm:$0xf]
      %v2410 = vld [vmem:[%s600 + $0x80] sm:$0xf]
      %v2411 = vld [vmem:[%s600 + $0x84] sm:$0xf]
      %v2412 = vld [vmem:[%s600 + $0x88] sm:$0xf]
      %v2413 = vld [vmem:[%s600 + $0x8c] sm:$0xf]
      %v2414 = vld [vmem:[%s600 + $0x90] sm:$0xf]
      %v2415 = vld [vmem:[%s600 + $0x94] sm:$0xf]
      %v2416 = vld [vmem:[%s600 + $0x98] sm:$0xf]
      %v2417 = vld [vmem:[%s600 + $0x9c] sm:$0xf]
      %v2418 = vld [vmem:[%s600 + $0xa0] sm:$0xf]
      %v2419 = vld [vmem:[%s600 + $0xa4] sm:$0xf]
      %v2420 = vld [vmem:[%s600 + $0xa8] sm:$0xf]
      %v2421 = vld [vmem:[%s600 + $0xac] sm:$0xf]
      %v2422 = vld [vmem:[%s600 + $0xb0] sm:$0xf]
      %v2423 = vld [vmem:[%s600 + $0xb4] sm:$0xf]
      %v2424 = vld [vmem:[%s600 + $0xb8] sm:$0xf]
      %v2425 = vld [vmem:[%s600 + $0xbc] sm:$0xf]
      %v2426 = vld [vmem:[%s600 + $0xc0] sm:$0xf]
      %v2427 = vld [vmem:[%s600 + $0xc4] sm:$0xf]
      %v2428 = vld [vmem:[%s600 + $0xc8] sm:$0xf]
      %v2429 = vld [vmem:[%s600 + $0xcc] sm:$0xf]
      %v2430 = vld [vmem:[%s600 + $0xd0] sm:$0xf]
      %v2431 = vld [vmem:[%s600 + $0xd4] sm:$0xf]
      %v2432 = vld [vmem:[%s600 + $0xd8] sm:$0xf]
      %v2433 = vld [vmem:[%s600 + $0xdc] sm:$0xf]
      %v2434 = vld [vmem:[%s600 + $0xe0] sm:$0xf]
      %v2435 = vld [vmem:[%s600 + $0xe4] sm:$0xf]
      %v2436 = vld [vmem:[%s600 + $0xe8] sm:$0xf]
      %v2437 = vld [vmem:[%s600 + $0xec] sm:$0xf]
      %v2438 = vld [vmem:[%s600 + $0xf0] sm:$0xf]
      %v2439 = vld [vmem:[%s600 + $0xf4] sm:$0xf]
      %v2440 = vld [vmem:[%s600 + $0xf8] sm:$0xf]
      %v2441 = vld [vmem:[%s600 + $0xfc] sm:$0xf]
      %v2442 = vld [vmem:[%s603] sm:$0x1]
      %v2444 = vlaneseq
      %v2445 = vshrl.u32 %v2444, 7
      %v2446 = vsub.s32 0, %v2445
      %v2447 = vrot.slane %v2442, %v2446
      %v2513 = vunpack.c.l.b16 %v2378
      %v2514 = vunpack.c.l.b16 %v2379
      %v2515 = vunpack.c.l.b16 %v2380
      %v2516 = vunpack.c.l.b16 %v2381
      %v2517 = vunpack.c.l.b16 %v2382
      %v2518 = vunpack.c.l.b16 %v2383
      %v2519 = vunpack.c.l.b16 %v2384
      %v2520 = vunpack.c.l.b16 %v2385
      %v2521 = vunpack.c.l.b16 %v2386
      %v2522 = vunpack.c.l.b16 %v2387
      %v2523 = vunpack.c.l.b16 %v2388
      %v2524 = vunpack.c.l.b16 %v2389
      %v2525 = vunpack.c.l.b16 %v2390
      %v2526 = vunpack.c.l.b16 %v2391
      %v2527 = vunpack.c.l.b16 %v2392
      %v2528 = vunpack.c.l.b16 %v2393
      %v2529 = vunpack.c.l.b16 %v2394
      %v2530 = vunpack.c.l.b16 %v2395
      %v2531 = vunpack.c.l.b16 %v2396
      %v2532 = vunpack.c.l.b16 %v2397
      %v2533 = vunpack.c.l.b16 %v2398
      %v2534 = vunpack.c.l.b16 %v2399
      %v2535 = vunpack.c.l.b16 %v2400
      %v2536 = vunpack.c.l.b16 %v2401
      %v2537 = vunpack.c.l.b16 %v2402
      %v2538 = vunpack.c.l.b16 %v2403
      %v2539 = vunpack.c.l.b16 %v2404
      %v2540 = vunpack.c.l.b16 %v2405
      %v2541 = vunpack.c.l.b16 %v2406
      %v2542 = vunpack.c.l.b16 %v2407
      %v2543 = vunpack.c.l.b16 %v2408
      %v2544 = vunpack.c.l.b16 %v2409
      %v2545 = vunpack.c.l.b16 %v2410
      %v2546 = vunpack.c.l.b16 %v2411
      %v2547 = vunpack.c.l.b16 %v2412
      %v2548 = vunpack.c.l.b16 %v2413
      %v2549 = vunpack.c.l.b16 %v2414
      %v2550 = vunpack.c.l.b16 %v2415
      %v2551 = vunpack.c.l.b16 %v2416
      %v2552 = vunpack.c.l.b16 %v2417
      %v2553 = vunpack.c.l.b16 %v2418
      %v2554 = vunpack.c.l.b16 %v2419
      %v2555 = vunpack.c.l.b16 %v2420
      %v2556 = vunpack.c.l.b16 %v2421
      %v2557 = vunpack.c.l.b16 %v2422
      %v2558 = vunpack.c.l.b16 %v2423
      %v2559 = vunpack.c.l.b16 %v2424
      %v2560 = vunpack.c.l.b16 %v2425
      %v2561 = vunpack.c.l.b16 %v2426
      %v2562 = vunpack.c.l.b16 %v2427
      %v2563 = vunpack.c.l.b16 %v2428
      %v2564 = vunpack.c.l.b16 %v2429
      %v2565 = vunpack.c.l.b16 %v2430
      %v2566 = vunpack.c.l.b16 %v2431
      %v2567 = vunpack.c.l.b16 %v2432
      %v2568 = vunpack.c.l.b16 %v2433
      %v2569 = vunpack.c.l.b16 %v2434
      %v2570 = vunpack.c.l.b16 %v2435
      %v2571 = vunpack.c.l.b16 %v2436
      %v2572 = vunpack.c.l.b16 %v2437
      %v2573 = vunpack.c.l.b16 %v2438
      %v2574 = vunpack.c.l.b16 %v2439
      %v2575 = vunpack.c.l.b16 %v2440
      %v2576 = vunpack.c.l.b16 %v2441
      %v2577 = vpack.c.b16 %v2514, %v2513
      %v2578 = vpack.c.b16 %v2516, %v2515
      %v2579 = vpack.c.b16 %v2518, %v2517
      %v2580 = vpack.c.b16 %v2520, %v2519
      %v2581 = vpack.c.b16 %v2522, %v2521
      %v2582 = vpack.c.b16 %v2524, %v2523
      %v2583 = vpack.c.b16 %v2526, %v2525
      %v2584 = vpack.c.b16 %v2528, %v2527
      %v2585 = vpack.c.b16 %v2530, %v2529
      %v2586 = vpack.c.b16 %v2532, %v2531
      %v2587 = vpack.c.b16 %v2534, %v2533
      %v2588 = vpack.c.b16 %v2536, %v2535
      %v2589 = vpack.c.b16 %v2538, %v2537
      %v2590 = vpack.c.b16 %v2540, %v2539
      %v2591 = vpack.c.b16 %v2542, %v2541
      %v2592 = vpack.c.b16 %v2544, %v2543
      %v2593 = vpack.c.b16 %v2546, %v2545
      %v2594 = vpack.c.b16 %v2548, %v2547
      %v2595 = vpack.c.b16 %v2550, %v2549
      %v2596 = vpack.c.b16 %v2552, %v2551
      %v2597 = vpack.c.b16 %v2554, %v2553
      %v2598 = vpack.c.b16 %v2556, %v2555
      %v2599 = vpack.c.b16 %v2558, %v2557
      %v2600 = vpack.c.b16 %v2560, %v2559
      %v2601 = vpack.c.b16 %v2562, %v2561
      %v2602 = vpack.c.b16 %v2564, %v2563
      %v2603 = vpack.c.b16 %v2566, %v2565
      %v2604 = vpack.c.b16 %v2568, %v2567
      %v2605 = vpack.c.b16 %v2570, %v2569
      %v2606 = vpack.c.b16 %v2572, %v2571
      %v2607 = vpack.c.b16 %v2574, %v2573
      %v2608 = vpack.c.b16 %v2576, %v2575
      %2641 = vmatprep.subr.bf16.mxu0 0
      %2642 = vmatpush1.bf16.msra.mxu0 %v2577
      %2643 = vmatprep.subr.bf16.mxu0 0
      %2644 = vmatpush1.bf16.msra.mxu0 %v2578
      %2645 = vmatprep.subr.bf16.mxu0 0
      %2646 = vmatpush1.bf16.msra.mxu0 %v2579
      %2647 = vmatprep.subr.bf16.mxu0 0
      %2648 = vmatpush1.bf16.msra.mxu0 %v2580
      %2649 = vmatprep.subr.bf16.mxu0 0
      %2650 = vmatpush1.bf16.msra.mxu0 %v2581
      %2651 = vmatprep.subr.bf16.mxu0 0
      %2652 = vmatpush1.bf16.msra.mxu0 %v2582
      %2653 = vmatprep.subr.bf16.mxu0 0
      %2654 = vmatpush1.bf16.msra.mxu0 %v2583
      %2655 = vmatprep.subr.bf16.mxu0 0
      %2656 = vmatpush1.bf16.msra.mxu0 %v2584
      %2657 = vmatprep.subr.bf16.mxu0 0
      %2658 = vmatpush1.bf16.msra.mxu0 %v2585
      %2659 = vmatprep.subr.bf16.mxu0 0
      %2660 = vmatpush1.bf16.msra.mxu0 %v2586
      %2661 = vmatprep.subr.bf16.mxu0 0
      %2662 = vmatpush1.bf16.msra.mxu0 %v2587
      %2663 = vmatprep.subr.bf16.mxu0 0
      %2664 = vmatpush1.bf16.msra.mxu0 %v2588
      %2665 = vmatprep.subr.bf16.mxu0 0
      %2666 = vmatpush1.bf16.msra.mxu0 %v2589
      %2667 = vmatprep.subr.bf16.mxu0 0
      %2668 = vmatpush1.bf16.msra.mxu0 %v2590
      %2669 = vmatprep.subr.bf16.mxu0 0
      %2670 = vmatpush1.bf16.msra.mxu0 %v2591
      %2671 = vmatprep.subr.bf16.mxu0 0
      %2672 = vmatpush1.bf16.msra.mxu0 %v2592
      %2673 = vmatprep.mubr.bf16.mxu0 %v2375
      %2674 = vmatmul.mubr.bf16.gmra.mrb[0].mxu0 %v2374
      %v2675 = vpop.f32.mrb[0].mxu0
      %v2676 = vadd.f32 %v2447, %v2675
      %v2677 = vpop.f32.mrb[0].mxu0
      %v2678 = vpop.f32.mrb[0].mxu0
      %v2679 = vadd.f32 %v2447, %v2678
      %v2680 = vpop.f32.mrb[0].mxu0
      %2681 = vdwg.mxu0
      %2682 = vmatprep.subr.bf16.mxu0 0
      %2683 = vmatpush1.bf16.msra.mxu0 %v2593
      %2684 = vmatprep.subr.bf16.mxu0 0
      %2685 = vmatpush1.bf16.msra.mxu0 %v2594
      %2686 = vmatprep.subr.bf16.mxu0 0
      %2687 = vmatpush1.bf16.msra.mxu0 %v2595
      %2688 = vmatprep.subr.bf16.mxu0 0
      %2689 = vmatpush1.bf16.msra.mxu0 %v2596
      %2690 = vmatprep.subr.bf16.mxu0 0
      %2691 = vmatpush1.bf16.msra.mxu0 %v2597
      %2692 = vmatprep.subr.bf16.mxu0 0
      %2693 = vmatpush1.bf16.msra.mxu0 %v2598
      %2694 = vmatprep.subr.bf16.mxu0 0
      %2695 = vmatpush1.bf16.msra.mxu0 %v2599
      %2696 = vmatprep.subr.bf16.mxu0 0
      %2697 = vmatpush1.bf16.msra.mxu0 %v2600
      %2698 = vmatprep.subr.bf16.mxu0 0
      %2699 = vmatpush1.bf16.msra.mxu0 %v2601
      %2700 = vmatprep.subr.bf16.mxu0 0
      %2701 = vmatpush1.bf16.msra.mxu0 %v2602
      %2702 = vmatprep.subr.bf16.mxu0 0
      %2703 = vmatpush1.bf16.msra.mxu0 %v2603
      %2704 = vmatprep.subr.bf16.mxu0 0
      %2705 = vmatpush1.bf16.msra.mxu0 %v2604
      %2706 = vmatprep.subr.bf16.mxu0 0
      %2707 = vmatpush1.bf16.msra.mxu0 %v2605
      %2708 = vmatprep.subr.bf16.mxu0 0
      %2709 = vmatpush1.bf16.msra.mxu0 %v2606
      %2710 = vmatprep.subr.bf16.mxu0 0
      %2711 = vmatpush1.bf16.msra.mxu0 %v2607
      %2712 = vmatprep.subr.bf16.mxu0 0
      %2713 = vmatpush1.bf16.msra.mxu0 %v2608
      %2714 = vmatprep.mubr.bf16.mxu0 %v2377
      %2715 = vmatmul.mubr.bf16.gmra.mrb[0].mxu0 %v2376
      %v2716 = vpop.f32.mrb[0].mxu0
      %v2717 = vadd.f32 %v2676, %v2716
      %v2718 = vpop.f32.mrb[0].mxu0
      %v2719 = vpop.f32.mrb[0].mxu0
      %v2720 = vadd.f32 %v2679, %v2719
      %v2721 = vpop.f32.mrb[0].mxu0
      %2722 = vdwg.mxu0
      %v2723 = vadd.f32 %v1959, %v2717
      %v2724 = vadd.f32 %v1960, %v2720
      %2725 = vst [vmem:[%s13] sm:$0xff] %v2723
      %2726 = vst [vmem:[%s13 + $0x8] sm:$0xff] %v2724
      // Predicated region
      $region77: #{vit_extractor_forward.3} parent=71 // pred_check
        %p2727 = pneg %p370
      $region78: #{vit_extractor_forward.3} parent=71 // pred_check_branch
        %2729 = sbr.rel (%p2727) target = $region80
      $region79: #{vit_extractor_forward.3} parent=71 // pred_region
        _
      $region80: #{vit_extractor_forward.3} parent=71 // pred_fallthru
        _
      // Predicated region
      $region81: #{vit_extractor_forward.3} parent=71 // pred_check
        %p2730 = pneg %p370
      $region82: #{vit_extractor_forward.3} parent=71 // pred_check_branch
        %2732 = sbr.rel (%p2730) target = $region84
      $region83: #{vit_extractor_forward.3} parent=71 // pred_region
        _
      $region84: #{vit_extractor_forward.3} parent=71 // pred_fallthru
        _
    $region72: #{vit_extractor_forward.3} parent=5 // pred_fallthru
      _
    %p2733 = scmp.le.s32.totalorder 2, %s19
    // Predicated region
    $region85: #{vit_extractor_forward.3} parent=5 // pred_check
      %p2734 = pneg %p2733
    $region86: #{vit_extractor_forward.3} parent=5 // pred_check_branch
      %2736 = sbr.rel (%p2734) target = $region88
    $region87: #{vit_extractor_forward.3} parent=5 // pred_region
      %s2737 = ssub.s32 %s19, 2
    $region88: #{vit_extractor_forward.3} parent=5 // pred_fallthru
      _
  $region6: #{vit_extractor_forward.3} parent=0 // loop_footer
    %s23 = sadd.s32 1, %s19
  $region7: #{vit_extractor_forward.3} parent=0 // loop_footer_branch
    %18 = sbr.rel target = $region3
  $region8: #{vit_extractor_forward.3} parent=0 // loop_exit
    _

</llo_original>
